<compile_context>
chip_gen: v7x
topology: tpu7x:2x2x1
jax: 0.10.0
libtpu: 0.0.40
codegen_flags: <defaults>
</compile_context>

<pallas_src>
import math
from functools import partial

import jax
import jax.numpy as jnp
from jax.experimental import pallas as pl
from jax.experimental.pallas import tpu as pltpu


def _round_up(a, m):
    return ((a + m - 1) // m) * m


# ----------------------------------------------------------------------------
# Fused kernel: one (modality, batch-tile) grid point.
#   x_ref     : (1, TB, T2, Cmax)   channels-last input tile (zero padded)
#   wconv_ref : (1, K*Cmax, H)      im2col conv weight
#   bconv_ref : (1, 1, H)           conv bias
#   wih_ref   : (1, H, 4H)          fused LSTM input weight, gate order (i,f,o,g)
#   whh_ref   : (1, H, 4H)          fused LSTM hidden weight, same order
#   b_ref     : (1, 1, 4H)          b_ih + b_hh, same order
#   out_ref   : (1, TB, H)          final hidden state h_n for this tile
# ----------------------------------------------------------------------------
def _fused_kernel(x_ref, wconv_ref, bconv_ref, wih_ref, whh_ref, b_ref,
                  out_ref, *, kernel_size, h_dim, conv_len):
    K, L, H = kernel_size, conv_len, h_dim
    x = x_ref[0]                                       # (TB, T2, Cmax)
    TB, _, C = x.shape

    # ---- conv1d (valid, stride 1) as a single im2col matmul -----------------
    # slab columns ordered (k, c) to match the reshaped weight.
    slab = jnp.concatenate([x[:, k:k + L, :] for k in range(K)], axis=-1)
    slab = slab.reshape(TB * L, K * C)                 # (TB*L, K*C)
    conv = jnp.dot(slab, wconv_ref[0],
                   preferred_element_type=jnp.float32)  # (TB*L, H)
    conv = jnp.maximum(conv + bconv_ref[0], 0.0)        # bias + ReLU

    # ---- precompute all input-side gate contributions (bias folded in) ------
    gx = jnp.dot(conv, wih_ref[0],
                 preferred_element_type=jnp.float32) + b_ref[0]   # (TB*L, 4H)
    gx = gx.reshape(TB, L, 4 * H)

    # ---- LSTM recurrence: 1 fused dot + elementwise per step ----------------
    whh = whh_ref[0]                                   # (H, 4H)
    h = jnp.zeros((TB, H), jnp.float32)
    c = jnp.zeros((TB, H), jnp.float32)
    for t in range(L):                                 # L static & small -> unrolled
        g = gx[:, t, :] + jnp.dot(h, whh, preferred_element_type=jnp.float32)
        ifo = jax.nn.sigmoid(g[:, :3 * H])             # (TB, 3H): i | f | o
        gg = jnp.tanh(g[:, 3 * H:])                    # (TB, H)
        c = ifo[:, H:2 * H] * c + ifo[:, :H] * gg
        h = ifo[:, 2 * H:3 * H] * jnp.tanh(c)

    out_ref[0] = h


# ----------------------------------------------------------------------------
# Parameter init (PyTorch layout) and packing into the fused kernel layout.
# ----------------------------------------------------------------------------
def init_modality_params(key, d, h_dim=12, kernel_size=10):
    ks = jax.random.split(key, 6)
    bc = 1.0 / math.sqrt(d * kernel_size)
    wconv = jax.random.uniform(ks[0], (h_dim, d, kernel_size),
                               jnp.float32, -bc, bc)        # torch (H, C, K)
    bconv = jax.random.uniform(ks[1], (h_dim,), jnp.float32, -bc, bc)

    bl = 1.0 / math.sqrt(h_dim)
    w_ih = jax.random.uniform(ks[2], (4 * h_dim, h_dim), jnp.float32, -bl, bl)
    w_hh = jax.random.uniform(ks[3], (4 * h_dim, h_dim), jnp.float32, -bl, bl)
    b_ih = jax.random.uniform(ks[4], (4 * h_dim,), jnp.float32, -bl, bl)
    b_hh = jax.random.uniform(ks[5], (4 * h_dim,), jnp.float32, -bl, bl)
    return dict(wconv=wconv, bconv=bconv, w_ih=w_ih, w_hh=w_hh,
                b_ih=b_ih, b_hh=b_hh)


def _reorder_gates(w, h):
    """torch gate order (i, f, g, o) -> kernel order (i, f, o, g) along dim 0."""
    return jnp.concatenate([w[:h], w[h:2 * h], w[3 * h:4 * h], w[2 * h:3 * h]],
                           axis=0)


def pack_feature_extractor_params(raw_params, modalities=None):
    """Stack per-modality params into the fused, modality-stacked layout."""
    if modalities is None:
        modalities = tuple(raw_params.keys())
    first = raw_params[modalities[0]]
    H = first['wconv'].shape[0]
    K = first['wconv'].shape[2]
    c_max = max(int(raw_params[m]['wconv'].shape[1]) for m in modalities)

    wconv_l, bconv_l, wih_l, whh_l, b_l = [], [], [], [], []
    for m in modalities:
        p = raw_params[m]
        wc = p['wconv']                                       # (H, C, K)
        c = wc.shape[1]
        wc = jnp.pad(wc, ((0, 0), (0, c_max - c), (0, 0)))    # zero-pad channels
        wconv_l.append(jnp.transpose(wc, (2, 1, 0)).reshape(K * c_max, H))
        bconv_l.append(p['bconv'].reshape(1, H))
        wih_l.append(_reorder_gates(p['w_ih'], H).T)          # (H, 4H)
        whh_l.append(_reorder_gates(p['w_hh'], H).T)          # (H, 4H)
        b_l.append(_reorder_gates((p['b_ih'] + p['b_hh'])[:, None], H)
                   .reshape(1, 4 * H))

    return {
        'modalities': tuple(modalities),
        'c_max': c_max, 'h_dim': int(H), 'kernel_size': int(K),
        'wconv': jnp.stack(wconv_l),    # (M, K*Cmax, H)
        'bconv': jnp.stack(bconv_l),    # (M, 1, H)
        'wih': jnp.stack(wih_l),        # (M, H, 4H)
        'whh': jnp.stack(whh_l),        # (M, H, 4H)
        'b': jnp.stack(b_l),            # (M, 1, 4H)
    }


# ----------------------------------------------------------------------------
# Forward pass: one pallas_call covering all modalities and batch tiles.
# ----------------------------------------------------------------------------
def feature_extractor_forward(batch, packed):
    mods = packed['modalities']
    c_max, H, K = packed['c_max'], packed['h_dim'], packed['kernel_size']
    Mn = len(mods)

    N, T1, T2, _ = batch['calX'][mods[0]].shape
    B = N * T1
    L = T2 - K + 1
    assert L >= 1, "T2 must be >= kernel_size"

    TB = min(128, _round_up(B, 8))          # batch tile, multiple of 8 sublanes
    Bpad = _round_up(B, TB)
    nb = Bpad // TB

    xs = []
    for m in mods:
        x = batch['calX'][m].astype(jnp.float32)
        n, t1, t2, c = x.shape
        assert (n, t1, t2) == (N, T1, T2)
        xb = x.reshape(n * t1, t2, c)
        xb = jnp.pad(xb, ((0, Bpad - B), (0, 0), (0, c_max - c)))
        xs.append(xb)
    x_stacked = jnp.stack(xs, axis=0)       # (M, Bpad, T2, Cmax)

    kern = partial(_fused_kernel, kernel_size=K, h_dim=H, conv_len=L)

    flops = Mn * Bpad * L * 2 * H * (K * c_max + 8 * H)
    transcendentals = Mn * Bpad * L * 5 * H
    bytes_accessed = 4 * (x_stacked.size + packed['wconv'].size
                          + packed['bconv'].size + packed['wih'].size
                          + packed['whh'].size + packed['b'].size
                          + Mn * Bpad * H)

    h_all = pl.pallas_call(
        kern,
        out_shape=jax.ShapeDtypeStruct((Mn, Bpad, H), jnp.float32),
        grid_spec=pltpu.PrefetchScalarGridSpec(
            num_scalar_prefetch=0,
            grid=(Mn, nb),
            in_specs=[
                pl.BlockSpec((1, TB, T2, c_max), lambda m, b: (m, b, 0, 0)),
                pl.BlockSpec((1, K * c_max, H), lambda m, b: (m, 0, 0)),
                pl.BlockSpec((1, 1, H), lambda m, b: (m, 0, 0)),
                pl.BlockSpec((1, H, 4 * H), lambda m, b: (m, 0, 0)),
                pl.BlockSpec((1, H, 4 * H), lambda m, b: (m, 0, 0)),
                pl.BlockSpec((1, 1, 4 * H), lambda m, b: (m, 0, 0)),
            ],
            out_specs=pl.BlockSpec((1, TB, H), lambda m, b: (m, b, 0)),
        ),
        compiler_params=pltpu.CompilerParams(
            dimension_semantics=("parallel", "parallel"),
            vmem_limit_bytes=32 * 1024 * 1024),
        cost_estimate=pl.CostEstimate(flops=flops,
                                      transcendentals=transcendentals,
                                      bytes_accessed=bytes_accessed),
    )(x_stacked, packed['wconv'], packed['bconv'],
      packed['wih'], packed['whh'], packed['b'])

    features = {}
    for mi, m in enumerate(mods):
        h_n = h_all[mi, :B].reshape(N, T1, H)
        tl = batch['timelines'][m]
        # torch .diff(0) (n=0) is the identity
        features[m] = jnp.concatenate([h_n, tl, tl], axis=-1)
    return features


# ----------------------------------------------------------------------------
# Pure-JAX reference in the original (torch-layout) parameterization.
# ----------------------------------------------------------------------------
def modality_ref(x, raw):
    N, T1, T2, C = x.shape
    B = N * T1
    H, _, K = raw['wconv'].shape
    L = T2 - K + 1
    xb = x.reshape(B, T2, C).astype(jnp.float32)

    conv = jnp.zeros((B, L, H), jnp.float32)
    for k in range(K):
        conv = conv + jnp.einsum('blc,hc->blh', xb[:, k:k + L, :],
                                 raw['wconv'][:, :, k])
    conv = jnp.maximum(conv + raw['bconv'][None, None, :], 0.0)

    w_ih, w_hh = raw['w_ih'], raw['w_hh']
    b = raw['b_ih'] + raw['b_hh']
    h = jnp.zeros((B, H), jnp.float32)
    c = jnp.zeros((B, H), jnp.float32)
    for t in range(L):
        g = conv[:, t, :] @ w_ih.T + h @ w_hh.T + b
        i = jax.nn.sigmoid(g[:, :H])
        f = jax.nn.sigmoid(g[:, H:2 * H])
        gg = jnp.tanh(g[:, 2 * H:3 * H])
        o = jax.nn.sigmoid(g[:, 3 * H:])
        c = f * c + i * gg
        h = o * jnp.tanh(c)
    return h.reshape(N, T1, H)


if __name__ == "__main__":
    key = jax.random.PRNGKey(0)

    dimensions = {"audio": 4, "video": 6}
    h_dim, kernel_size = 12, 10
    N, T1, T2 = 2, 3, 16            # conv output length L = 7
    Dt = 1                          # timeline feature width

    k_params, k_data = jax.random.split(key)
    mod_keys = jax.random.split(k_params, len(dimensions))
    raw_params = {m: init_modality_params(mk, d, h_dim, kernel_size)
                  for (m, d), mk in zip(dimensions.items(), mod_keys)}
    packed = pack_feature_extractor_params(raw_params)

    data_keys = jax.random.split(k_data, 2 * len(dimensions))
    batch = {'calX': {}, 'timelines': {}}
    for i, (m, d) in enumerate(dimensions.items()):
        batch['calX'][m] = jax.random.normal(data_keys[2 * i], (N, T1, T2, d),
                                             jnp.float32)
        batch['timelines'][m] = jax.random.normal(data_keys[2 * i + 1],
                                                  (N, T1, Dt), jnp.float32)

    feats = feature_extractor_forward(batch, packed)
    feats = jax.tree_util.tree_map(jax.block_until_ready, feats)

    # correctness vs. pure-JAX reference in the original parameterization
    for m in dimensions:
        ref_h = modality_ref(batch['calX'][m], raw_params[m])
        tl = batch['timelines'][m]
        ref_feat = jnp.concatenate([ref_h, tl, tl], axis=-1)
        assert feats[m].shape == (N, T1, h_dim + 2 * Dt), feats[m].shape
        assert jnp.allclose(feats[m], ref_feat, rtol=1e-3, atol=1e-3), \
            f"mismatch for modality {m}"

    print("KERNEL_OK")
</pallas_src>

<mosaic_0001>
module attributes {stable_mosaic.version = 11 : i64} {
  func.func @_fused_kernel(%arg0: i32, %arg1: i32, %arg2: memref<1x8x16x6xf32, #tpu.memory_space<vmem>>, %arg3: memref<1x60x12xf32, #tpu.memory_space<vmem>>, %arg4: memref<1x1x12xf32, #tpu.memory_space<vmem>>, %arg5: memref<1x12x48xf32, #tpu.memory_space<vmem>>, %arg6: memref<1x12x48xf32, #tpu.memory_space<vmem>>, %arg7: memref<1x1x48xf32, #tpu.memory_space<vmem>>, %arg8: memref<1x8x12xf32, #tpu.memory_space<vmem>>) attributes {dimension_semantics = [#tpu.dimension_semantics<parallel>, #tpu.dimension_semantics<parallel>], iteration_bounds = array<i64: 2, 1>, scalar_prefetch = 0 : i64, scratch_operands = 0 : i64, tpu.core_type = #tpu.core_type<tc>, window_params = [{transform_indices = @transform_0, window_bounds = array<i64: 1, 8, 16, 6>}, {transform_indices = @transform_1, window_bounds = array<i64: 1, 60, 12>}, {transform_indices = @transform_2, window_bounds = array<i64: 1, 1, 12>}, {transform_indices = @transform_3, window_bounds = array<i64: 1, 12, 48>}, {transform_indices = @transform_4, window_bounds = array<i64: 1, 12, 48>}, {transform_indices = @transform_5, window_bounds = array<i64: 1, 1, 48>}, {transform_indices = @transform_6, window_bounds = array<i64: 1, 8, 12>}]} {
    %c0 = arith.constant 0 : index
    %c0_0 = arith.constant 0 : index
    %c0_1 = arith.constant 0 : index
    %c0_2 = arith.constant 0 : index
    %0 = vector.load %arg2[%c0, %c0_0, %c0_1, %c0_2] : memref<1x8x16x6xf32, #tpu.memory_space<vmem>>, vector<1x8x16x6xf32>
    %1 = vector.shape_cast %0 : vector<1x8x16x6xf32> to vector<8x16x6xf32>
    %2 = vector.extract_strided_slice %1 {offsets = [0, 0, 0], sizes = [8, 7, 6], strides = [1, 1, 1]} : vector<8x16x6xf32> to vector<8x7x6xf32>
    %3 = vector.extract_strided_slice %1 {offsets = [0, 1, 0], sizes = [8, 7, 6], strides = [1, 1, 1]} : vector<8x16x6xf32> to vector<8x7x6xf32>
    %4 = vector.extract_strided_slice %1 {offsets = [0, 2, 0], sizes = [8, 7, 6], strides = [1, 1, 1]} : vector<8x16x6xf32> to vector<8x7x6xf32>
    %5 = vector.extract_strided_slice %1 {offsets = [0, 3, 0], sizes = [8, 7, 6], strides = [1, 1, 1]} : vector<8x16x6xf32> to vector<8x7x6xf32>
    %6 = vector.extract_strided_slice %1 {offsets = [0, 4, 0], sizes = [8, 7, 6], strides = [1, 1, 1]} : vector<8x16x6xf32> to vector<8x7x6xf32>
    %7 = vector.extract_strided_slice %1 {offsets = [0, 5, 0], sizes = [8, 7, 6], strides = [1, 1, 1]} : vector<8x16x6xf32> to vector<8x7x6xf32>
    %8 = vector.extract_strided_slice %1 {offsets = [0, 6, 0], sizes = [8, 7, 6], strides = [1, 1, 1]} : vector<8x16x6xf32> to vector<8x7x6xf32>
    %9 = vector.extract_strided_slice %1 {offsets = [0, 7, 0], sizes = [8, 7, 6], strides = [1, 1, 1]} : vector<8x16x6xf32> to vector<8x7x6xf32>
    %10 = vector.extract_strided_slice %1 {offsets = [0, 8, 0], sizes = [8, 7, 6], strides = [1, 1, 1]} : vector<8x16x6xf32> to vector<8x7x6xf32>
    %11 = vector.extract_strided_slice %1 {offsets = [0, 9, 0], sizes = [8, 7, 6], strides = [1, 1, 1]} : vector<8x16x6xf32> to vector<8x7x6xf32>
    %12 = tpu.concatenate %2, %3, %4, %5, %6, %7, %8, %9, %10, %11 in 2 : vector<8x7x6xf32>, vector<8x7x6xf32>, vector<8x7x6xf32>, vector<8x7x6xf32>, vector<8x7x6xf32>, vector<8x7x6xf32>, vector<8x7x6xf32>, vector<8x7x6xf32>, vector<8x7x6xf32>, vector<8x7x6xf32> -> vector<8x7x60xf32>
    %13 = vector.shape_cast %12 : vector<8x7x60xf32> to vector<56x60xf32>
    %c0_3 = arith.constant 0 : index
    %c0_4 = arith.constant 0 : index
    %c0_5 = arith.constant 0 : index
    %14 = vector.load %arg3[%c0_3, %c0_4, %c0_5] : memref<1x60x12xf32, #tpu.memory_space<vmem>>, vector<1x60x12xf32>
    %15 = vector.shape_cast %14 : vector<1x60x12xf32> to vector<60x12xf32>
    %cst = arith.constant dense<0.000000e+00> : vector<56x12xf32>
    %16 = tpu.matmul %13, %15, %cst {dimension_numbers = #tpu.dot_dimension_numbers<[1], [0], [0], [1], [0, 0, 1, 1], [], []>} : vector<56x60xf32>, vector<60x12xf32>, vector<56x12xf32> -> vector<56x12xf32>
    %c0_6 = arith.constant 0 : index
    %c0_7 = arith.constant 0 : index
    %c0_8 = arith.constant 0 : index
    %17 = vector.load %arg4[%c0_6, %c0_7, %c0_8] : memref<1x1x12xf32, #tpu.memory_space<vmem>>, vector<1x1x12xf32>
    %18 = vector.shape_cast %17 : vector<1x1x12xf32> to vector<1x12xf32>
    %19 = vector.broadcast %18 : vector<1x12xf32> to vector<56x12xf32>
    %20 = arith.addf %16, %19 : vector<56x12xf32>
    %cst_9 = arith.constant 0.000000e+00 : f32
    %21 = vector.broadcast %cst_9 : f32 to vector<56x12xf32>
    %22 = arith.maximumf %20, %21 : vector<56x12xf32>
    %c0_10 = arith.constant 0 : index
    %c0_11 = arith.constant 0 : index
    %c0_12 = arith.constant 0 : index
    %23 = vector.load %arg5[%c0_10, %c0_11, %c0_12] : memref<1x12x48xf32, #tpu.memory_space<vmem>>, vector<1x12x48xf32>
    %24 = vector.shape_cast %23 : vector<1x12x48xf32> to vector<12x48xf32>
    %cst_13 = arith.constant dense<0.000000e+00> : vector<56x48xf32>
    %25 = tpu.matmul %22, %24, %cst_13 {dimension_numbers = #tpu.dot_dimension_numbers<[1], [0], [0], [1], [0, 0, 1, 1], [], []>} : vector<56x12xf32>, vector<12x48xf32>, vector<56x48xf32> -> vector<56x48xf32>
    %c0_14 = arith.constant 0 : index
    %c0_15 = arith.constant 0 : index
    %c0_16 = arith.constant 0 : index
    %26 = vector.load %arg7[%c0_14, %c0_15, %c0_16] : memref<1x1x48xf32, #tpu.memory_space<vmem>>, vector<1x1x48xf32>
    %27 = vector.shape_cast %26 : vector<1x1x48xf32> to vector<1x48xf32>
    %28 = vector.broadcast %27 : vector<1x48xf32> to vector<56x48xf32>
    %29 = arith.addf %25, %28 : vector<56x48xf32>
    %30 = vector.shape_cast %29 : vector<56x48xf32> to vector<8x7x48xf32>
    %c0_17 = arith.constant 0 : index
    %c0_18 = arith.constant 0 : index
    %c0_19 = arith.constant 0 : index
    %31 = vector.load %arg6[%c0_17, %c0_18, %c0_19] : memref<1x12x48xf32, #tpu.memory_space<vmem>>, vector<1x12x48xf32>
    %32 = vector.shape_cast %31 : vector<1x12x48xf32> to vector<12x48xf32>
    %cst_20 = arith.constant 0.000000e+00 : f32
    %33 = vector.broadcast %cst_20 : f32 to vector<8x12xf32>
    %cst_21 = arith.constant 0.000000e+00 : f32
    %34 = vector.broadcast %cst_21 : f32 to vector<8x12xf32>
    %35 = vector.extract_strided_slice %30 {offsets = [0, 0, 0], sizes = [8, 1, 48], strides = [1, 1, 1]} : vector<8x7x48xf32> to vector<8x1x48xf32>
    %36 = vector.shape_cast %35 : vector<8x1x48xf32> to vector<8x48xf32>
    %cst_22 = arith.constant dense<0.000000e+00> : vector<8x48xf32>
    %37 = tpu.matmul %33, %32, %cst_22 {dimension_numbers = #tpu.dot_dimension_numbers<[1], [0], [0], [1], [0, 0, 1, 1], [], []>} : vector<8x12xf32>, vector<12x48xf32>, vector<8x48xf32> -> vector<8x48xf32>
    %38 = arith.addf %36, %37 : vector<8x48xf32>
    %39 = vector.extract_strided_slice %38 {offsets = [0, 0], sizes = [8, 36], strides = [1, 1]} : vector<8x48xf32> to vector<8x36xf32>
    %40 = arith.negf %39 : vector<8x36xf32>
    %41 = math.exp %40 : vector<8x36xf32>
    %cst_23 = arith.constant 1.000000e+00 : f32
    %42 = vector.broadcast %cst_23 : f32 to vector<8x36xf32>
    %43 = arith.addf %42, %41 : vector<8x36xf32>
    %44 = arith.divf %42, %43 : vector<8x36xf32>
    %45 = vector.extract_strided_slice %38 {offsets = [0, 36], sizes = [8, 12], strides = [1, 1]} : vector<8x48xf32> to vector<8x12xf32>
    %46 = math.tanh %45 : vector<8x12xf32>
    %47 = vector.extract_strided_slice %44 {offsets = [0, 12], sizes = [8, 12], strides = [1, 1]} : vector<8x36xf32> to vector<8x12xf32>
    %48 = arith.mulf %47, %34 : vector<8x12xf32>
    %49 = vector.extract_strided_slice %44 {offsets = [0, 0], sizes = [8, 12], strides = [1, 1]} : vector<8x36xf32> to vector<8x12xf32>
    %50 = arith.mulf %49, %46 : vector<8x12xf32>
    %51 = arith.addf %48, %50 : vector<8x12xf32>
    %52 = vector.extract_strided_slice %44 {offsets = [0, 24], sizes = [8, 12], strides = [1, 1]} : vector<8x36xf32> to vector<8x12xf32>
    %53 = math.tanh %51 : vector<8x12xf32>
    %54 = arith.mulf %52, %53 : vector<8x12xf32>
    %55 = vector.extract_strided_slice %30 {offsets = [0, 1, 0], sizes = [8, 1, 48], strides = [1, 1, 1]} : vector<8x7x48xf32> to vector<8x1x48xf32>
    %56 = vector.shape_cast %55 : vector<8x1x48xf32> to vector<8x48xf32>
    %cst_24 = arith.constant dense<0.000000e+00> : vector<8x48xf32>
    %57 = tpu.matmul %54, %32, %cst_24 {dimension_numbers = #tpu.dot_dimension_numbers<[1], [0], [0], [1], [0, 0, 1, 1], [], []>} : vector<8x12xf32>, vector<12x48xf32>, vector<8x48xf32> -> vector<8x48xf32>
    %58 = arith.addf %56, %57 : vector<8x48xf32>
    %59 = vector.extract_strided_slice %58 {offsets = [0, 0], sizes = [8, 36], strides = [1, 1]} : vector<8x48xf32> to vector<8x36xf32>
    %60 = arith.negf %59 : vector<8x36xf32>
    %61 = math.exp %60 : vector<8x36xf32>
    %cst_25 = arith.constant 1.000000e+00 : f32
    %62 = vector.broadcast %cst_25 : f32 to vector<8x36xf32>
    %63 = arith.addf %62, %61 : vector<8x36xf32>
    %64 = arith.divf %62, %63 : vector<8x36xf32>
    %65 = vector.extract_strided_slice %58 {offsets = [0, 36], sizes = [8, 12], strides = [1, 1]} : vector<8x48xf32> to vector<8x12xf32>
    %66 = math.tanh %65 : vector<8x12xf32>
    %67 = vector.extract_strided_slice %64 {offsets = [0, 12], sizes = [8, 12], strides = [1, 1]} : vector<8x36xf32> to vector<8x12xf32>
    %68 = arith.mulf %67, %51 : vector<8x12xf32>
    %69 = vector.extract_strided_slice %64 {offsets = [0, 0], sizes = [8, 12], strides = [1, 1]} : vector<8x36xf32> to vector<8x12xf32>
    %70 = arith.mulf %69, %66 : vector<8x12xf32>
    %71 = arith.addf %68, %70 : vector<8x12xf32>
    %72 = vector.extract_strided_slice %64 {offsets = [0, 24], sizes = [8, 12], strides = [1, 1]} : vector<8x36xf32> to vector<8x12xf32>
    %73 = math.tanh %71 : vector<8x12xf32>
    %74 = arith.mulf %72, %73 : vector<8x12xf32>
    %75 = vector.extract_strided_slice %30 {offsets = [0, 2, 0], sizes = [8, 1, 48], strides = [1, 1, 1]} : vector<8x7x48xf32> to vector<8x1x48xf32>
    %76 = vector.shape_cast %75 : vector<8x1x48xf32> to vector<8x48xf32>
    %cst_26 = arith.constant dense<0.000000e+00> : vector<8x48xf32>
    %77 = tpu.matmul %74, %32, %cst_26 {dimension_numbers = #tpu.dot_dimension_numbers<[1], [0], [0], [1], [0, 0, 1, 1], [], []>} : vector<8x12xf32>, vector<12x48xf32>, vector<8x48xf32> -> vector<8x48xf32>
    %78 = arith.addf %76, %77 : vector<8x48xf32>
    %79 = vector.extract_strided_slice %78 {offsets = [0, 0], sizes = [8, 36], strides = [1, 1]} : vector<8x48xf32> to vector<8x36xf32>
    %80 = arith.negf %79 : vector<8x36xf32>
    %81 = math.exp %80 : vector<8x36xf32>
    %cst_27 = arith.constant 1.000000e+00 : f32
    %82 = vector.broadcast %cst_27 : f32 to vector<8x36xf32>
    %83 = arith.addf %82, %81 : vector<8x36xf32>
    %84 = arith.divf %82, %83 : vector<8x36xf32>
    %85 = vector.extract_strided_slice %78 {offsets = [0, 36], sizes = [8, 12], strides = [1, 1]} : vector<8x48xf32> to vector<8x12xf32>
    %86 = math.tanh %85 : vector<8x12xf32>
    %87 = vector.extract_strided_slice %84 {offsets = [0, 12], sizes = [8, 12], strides = [1, 1]} : vector<8x36xf32> to vector<8x12xf32>
    %88 = arith.mulf %87, %71 : vector<8x12xf32>
    %89 = vector.extract_strided_slice %84 {offsets = [0, 0], sizes = [8, 12], strides = [1, 1]} : vector<8x36xf32> to vector<8x12xf32>
    %90 = arith.mulf %89, %86 : vector<8x12xf32>
    %91 = arith.addf %88, %90 : vector<8x12xf32>
    %92 = vector.extract_strided_slice %84 {offsets = [0, 24], sizes = [8, 12], strides = [1, 1]} : vector<8x36xf32> to vector<8x12xf32>
    %93 = math.tanh %91 : vector<8x12xf32>
    %94 = arith.mulf %92, %93 : vector<8x12xf32>
    %95 = vector.extract_strided_slice %30 {offsets = [0, 3, 0], sizes = [8, 1, 48], strides = [1, 1, 1]} : vector<8x7x48xf32> to vector<8x1x48xf32>
    %96 = vector.shape_cast %95 : vector<8x1x48xf32> to vector<8x48xf32>
    %cst_28 = arith.constant dense<0.000000e+00> : vector<8x48xf32>
    %97 = tpu.matmul %94, %32, %cst_28 {dimension_numbers = #tpu.dot_dimension_numbers<[1], [0], [0], [1], [0, 0, 1, 1], [], []>} : vector<8x12xf32>, vector<12x48xf32>, vector<8x48xf32> -> vector<8x48xf32>
    %98 = arith.addf %96, %97 : vector<8x48xf32>
    %99 = vector.extract_strided_slice %98 {offsets = [0, 0], sizes = [8, 36], strides = [1, 1]} : vector<8x48xf32> to vector<8x36xf32>
    %100 = arith.negf %99 : vector<8x36xf32>
    %101 = math.exp %100 : vector<8x36xf32>
    %cst_29 = arith.constant 1.000000e+00 : f32
    %102 = vector.broadcast %cst_29 : f32 to vector<8x36xf32>
    %103 = arith.addf %102, %101 : vector<8x36xf32>
    %104 = arith.divf %102, %103 : vector<8x36xf32>
    %105 = vector.extract_strided_slice %98 {offsets = [0, 36], sizes = [8, 12], strides = [1, 1]} : vector<8x48xf32> to vector<8x12xf32>
    %106 = math.tanh %105 : vector<8x12xf32>
    %107 = vector.extract_strided_slice %104 {offsets = [0, 12], sizes = [8, 12], strides = [1, 1]} : vector<8x36xf32> to vector<8x12xf32>
    %108 = arith.mulf %107, %91 : vector<8x12xf32>
    %109 = vector.extract_strided_slice %104 {offsets = [0, 0], sizes = [8, 12], strides = [1, 1]} : vector<8x36xf32> to vector<8x12xf32>
    %110 = arith.mulf %109, %106 : vector<8x12xf32>
    %111 = arith.addf %108, %110 : vector<8x12xf32>
    %112 = vector.extract_strided_slice %104 {offsets = [0, 24], sizes = [8, 12], strides = [1, 1]} : vector<8x36xf32> to vector<8x12xf32>
    %113 = math.tanh %111 : vector<8x12xf32>
    %114 = arith.mulf %112, %113 : vector<8x12xf32>
    %115 = vector.extract_strided_slice %30 {offsets = [0, 4, 0], sizes = [8, 1, 48], strides = [1, 1, 1]} : vector<8x7x48xf32> to vector<8x1x48xf32>
    %116 = vector.shape_cast %115 : vector<8x1x48xf32> to vector<8x48xf32>
    %cst_30 = arith.constant dense<0.000000e+00> : vector<8x48xf32>
    %117 = tpu.matmul %114, %32, %cst_30 {dimension_numbers = #tpu.dot_dimension_numbers<[1], [0], [0], [1], [0, 0, 1, 1], [], []>} : vector<8x12xf32>, vector<12x48xf32>, vector<8x48xf32> -> vector<8x48xf32>
    %118 = arith.addf %116, %117 : vector<8x48xf32>
    %119 = vector.extract_strided_slice %118 {offsets = [0, 0], sizes = [8, 36], strides = [1, 1]} : vector<8x48xf32> to vector<8x36xf32>
    %120 = arith.negf %119 : vector<8x36xf32>
    %121 = math.exp %120 : vector<8x36xf32>
    %cst_31 = arith.constant 1.000000e+00 : f32
    %122 = vector.broadcast %cst_31 : f32 to vector<8x36xf32>
    %123 = arith.addf %122, %121 : vector<8x36xf32>
    %124 = arith.divf %122, %123 : vector<8x36xf32>
    %125 = vector.extract_strided_slice %118 {offsets = [0, 36], sizes = [8, 12], strides = [1, 1]} : vector<8x48xf32> to vector<8x12xf32>
    %126 = math.tanh %125 : vector<8x12xf32>
    %127 = vector.extract_strided_slice %124 {offsets = [0, 12], sizes = [8, 12], strides = [1, 1]} : vector<8x36xf32> to vector<8x12xf32>
    %128 = arith.mulf %127, %111 : vector<8x12xf32>
    %129 = vector.extract_strided_slice %124 {offsets = [0, 0], sizes = [8, 12], strides = [1, 1]} : vector<8x36xf32> to vector<8x12xf32>
    %130 = arith.mulf %129, %126 : vector<8x12xf32>
    %131 = arith.addf %128, %130 : vector<8x12xf32>
    %132 = vector.extract_strided_slice %124 {offsets = [0, 24], sizes = [8, 12], strides = [1, 1]} : vector<8x36xf32> to vector<8x12xf32>
    %133 = math.tanh %131 : vector<8x12xf32>
    %134 = arith.mulf %132, %133 : vector<8x12xf32>
    %135 = vector.extract_strided_slice %30 {offsets = [0, 5, 0], sizes = [8, 1, 48], strides = [1, 1, 1]} : vector<8x7x48xf32> to vector<8x1x48xf32>
    %136 = vector.shape_cast %135 : vector<8x1x48xf32> to vector<8x48xf32>
    %cst_32 = arith.constant dense<0.000000e+00> : vector<8x48xf32>
    %137 = tpu.matmul %134, %32, %cst_32 {dimension_numbers = #tpu.dot_dimension_numbers<[1], [0], [0], [1], [0, 0, 1, 1], [], []>} : vector<8x12xf32>, vector<12x48xf32>, vector<8x48xf32> -> vector<8x48xf32>
    %138 = arith.addf %136, %137 : vector<8x48xf32>
    %139 = vector.extract_strided_slice %138 {offsets = [0, 0], sizes = [8, 36], strides = [1, 1]} : vector<8x48xf32> to vector<8x36xf32>
    %140 = arith.negf %139 : vector<8x36xf32>
    %141 = math.exp %140 : vector<8x36xf32>
    %cst_33 = arith.constant 1.000000e+00 : f32
    %142 = vector.broadcast %cst_33 : f32 to vector<8x36xf32>
    %143 = arith.addf %142, %141 : vector<8x36xf32>
    %144 = arith.divf %142, %143 : vector<8x36xf32>
    %145 = vector.extract_strided_slice %138 {offsets = [0, 36], sizes = [8, 12], strides = [1, 1]} : vector<8x48xf32> to vector<8x12xf32>
    %146 = math.tanh %145 : vector<8x12xf32>
    %147 = vector.extract_strided_slice %144 {offsets = [0, 12], sizes = [8, 12], strides = [1, 1]} : vector<8x36xf32> to vector<8x12xf32>
    %148 = arith.mulf %147, %131 : vector<8x12xf32>
    %149 = vector.extract_strided_slice %144 {offsets = [0, 0], sizes = [8, 12], strides = [1, 1]} : vector<8x36xf32> to vector<8x12xf32>
    %150 = arith.mulf %149, %146 : vector<8x12xf32>
    %151 = arith.addf %148, %150 : vector<8x12xf32>
    %152 = vector.extract_strided_slice %144 {offsets = [0, 24], sizes = [8, 12], strides = [1, 1]} : vector<8x36xf32> to vector<8x12xf32>
    %153 = math.tanh %151 : vector<8x12xf32>
    %154 = arith.mulf %152, %153 : vector<8x12xf32>
    %155 = vector.extract_strided_slice %30 {offsets = [0, 6, 0], sizes = [8, 1, 48], strides = [1, 1, 1]} : vector<8x7x48xf32> to vector<8x1x48xf32>
    %156 = vector.shape_cast %155 : vector<8x1x48xf32> to vector<8x48xf32>
    %cst_34 = arith.constant dense<0.000000e+00> : vector<8x48xf32>
    %157 = tpu.matmul %154, %32, %cst_34 {dimension_numbers = #tpu.dot_dimension_numbers<[1], [0], [0], [1], [0, 0, 1, 1], [], []>} : vector<8x12xf32>, vector<12x48xf32>, vector<8x48xf32> -> vector<8x48xf32>
    %158 = arith.addf %156, %157 : vector<8x48xf32>
    %159 = vector.extract_strided_slice %158 {offsets = [0, 0], sizes = [8, 36], strides = [1, 1]} : vector<8x48xf32> to vector<8x36xf32>
    %160 = arith.negf %159 : vector<8x36xf32>
    %161 = math.exp %160 : vector<8x36xf32>
    %cst_35 = arith.constant 1.000000e+00 : f32
    %162 = vector.broadcast %cst_35 : f32 to vector<8x36xf32>
    %163 = arith.addf %162, %161 : vector<8x36xf32>
    %164 = arith.divf %162, %163 : vector<8x36xf32>
    %165 = vector.extract_strided_slice %158 {offsets = [0, 36], sizes = [8, 12], strides = [1, 1]} : vector<8x48xf32> to vector<8x12xf32>
    %166 = math.tanh %165 : vector<8x12xf32>
    %167 = vector.extract_strided_slice %164 {offsets = [0, 12], sizes = [8, 12], strides = [1, 1]} : vector<8x36xf32> to vector<8x12xf32>
    %168 = arith.mulf %167, %151 : vector<8x12xf32>
    %169 = vector.extract_strided_slice %164 {offsets = [0, 0], sizes = [8, 12], strides = [1, 1]} : vector<8x36xf32> to vector<8x12xf32>
    %170 = arith.mulf %169, %166 : vector<8x12xf32>
    %171 = arith.addf %168, %170 : vector<8x12xf32>
    %172 = vector.extract_strided_slice %164 {offsets = [0, 24], sizes = [8, 12], strides = [1, 1]} : vector<8x36xf32> to vector<8x12xf32>
    %173 = math.tanh %171 : vector<8x12xf32>
    %174 = arith.mulf %172, %173 : vector<8x12xf32>
    %c0_36 = arith.constant 0 : index
    %c0_37 = arith.constant 0 : index
    %c0_38 = arith.constant 0 : index
    %175 = vector.load %arg8[%c0_36, %c0_37, %c0_38] : memref<1x8x12xf32, #tpu.memory_space<vmem>>, vector<1x8x12xf32>
    %176 = vector.shape_cast %175 : vector<1x8x12xf32> to vector<8x12xf32>
    %177 = vector.shape_cast %174 : vector<8x12xf32> to vector<1x8x12xf32>
    tpu.vector_store %arg8[%c0_36, %c0_37, %c0_38], %177 {strides = array<i32>} : memref<1x8x12xf32, #tpu.memory_space<vmem>>, vector<1x8x12xf32>,
    return
  }
  func.func @transform_0(%arg0: i32, %arg1: i32) -> (i32, i32, i32, i32) {
    %c0_i32 = arith.constant 0 : i32
    %c0_i32_0 = arith.constant 0 : i32
    %c0_i32_1 = arith.constant 0 : i32
    return %arg0, %arg1, %c0_i32, %c0_i32_0 : i32, i32, i32, i32
  }
  func.func @transform_1(%arg0: i32, %arg1: i32) -> (i32, i32, i32) {
    %c0_i32 = arith.constant 0 : i32
    %c0_i32_0 = arith.constant 0 : i32
    %c0_i32_1 = arith.constant 0 : i32
    return %arg0, %c0_i32, %c0_i32_0 : i32, i32, i32
  }
  func.func @transform_2(%arg0: i32, %arg1: i32) -> (i32, i32, i32) {
    %c0_i32 = arith.constant 0 : i32
    %c0_i32_0 = arith.constant 0 : i32
    %c0_i32_1 = arith.constant 0 : i32
    return %arg0, %c0_i32, %c0_i32_0 : i32, i32, i32
  }
  func.func @transform_3(%arg0: i32, %arg1: i32) -> (i32, i32, i32) {
    %c0_i32 = arith.constant 0 : i32
    %c0_i32_0 = arith.constant 0 : i32
    %c0_i32_1 = arith.constant 0 : i32
    return %arg0, %c0_i32, %c0_i32_0 : i32, i32, i32
  }
  func.func @transform_4(%arg0: i32, %arg1: i32) -> (i32, i32, i32) {
    %c0_i32 = arith.constant 0 : i32
    %c0_i32_0 = arith.constant 0 : i32
    %c0_i32_1 = arith.constant 0 : i32
    return %arg0, %c0_i32, %c0_i32_0 : i32, i32, i32
  }
  func.func @transform_5(%arg0: i32, %arg1: i32) -> (i32, i32, i32) {
    %c0_i32 = arith.constant 0 : i32
    %c0_i32_0 = arith.constant 0 : i32
    %c0_i32_1 = arith.constant 0 : i32
    return %arg0, %c0_i32, %c0_i32_0 : i32, i32, i32
  }
  func.func @transform_6(%arg0: i32, %arg1: i32) -> (i32, i32, i32) {
    %c0_i32 = arith.constant 0 : i32
    %c0_i32_0 = arith.constant 0 : i32
    return %arg0, %arg1, %c0_i32 : i32, i32, i32
  }
}

</mosaic_0001>

<llo_original>
// kernel: tpu_custom_call.1
$region0: #{tpu_custom_call.1}
  #allocation0 [shape = 'u32[]', space=smem, size = 0x4, offset = 0x4, fixed_abs, tag = 'smem constant byte address 0x4 - core index']
  #allocation1 [shape = 'u32[144,128]{1,0:T(1,128)}', space=vmem, size = 0x12000, scoped, tag = 'internal scratch']
  %s0 = inlined_call_operand.vmem [shape: f32[2,8,16,6], index: 0, kind: input, shape index: {}]
  %s1 = inlined_call_operand.vmem [shape: f32[2,60,12], index: 1, kind: input, shape index: {}]
  %s2 = inlined_call_operand.vmem [shape: f32[2,1,12], index: 2, kind: input, shape index: {}]
  %s3 = inlined_call_operand.vmem [shape: f32[2,12,48], index: 3, kind: input, shape index: {}]
  %s4 = inlined_call_operand.vmem [shape: f32[2,12,48], index: 4, kind: input, shape index: {}]
  %s5 = inlined_call_operand.vmem [shape: f32[2,1,48], index: 5, kind: input, shape index: {}]
  %s6 = inlined_call_operand.hbm [shape: f32[2,8,12], index: 6, kind: output, shape index: {}]
  %s7 = sld [smem:[#allocation0]]
  $region57: #{tpu_custom_call.1} parent=0
    _
  %s9 = ssub.s32 1, %s7
  %s10 = scalar_select 0, %s9, %s7
  $region1: #{tpu_custom_call.1} parent=0
    #allocation2 [shape = 'u8[8192]{0}', space=vmem, size = 0x2000, scoped, tag = 'output window, operand 0']
    #allocation3 [shape = 's32[2]{0}', space=sflag, size = 0x8, scoped, tag = 'scoped memory for tpu_custom_call.1']
    %11 = vsyncpa [#allocation3], 0
    %s12 = scalar_lea.sflag [#allocation3], 1
    %13 = vsyncpa %s12, 0
    loop: start=0, step=1, limit=4
    $region2: #{tpu_custom_call.1} parent=1 // loop_pre_header
      _
    $region3: #{tpu_custom_call.1} parent=1 // loop_header
      %s15 = sphi 0, %s19
      %p16 = scmp.ge.s32.totalorder %s15, 4
      %s22 = sphi 0, %s34
      %s23 = sphi 0, %s30
      %s24 = sphi 0, %s22
      %s25 = sphi 0, %s23
      %s26 = sphi 0, %s24
      %s27 = sphi 0, %s25
      %s39 = sphi 0, %s41
      %s42 = sphi 0, %s39
      %s43 = sphi 0, %s42
      %s59 = sphi 0, %s43
      %s65 = sphi 0, %s67
      %s68 = sphi 0, %s65
      %s69 = sphi 0, %s68
      %s85 = sphi 0, %s69
      %s91 = sphi 0, %s93
      %s94 = sphi 0, %s91
      %s95 = sphi 0, %s94
      %s111 = sphi 0, %s95
      %s117 = sphi 0, %s119
      %s120 = sphi 0, %s117
      %s121 = sphi 0, %s120
      %s137 = sphi 0, %s121
      %s143 = sphi 0, %s145
      %s146 = sphi 0, %s143
      %s147 = sphi 0, %s146
      %s163 = sphi 0, %s147
      %s169 = sphi 0, %s171
      %s172 = sphi 0, %s169
      %s173 = sphi 0, %s172
      %s189 = sphi 0, %s173
      %s197 = sphi 0, %s199
      %s200 = sphi 0, %s197
      %s201 = sphi 0, %s200
      %s217 = sphi 0, %s201
    $region4: #{tpu_custom_call.1} parent=1 // loop_header_branch
      %18 = sbr.rel (%p16) target = $region8
    $region5: #{tpu_custom_call.1} parent=1 // loop_body
      %s20 = ssub.s32 %s15, 1
      %s21 = ssub.s32 %s15, 2
      %s28 = sadd.s32 1, %s23
      %p29 = scmp.ge.s32.totalorder %s28, 1
      %s30 = scalar_select %p29, 0, %s28
      %s31 = sadd.s32 1, %s22
      %s32 = scalar_select %p29, %s31, %s22
      %p33 = scmp.ge.s32.totalorder %s32, 2
      %s34 = scalar_select %p33, 0, %s32
      %s35 = ssub.s32 %s22, %s34
      %s36 = ssub.s32 %s23, %s30
      %s37 = sor.u32 %s35, %s36
      %p38 = scmp.eq.s32.totalorder %s37, 0
      %s40 = sadd.s32 %s39, 1
      %s41 = scalar_select %p38, %s39, %s40
      %p44 = pneg %p38
      %p45 = scmp.eq.s32.totalorder %s15, 1
      %p46 = por %p44, %p45
      %p47 = scmp.ne.s32.totalorder %s39, %s42
      %p48 = scmp.eq.s32.totalorder %s15, 0
      %p49 = por %p47, %p48
      %p50 = scmp.ne.s32.totalorder %s39, %s42
      %p51 = scmp.eq.s32.totalorder %s20, 1
      %p52 = por %p50, %p51
      %p53 = scmp.ne.s32.totalorder %s42, %s43
      %p54 = scmp.eq.s32.totalorder %s20, 0
      %p55 = por %p53, %p54
      %p56 = scmp.ne.s32.totalorder %s42, %s43
      %p57 = scmp.eq.s32.totalorder %s21, 1
      %p58 = por %p56, %p57
      %p60 = scmp.ne.s32.totalorder %s43, %s59
      %p61 = scmp.eq.s32.totalorder %s21, 0
      %p62 = por %p60, %p61
      %s63 = ssub.s32 %s22, %s34
      %p64 = scmp.eq.s32.totalorder %s63, 0
      %s66 = sadd.s32 %s65, 1
      %s67 = scalar_select %p64, %s65, %s66
      %p70 = pneg %p64
      %p71 = scmp.eq.s32.totalorder %s15, 1
      %p72 = por %p70, %p71
      %p73 = scmp.ne.s32.totalorder %s65, %s68
      %p74 = scmp.eq.s32.totalorder %s15, 0
      %p75 = por %p73, %p74
      %p76 = scmp.ne.s32.totalorder %s65, %s68
      %p77 = scmp.eq.s32.totalorder %s20, 1
      %p78 = por %p76, %p77
      %p79 = scmp.ne.s32.totalorder %s68, %s69
      %p80 = scmp.eq.s32.totalorder %s20, 0
      %p81 = por %p79, %p80
      %p82 = scmp.ne.s32.totalorder %s68, %s69
      %p83 = scmp.eq.s32.totalorder %s21, 1
      %p84 = por %p82, %p83
      %p86 = scmp.ne.s32.totalorder %s69, %s85
      %p87 = scmp.eq.s32.totalorder %s21, 0
      %p88 = por %p86, %p87
      %s89 = ssub.s32 %s22, %s34
      %p90 = scmp.eq.s32.totalorder %s89, 0
      %s92 = sadd.s32 %s91, 1
      %s93 = scalar_select %p90, %s91, %s92
      %p96 = pneg %p90
      %p97 = scmp.eq.s32.totalorder %s15, 1
      %p98 = por %p96, %p97
      %p99 = scmp.ne.s32.totalorder %s91, %s94
      %p100 = scmp.eq.s32.totalorder %s15, 0
      %p101 = por %p99, %p100
      %p102 = scmp.ne.s32.totalorder %s91, %s94
      %p103 = scmp.eq.s32.totalorder %s20, 1
      %p104 = por %p102, %p103
      %p105 = scmp.ne.s32.totalorder %s94, %s95
      %p106 = scmp.eq.s32.totalorder %s20, 0
      %p107 = por %p105, %p106
      %p108 = scmp.ne.s32.totalorder %s94, %s95
      %p109 = scmp.eq.s32.totalorder %s21, 1
      %p110 = por %p108, %p109
      %p112 = scmp.ne.s32.totalorder %s95, %s111
      %p113 = scmp.eq.s32.totalorder %s21, 0
      %p114 = por %p112, %p113
      %s115 = ssub.s32 %s22, %s34
      %p116 = scmp.eq.s32.totalorder %s115, 0
      %s118 = sadd.s32 %s117, 1
      %s119 = scalar_select %p116, %s117, %s118
      %p122 = pneg %p116
      %p123 = scmp.eq.s32.totalorder %s15, 1
      %p124 = por %p122, %p123
      %p125 = scmp.ne.s32.totalorder %s117, %s120
      %p126 = scmp.eq.s32.totalorder %s15, 0
      %p127 = por %p125, %p126
      %p128 = scmp.ne.s32.totalorder %s117, %s120
      %p129 = scmp.eq.s32.totalorder %s20, 1
      %p130 = por %p128, %p129
      %p131 = scmp.ne.s32.totalorder %s120, %s121
      %p132 = scmp.eq.s32.totalorder %s20, 0
      %p133 = por %p131, %p132
      %p134 = scmp.ne.s32.totalorder %s120, %s121
      %p135 = scmp.eq.s32.totalorder %s21, 1
      %p136 = por %p134, %p135
      %p138 = scmp.ne.s32.totalorder %s121, %s137
      %p139 = scmp.eq.s32.totalorder %s21, 0
      %p140 = por %p138, %p139
      %s141 = ssub.s32 %s22, %s34
      %p142 = scmp.eq.s32.totalorder %s141, 0
      %s144 = sadd.s32 %s143, 1
      %s145 = scalar_select %p142, %s143, %s144
      %p148 = pneg %p142
      %p149 = scmp.eq.s32.totalorder %s15, 1
      %p150 = por %p148, %p149
      %p151 = scmp.ne.s32.totalorder %s143, %s146
      %p152 = scmp.eq.s32.totalorder %s15, 0
      %p153 = por %p151, %p152
      %p154 = scmp.ne.s32.totalorder %s143, %s146
      %p155 = scmp.eq.s32.totalorder %s20, 1
      %p156 = por %p154, %p155
      %p157 = scmp.ne.s32.totalorder %s146, %s147
      %p158 = scmp.eq.s32.totalorder %s20, 0
      %p159 = por %p157, %p158
      %p160 = scmp.ne.s32.totalorder %s146, %s147
      %p161 = scmp.eq.s32.totalorder %s21, 1
      %p162 = por %p160, %p161
      %p164 = scmp.ne.s32.totalorder %s147, %s163
      %p165 = scmp.eq.s32.totalorder %s21, 0
      %p166 = por %p164, %p165
      %s167 = ssub.s32 %s22, %s34
      %p168 = scmp.eq.s32.totalorder %s167, 0
      %s170 = sadd.s32 %s169, 1
      %s171 = scalar_select %p168, %s169, %s170
      %p174 = pneg %p168
      %p175 = scmp.eq.s32.totalorder %s15, 1
      %p176 = por %p174, %p175
      %p177 = scmp.ne.s32.totalorder %s169, %s172
      %p178 = scmp.eq.s32.totalorder %s15, 0
      %p179 = por %p177, %p178
      %p180 = scmp.ne.s32.totalorder %s169, %s172
      %p181 = scmp.eq.s32.totalorder %s20, 1
      %p182 = por %p180, %p181
      %p183 = scmp.ne.s32.totalorder %s172, %s173
      %p184 = scmp.eq.s32.totalorder %s20, 0
      %p185 = por %p183, %p184
      %p186 = scmp.ne.s32.totalorder %s172, %s173
      %p187 = scmp.eq.s32.totalorder %s21, 1
      %p188 = por %p186, %p187
      %p190 = scmp.ne.s32.totalorder %s173, %s189
      %p191 = scmp.eq.s32.totalorder %s21, 0
      %p192 = por %p190, %p191
      %s193 = ssub.s32 %s22, %s34
      %s194 = ssub.s32 %s23, %s30
      %s195 = sor.u32 %s193, %s194
      %p196 = scmp.eq.s32.totalorder %s195, 0
      %s198 = sadd.s32 %s197, 1
      %s199 = scalar_select %p196, %s197, %s198
      %p202 = pneg %p196
      %p203 = scmp.eq.s32.totalorder %s15, 1
      %p204 = por %p202, %p203
      %p205 = scmp.ne.s32.totalorder %s197, %s200
      %p206 = scmp.eq.s32.totalorder %s15, 0
      %p207 = por %p205, %p206
      %p208 = scmp.ne.s32.totalorder %s197, %s200
      %p209 = scmp.eq.s32.totalorder %s20, 1
      %p210 = por %p208, %p209
      %p211 = scmp.ne.s32.totalorder %s200, %s201
      %p212 = scmp.eq.s32.totalorder %s20, 0
      %p213 = por %p211, %p212
      %p214 = scmp.ne.s32.totalorder %s200, %s201
      %p215 = scmp.eq.s32.totalorder %s21, 1
      %p216 = por %p214, %p215
      %p218 = scmp.ne.s32.totalorder %s201, %s217
      %p219 = scmp.eq.s32.totalorder %s21, 0
      %p220 = por %p218, %p219
      %p221 = scmp.le.s32.totalorder 1, %s15
      %p222 = scmp.lt.s32.totalorder %s15, 3
      %p223 = pnand %p221, %p222
      %p224 = pneg %p223
      // Predicated region
      $region9: #{tpu_custom_call.1} parent=5 // pred_check
        _
      $region10: #{tpu_custom_call.1} parent=5 // pred_check_branch
        %226 = sbr.rel (%p223) target = $region12
      $region11: #{tpu_custom_call.1} parent=5 // pred_region
        %s227 = ssub.s32 %s15, 1
      $region12: #{tpu_custom_call.1} parent=5 // pred_fallthru
        _
      %p228 = scmp.lt.s32.totalorder %s15, 2
      // Predicated region
      $region13: #{tpu_custom_call.1} parent=5 // pred_check
        %p229 = pneg %p228
      $region14: #{tpu_custom_call.1} parent=5 // pred_check_branch
        %231 = sbr.rel (%p229) target = $region16
      $region15: #{tpu_custom_call.1} parent=5 // pred_region
        // Predicated region
        $region17: #{tpu_custom_call.1} parent=15 // pred_check
          %p232 = pneg %p49
        $region18: #{tpu_custom_call.1} parent=15 // pred_check_branch
          %234 = sbr.rel (%p232) target = $region20
        $region19: #{tpu_custom_call.1} parent=15 // pred_region
          %s235 = smul.u32 8, %s23
          %p236 = scmp.lt.s32.totalorder %s22, 1
          %s237 = scalar_select %p236, %s22, 1
          %p238 = scmp.lt.s32.totalorder %s235, 7
          %s239 = scalar_select %p238, %s235, 7
          %s240 = smul.addr %s239, 2
          %s241 = smul.addr %s237, 16
          %s242 = sadd.s32 %s240, %s241
          %s243 = smul.addr %s242, 8
          %s244 = scalar_lea.vmem %s0, %s243
          %s245 = smul.u32 8, %s23
        $region20: #{tpu_custom_call.1} parent=15 // pred_fallthru
          _
        // Predicated region
        $region21: #{tpu_custom_call.1} parent=15 // pred_check
          %p246 = pneg %p75
        $region22: #{tpu_custom_call.1} parent=15 // pred_check_branch
          %248 = sbr.rel (%p246) target = $region24
        $region23: #{tpu_custom_call.1} parent=15 // pred_region
          %p249 = scmp.lt.s32.totalorder %s22, 1
          %s250 = scalar_select %p249, %s22, 1
          %s251 = smul.addr %s250, 8
          %s252 = smul.addr %s251, 8
          %s253 = scalar_lea.vmem %s1, %s252
        $region24: #{tpu_custom_call.1} parent=15 // pred_fallthru
          _
        // Predicated region
        $region25: #{tpu_custom_call.1} parent=15 // pred_check
          %p254 = pneg %p101
        $region26: #{tpu_custom_call.1} parent=15 // pred_check_branch
          %256 = sbr.rel (%p254) target = $region28
        $region27: #{tpu_custom_call.1} parent=15 // pred_region
          %p257 = scmp.lt.s32.totalorder %s22, 1
          %s258 = scalar_select %p257, %s22, 1
          %s259 = scalar_lea.vmem %s2, %s258
        $region28: #{tpu_custom_call.1} parent=15 // pred_fallthru
          _
        // Predicated region
        $region29: #{tpu_custom_call.1} parent=15 // pred_check
          %p260 = pneg %p127
        $region30: #{tpu_custom_call.1} parent=15 // pred_check_branch
          %262 = sbr.rel (%p260) target = $region32
        $region31: #{tpu_custom_call.1} parent=15 // pred_region
          %p263 = scmp.lt.s32.totalorder %s22, 1
          %s264 = scalar_select %p263, %s22, 1
          %s265 = smul.addr %s264, 2
          %s266 = smul.addr %s265, 8
          %s267 = scalar_lea.vmem %s3, %s266
        $region32: #{tpu_custom_call.1} parent=15 // pred_fallthru
          _
        // Predicated region
        $region33: #{tpu_custom_call.1} parent=15 // pred_check
          %p268 = pneg %p153
        $region34: #{tpu_custom_call.1} parent=15 // pred_check_branch
          %270 = sbr.rel (%p268) target = $region36
        $region35: #{tpu_custom_call.1} parent=15 // pred_region
          %p271 = scmp.lt.s32.totalorder %s22, 1
          %s272 = scalar_select %p271, %s22, 1
          %s273 = smul.addr %s272, 2
          %s274 = smul.addr %s273, 8
          %s275 = scalar_lea.vmem %s4, %s274
        $region36: #{tpu_custom_call.1} parent=15 // pred_fallthru
          _
        // Predicated region
        $region37: #{tpu_custom_call.1} parent=15 // pred_check
          %p276 = pneg %p179
        $region38: #{tpu_custom_call.1} parent=15 // pred_check_branch
          %278 = sbr.rel (%p276) target = $region40
        $region39: #{tpu_custom_call.1} parent=15 // pred_region
          %p279 = scmp.lt.s32.totalorder %s22, 1
          %s280 = scalar_select %p279, %s22, 1
          %s281 = scalar_lea.vmem %s5, %s280
        $region40: #{tpu_custom_call.1} parent=15 // pred_fallthru
          _
      $region16: #{tpu_custom_call.1} parent=5 // pred_fallthru
        _
      %p282 = scmp.le.s32.totalorder 1, %s15
      %p283 = scmp.lt.s32.totalorder %s15, 3
      %p284 = pnand %p282, %p283
      %p285 = pneg %p284
      // Predicated region
      $region41: #{tpu_custom_call.1} parent=5 // pred_check
        _
      $region42: #{tpu_custom_call.1} parent=5 // pred_check_branch
        %287 = sbr.rel (%p284) target = $region44
      $region43: #{tpu_custom_call.1} parent=5 // pred_region
        %s288 = ssub.s32 %s15, 1
        %s289 = smul.u32 8, %s25
        %p290 = scmp.lt.s32.totalorder %s24, 1
        %s291 = scalar_select %p290, %s24, 1
        %p292 = scmp.lt.s32.totalorder %s289, 7
        %s293 = scalar_select %p292, %s289, 7
        %s294 = smul.addr %s293, 2
        %s295 = smul.addr %s291, 16
        %s296 = sadd.s32 %s294, %s295
        %s297 = smul.addr %s296, 8
        %s298 = scalar_lea.vmem %s0, %s297
        %p299 = pneg %p55
        %p300 = pneg %p52
        %p301 = scmp.lt.s32.totalorder %s24, 1
        %s302 = scalar_select %p301, %s24, 1
        %s303 = smul.addr %s302, 8
        %s304 = smul.addr %s303, 8
        %s305 = scalar_lea.vmem %s1, %s304
        %p306 = pneg %p81
        %p307 = pneg %p78
        %p308 = scmp.lt.s32.totalorder %s24, 1
        %s309 = scalar_select %p308, %s24, 1
        %s310 = scalar_lea.vmem %s2, %s309
        %p311 = pneg %p107
        %p312 = pneg %p104
        %p313 = scmp.lt.s32.totalorder %s24, 1
        %s314 = scalar_select %p313, %s24, 1
        %s315 = smul.addr %s314, 2
        %s316 = smul.addr %s315, 8
        %s317 = scalar_lea.vmem %s3, %s316
        %p318 = pneg %p133
        %p319 = pneg %p130
        %p320 = scmp.lt.s32.totalorder %s24, 1
        %s321 = scalar_select %p320, %s24, 1
        %s322 = smul.addr %s321, 2
        %s323 = smul.addr %s322, 8
        %s324 = scalar_lea.vmem %s4, %s323
        %p325 = pneg %p159
        %p326 = pneg %p156
        %p327 = scmp.lt.s32.totalorder %s24, 1
        %s328 = scalar_select %p327, %s24, 1
        %s329 = scalar_lea.vmem %s5, %s328
        %p330 = pneg %p185
        %p331 = pneg %p182
        %p332 = pneg %p213
        %p333 = pneg %p210
        %s334 = sand.u32 %s200, 1
        %s335 = scalar_lea.sflag [#allocation3], %s334
        %s336 = sand.u32 %s200, 1
        %s337 = smul.addr %s336, 8
        %s338 = scalar_lea.vmem [#allocation2], %s337
        %s339 = smul.u32 8, %s25
        %p340 = scmp.lt.s32.totalorder %s24, 1
        %s341 = scalar_select %p340, %s24, 1
        %p342 = scmp.lt.s32.totalorder %s339, 7
        %s343 = scalar_select %p342, %s339, 7
        %s344 = smul.addr %s343, 2
        %s345 = smul.addr %s341, 16
        %s346 = sadd.s32 %s344, %s345
        %s347 = smul.addr %s346, 8
        %s348 = scalar_lea.vmem %s0, %s347
        %s349 = smul.u32 8, %s25
        %p350 = scmp.lt.s32.totalorder %s24, 1
        %s351 = scalar_select %p350, %s24, 1
        %s352 = smul.addr %s351, 8
        %s353 = smul.addr %s352, 8
        %s354 = scalar_lea.vmem %s1, %s353
        %p355 = scmp.lt.s32.totalorder %s24, 1
        %s356 = scalar_select %p355, %s24, 1
        %s357 = scalar_lea.vmem %s2, %s356
        %p358 = scmp.lt.s32.totalorder %s24, 1
        %s359 = scalar_select %p358, %s24, 1
        %s360 = smul.addr %s359, 2
        %s361 = smul.addr %s360, 8
        %s362 = scalar_lea.vmem %s3, %s361
        %p363 = scmp.lt.s32.totalorder %s24, 1
        %s364 = scalar_select %p363, %s24, 1
        %s365 = smul.addr %s364, 2
        %s366 = smul.addr %s365, 8
        %s367 = scalar_lea.vmem %s4, %s366
        %p368 = scmp.lt.s32.totalorder %s24, 1
        %s369 = scalar_select %p368, %s24, 1
        %s370 = scalar_lea.vmem %s5, %s369
        %v371 = vld [vmem:[%s348] sm:$0xff]
        %v372 = vld [vmem:[%s348 + $0x8] sm:$0xff]
        %v373 = vld [vmem:[%s348 + $0x10] sm:$0xff]
        %v374 = vld [vmem:[%s348 + $0x18] sm:$0xff]
        %v375 = vld [vmem:[%s348 + $0x20] sm:$0xff]
        %v376 = vld [vmem:[%s348 + $0x28] sm:$0xff]
        %v377 = vld [vmem:[%s348 + $0x30] sm:$0xff]
        %v378 = vld [vmem:[%s348 + $0x38] sm:$0xff]
        %v379 = vld [vmem:[%s348 + $0x40] sm:$0xff]
        %v380 = vld [vmem:[%s348 + $0x48] sm:$0xff]
        %v381 = vld [vmem:[%s348 + $0x50] sm:$0xff]
        %v382 = vld [vmem:[%s348 + $0x58] sm:$0xff]
        %v383 = vld [vmem:[%s348 + $0x60] sm:$0xff]
        %v384 = vld [vmem:[%s348 + $0x68] sm:$0xff]
        %v385 = vld [vmem:[%s348 + $0x70] sm:$0xff]
        %v386 = vld [vmem:[%s348 + $0x78] sm:$0xff]
        %v395 = vrot.slane %v371, 1
        %v396 = vrot.slane %v373, 1
        %v397 = vrot.slane %v375, 1
        %v398 = vrot.slane %v377, 1
        %v399 = vrot.slane %v379, 1
        %v400 = vrot.slane %v381, 1
        %v401 = vrot.slane %v383, 1
        %v402 = vrot.slane %v385, 1
        %403 = vrot.lane.b32.xlu0 %v395, 6
        %v404 = vpop.permute.xlu0 %403
        %405 = vrot.lane.b32.xlu0 %v396, 6
        %v406 = vpop.permute.xlu0 %405
        %407 = vrot.lane.b32.xlu0 %v397, 6
        %v408 = vpop.permute.xlu0 %407
        %409 = vrot.lane.b32.xlu0 %v398, 6
        %v410 = vpop.permute.xlu0 %409
        %411 = vrot.lane.b32.xlu0 %v399, 6
        %v412 = vpop.permute.xlu0 %411
        %413 = vrot.lane.b32.xlu0 %v400, 6
        %v414 = vpop.permute.xlu0 %413
        %415 = vrot.lane.b32.xlu0 %v401, 6
        %v416 = vpop.permute.xlu0 %415
        %417 = vrot.lane.b32.xlu0 %v402, 6
        %v418 = vpop.permute.xlu0 %417
        %vm435 = vcmask 1045504
        %v436 = vrot.slane %v371, 2
        %v437 = vrot.slane %v372, 2
        %v438 = vsel %vm435, %v436, %v437
        %v439 = vrot.slane %v373, 2
        %v440 = vrot.slane %v374, 2
        %v441 = vsel %vm435, %v439, %v440
        %v442 = vrot.slane %v375, 2
        %v443 = vrot.slane %v376, 2
        %v444 = vsel %vm435, %v442, %v443
        %v445 = vrot.slane %v377, 2
        %v446 = vrot.slane %v378, 2
        %v447 = vsel %vm435, %v445, %v446
        %v448 = vrot.slane %v379, 2
        %v449 = vrot.slane %v380, 2
        %v450 = vsel %vm435, %v448, %v449
        %v451 = vrot.slane %v381, 2
        %v452 = vrot.slane %v382, 2
        %v453 = vsel %vm435, %v451, %v452
        %v454 = vrot.slane %v383, 2
        %v455 = vrot.slane %v384, 2
        %v456 = vsel %vm435, %v454, %v455
        %v457 = vrot.slane %v385, 2
        %v458 = vrot.slane %v386, 2
        %v459 = vsel %vm435, %v457, %v458
        %460 = vrot.lane.b32.xlu0 %v438, 12
        %v461 = vpop.permute.xlu0 %460
        %462 = vrot.lane.b32.xlu0 %v441, 12
        %v463 = vpop.permute.xlu0 %462
        %464 = vrot.lane.b32.xlu0 %v444, 12
        %v465 = vpop.permute.xlu0 %464
        %466 = vrot.lane.b32.xlu0 %v447, 12
        %v467 = vpop.permute.xlu0 %466
        %468 = vrot.lane.b32.xlu0 %v450, 12
        %v469 = vpop.permute.xlu0 %468
        %470 = vrot.lane.b32.xlu0 %v453, 12
        %v471 = vpop.permute.xlu0 %470
        %472 = vrot.lane.b32.xlu0 %v456, 12
        %v473 = vpop.permute.xlu0 %472
        %474 = vrot.lane.b32.xlu0 %v459, 12
        %v475 = vpop.permute.xlu0 %474
        %vm484 = vcmask 1044480
        %v485 = vrot.slane %v371, 3
        %v486 = vrot.slane %v372, 3
        %v487 = vsel %vm484, %v485, %v486
        %v488 = vrot.slane %v373, 3
        %v489 = vrot.slane %v374, 3
        %v490 = vsel %vm484, %v488, %v489
        %v491 = vrot.slane %v375, 3
        %v492 = vrot.slane %v376, 3
        %v493 = vsel %vm484, %v491, %v492
        %v494 = vrot.slane %v377, 3
        %v495 = vrot.slane %v378, 3
        %v496 = vsel %vm484, %v494, %v495
        %v497 = vrot.slane %v379, 3
        %v498 = vrot.slane %v380, 3
        %v499 = vsel %vm484, %v497, %v498
        %v500 = vrot.slane %v381, 3
        %v501 = vrot.slane %v382, 3
        %v502 = vsel %vm484, %v500, %v501
        %v503 = vrot.slane %v383, 3
        %v504 = vrot.slane %v384, 3
        %v505 = vsel %vm484, %v503, %v504
        %v506 = vrot.slane %v385, 3
        %v507 = vrot.slane %v386, 3
        %v508 = vsel %vm484, %v506, %v507
        %509 = vrot.lane.b32.xlu0 %v487, 18
        %v510 = vpop.permute.xlu0 %509
        %511 = vrot.lane.b32.xlu0 %v490, 18
        %v512 = vpop.permute.xlu0 %511
        %513 = vrot.lane.b32.xlu0 %v493, 18
        %v514 = vpop.permute.xlu0 %513
        %515 = vrot.lane.b32.xlu0 %v496, 18
        %v516 = vpop.permute.xlu0 %515
        %517 = vrot.lane.b32.xlu0 %v499, 18
        %v518 = vpop.permute.xlu0 %517
        %519 = vrot.lane.b32.xlu0 %v502, 18
        %v520 = vpop.permute.xlu0 %519
        %521 = vrot.lane.b32.xlu0 %v505, 18
        %v522 = vpop.permute.xlu0 %521
        %523 = vrot.lane.b32.xlu0 %v508, 18
        %v524 = vpop.permute.xlu0 %523
        %vm533 = vcmask 1043456
        %v534 = vrot.slane %v371, 4
        %v535 = vrot.slane %v372, 4
        %v536 = vsel %vm533, %v534, %v535
        %v537 = vrot.slane %v373, 4
        %v538 = vrot.slane %v374, 4
        %v539 = vsel %vm533, %v537, %v538
        %v540 = vrot.slane %v375, 4
        %v541 = vrot.slane %v376, 4
        %v542 = vsel %vm533, %v540, %v541
        %v543 = vrot.slane %v377, 4
        %v544 = vrot.slane %v378, 4
        %v545 = vsel %vm533, %v543, %v544
        %v546 = vrot.slane %v379, 4
        %v547 = vrot.slane %v380, 4
        %v548 = vsel %vm533, %v546, %v547
        %v549 = vrot.slane %v381, 4
        %v550 = vrot.slane %v382, 4
        %v551 = vsel %vm533, %v549, %v550
        %v552 = vrot.slane %v383, 4
        %v553 = vrot.slane %v384, 4
        %v554 = vsel %vm533, %v552, %v553
        %v555 = vrot.slane %v385, 4
        %v556 = vrot.slane %v386, 4
        %v557 = vsel %vm533, %v555, %v556
        %558 = vrot.lane.b32.xlu0 %v536, 24
        %v559 = vpop.permute.xlu0 %558
        %560 = vrot.lane.b32.xlu0 %v539, 24
        %v561 = vpop.permute.xlu0 %560
        %562 = vrot.lane.b32.xlu0 %v542, 24
        %v563 = vpop.permute.xlu0 %562
        %564 = vrot.lane.b32.xlu0 %v545, 24
        %v565 = vpop.permute.xlu0 %564
        %566 = vrot.lane.b32.xlu0 %v548, 24
        %v567 = vpop.permute.xlu0 %566
        %568 = vrot.lane.b32.xlu0 %v551, 24
        %v569 = vpop.permute.xlu0 %568
        %570 = vrot.lane.b32.xlu0 %v554, 24
        %v571 = vpop.permute.xlu0 %570
        %572 = vrot.lane.b32.xlu0 %v557, 24
        %v573 = vpop.permute.xlu0 %572
        %vm582 = vcmask 1042432
        %v583 = vrot.slane %v371, 5
        %v584 = vrot.slane %v372, 5
        %v585 = vsel %vm582, %v583, %v584
        %v586 = vrot.slane %v373, 5
        %v587 = vrot.slane %v374, 5
        %v588 = vsel %vm582, %v586, %v587
        %v589 = vrot.slane %v375, 5
        %v590 = vrot.slane %v376, 5
        %v591 = vsel %vm582, %v589, %v590
        %v592 = vrot.slane %v377, 5
        %v593 = vrot.slane %v378, 5
        %v594 = vsel %vm582, %v592, %v593
        %v595 = vrot.slane %v379, 5
        %v596 = vrot.slane %v380, 5
        %v597 = vsel %vm582, %v595, %v596
        %v598 = vrot.slane %v381, 5
        %v599 = vrot.slane %v382, 5
        %v600 = vsel %vm582, %v598, %v599
        %v601 = vrot.slane %v383, 5
        %v602 = vrot.slane %v384, 5
        %v603 = vsel %vm582, %v601, %v602
        %v604 = vrot.slane %v385, 5
        %v605 = vrot.slane %v386, 5
        %v606 = vsel %vm582, %v604, %v605
        %607 = vrot.lane.b32.xlu0 %v585, 30
        %v608 = vpop.permute.xlu0 %607
        %609 = vrot.lane.b32.xlu0 %v588, 30
        %v610 = vpop.permute.xlu0 %609
        %611 = vrot.lane.b32.xlu0 %v591, 30
        %v612 = vpop.permute.xlu0 %611
        %613 = vrot.lane.b32.xlu0 %v594, 30
        %v614 = vpop.permute.xlu0 %613
        %615 = vrot.lane.b32.xlu0 %v597, 30
        %v616 = vpop.permute.xlu0 %615
        %617 = vrot.lane.b32.xlu0 %v600, 30
        %v618 = vpop.permute.xlu0 %617
        %619 = vrot.lane.b32.xlu0 %v603, 30
        %v620 = vpop.permute.xlu0 %619
        %621 = vrot.lane.b32.xlu0 %v606, 30
        %v622 = vpop.permute.xlu0 %621
        %vm631 = vcmask 1041408
        %v632 = vrot.slane %v371, 6
        %v633 = vrot.slane %v372, 6
        %v634 = vsel %vm631, %v632, %v633
        %v635 = vrot.slane %v373, 6
        %v636 = vrot.slane %v374, 6
        %v637 = vsel %vm631, %v635, %v636
        %v638 = vrot.slane %v375, 6
        %v639 = vrot.slane %v376, 6
        %v640 = vsel %vm631, %v638, %v639
        %v641 = vrot.slane %v377, 6
        %v642 = vrot.slane %v378, 6
        %v643 = vsel %vm631, %v641, %v642
        %v644 = vrot.slane %v379, 6
        %v645 = vrot.slane %v380, 6
        %v646 = vsel %vm631, %v644, %v645
        %v647 = vrot.slane %v381, 6
        %v648 = vrot.slane %v382, 6
        %v649 = vsel %vm631, %v647, %v648
        %v650 = vrot.slane %v383, 6
        %v651 = vrot.slane %v384, 6
        %v652 = vsel %vm631, %v650, %v651
        %v653 = vrot.slane %v385, 6
        %v654 = vrot.slane %v386, 6
        %v655 = vsel %vm631, %v653, %v654
        %656 = vrot.lane.b32.xlu0 %v634, 36
        %v657 = vpop.permute.xlu0 %656
        %658 = vrot.lane.b32.xlu0 %v637, 36
        %v659 = vpop.permute.xlu0 %658
        %660 = vrot.lane.b32.xlu0 %v640, 36
        %v661 = vpop.permute.xlu0 %660
        %662 = vrot.lane.b32.xlu0 %v643, 36
        %v663 = vpop.permute.xlu0 %662
        %664 = vrot.lane.b32.xlu0 %v646, 36
        %v665 = vpop.permute.xlu0 %664
        %666 = vrot.lane.b32.xlu0 %v649, 36
        %v667 = vpop.permute.xlu0 %666
        %668 = vrot.lane.b32.xlu0 %v652, 36
        %v669 = vpop.permute.xlu0 %668
        %670 = vrot.lane.b32.xlu0 %v655, 36
        %v671 = vpop.permute.xlu0 %670
        %vm680 = vcmask 1040384
        %v681 = vrot.slane %v371, 7
        %v682 = vrot.slane %v372, 7
        %v683 = vsel %vm680, %v681, %v682
        %v684 = vrot.slane %v373, 7
        %v685 = vrot.slane %v374, 7
        %v686 = vsel %vm680, %v684, %v685
        %v687 = vrot.slane %v375, 7
        %v688 = vrot.slane %v376, 7
        %v689 = vsel %vm680, %v687, %v688
        %v690 = vrot.slane %v377, 7
        %v691 = vrot.slane %v378, 7
        %v692 = vsel %vm680, %v690, %v691
        %v693 = vrot.slane %v379, 7
        %v694 = vrot.slane %v380, 7
        %v695 = vsel %vm680, %v693, %v694
        %v696 = vrot.slane %v381, 7
        %v697 = vrot.slane %v382, 7
        %v698 = vsel %vm680, %v696, %v697
        %v699 = vrot.slane %v383, 7
        %v700 = vrot.slane %v384, 7
        %v701 = vsel %vm680, %v699, %v700
        %v702 = vrot.slane %v385, 7
        %v703 = vrot.slane %v386, 7
        %v704 = vsel %vm680, %v702, %v703
        %705 = vrot.lane.b32.xlu0 %v683, 42
        %v706 = vpop.permute.xlu0 %705
        %707 = vrot.lane.b32.xlu0 %v686, 42
        %v708 = vpop.permute.xlu0 %707
        %709 = vrot.lane.b32.xlu0 %v689, 42
        %v710 = vpop.permute.xlu0 %709
        %711 = vrot.lane.b32.xlu0 %v692, 42
        %v712 = vpop.permute.xlu0 %711
        %713 = vrot.lane.b32.xlu0 %v695, 42
        %v714 = vpop.permute.xlu0 %713
        %715 = vrot.lane.b32.xlu0 %v698, 42
        %v716 = vpop.permute.xlu0 %715
        %717 = vrot.lane.b32.xlu0 %v701, 42
        %v718 = vpop.permute.xlu0 %717
        %719 = vrot.lane.b32.xlu0 %v704, 42
        %v720 = vpop.permute.xlu0 %719
        %729 = vrot.lane.b32.xlu0 %v372, 48
        %v730 = vpop.permute.xlu0 %729
        %731 = vrot.lane.b32.xlu0 %v374, 48
        %v732 = vpop.permute.xlu0 %731
        %733 = vrot.lane.b32.xlu0 %v376, 48
        %v734 = vpop.permute.xlu0 %733
        %735 = vrot.lane.b32.xlu0 %v378, 48
        %v736 = vpop.permute.xlu0 %735
        %737 = vrot.lane.b32.xlu0 %v380, 48
        %v738 = vpop.permute.xlu0 %737
        %739 = vrot.lane.b32.xlu0 %v382, 48
        %v740 = vpop.permute.xlu0 %739
        %741 = vrot.lane.b32.xlu0 %v384, 48
        %v742 = vpop.permute.xlu0 %741
        %743 = vrot.lane.b32.xlu0 %v386, 48
        %v744 = vpop.permute.xlu0 %743
        %v753 = vrot.slane %v372, 1
        %v754 = vrot.slane %v374, 1
        %v755 = vrot.slane %v376, 1
        %v756 = vrot.slane %v378, 1
        %v757 = vrot.slane %v380, 1
        %v758 = vrot.slane %v382, 1
        %v759 = vrot.slane %v384, 1
        %v760 = vrot.slane %v386, 1
        %761 = vrot.lane.b32.xlu0 %v753, 54
        %v762 = vpop.permute.xlu0 %761
        %763 = vrot.lane.b32.xlu0 %v754, 54
        %v764 = vpop.permute.xlu0 %763
        %765 = vrot.lane.b32.xlu0 %v755, 54
        %v766 = vpop.permute.xlu0 %765
        %767 = vrot.lane.b32.xlu0 %v756, 54
        %v768 = vpop.permute.xlu0 %767
        %769 = vrot.lane.b32.xlu0 %v757, 54
        %v770 = vpop.permute.xlu0 %769
        %771 = vrot.lane.b32.xlu0 %v758, 54
        %v772 = vpop.permute.xlu0 %771
        %773 = vrot.lane.b32.xlu0 %v759, 54
        %v774 = vpop.permute.xlu0 %773
        %775 = vrot.lane.b32.xlu0 %v760, 54
        %v776 = vpop.permute.xlu0 %775
        %vm785 = vcmask 48128
        %v786 = vsel %vm785, %v371, %v404
        %v787 = vsel %vm785, %v373, %v406
        %v788 = vsel %vm785, %v375, %v408
        %v789 = vsel %vm785, %v377, %v410
        %v790 = vsel %vm785, %v379, %v412
        %v791 = vsel %vm785, %v381, %v414
        %v792 = vsel %vm785, %v383, %v416
        %v793 = vsel %vm785, %v385, %v418
        %vm794 = vcmask 97280
        %v795 = vsel %vm794, %v786, %v461
        %v796 = vsel %vm794, %v787, %v463
        %v797 = vsel %vm794, %v788, %v465
        %v798 = vsel %vm794, %v789, %v467
        %v799 = vsel %vm794, %v790, %v469
        %v800 = vsel %vm794, %v791, %v471
        %v801 = vsel %vm794, %v792, %v473
        %v802 = vsel %vm794, %v793, %v475
        %vm803 = vcmask 146432
        %v804 = vsel %vm803, %v795, %v510
        %v805 = vsel %vm803, %v796, %v512
        %v806 = vsel %vm803, %v797, %v514
        %v807 = vsel %vm803, %v798, %v516
        %v808 = vsel %vm803, %v799, %v518
        %v809 = vsel %vm803, %v800, %v520
        %v810 = vsel %vm803, %v801, %v522
        %v811 = vsel %vm803, %v802, %v524
        %vm812 = vcmask 195584
        %v813 = vsel %vm812, %v804, %v559
        %v814 = vsel %vm812, %v805, %v561
        %v815 = vsel %vm812, %v806, %v563
        %v816 = vsel %vm812, %v807, %v565
        %v817 = vsel %vm812, %v808, %v567
        %v818 = vsel %vm812, %v809, %v569
        %v819 = vsel %vm812, %v810, %v571
        %v820 = vsel %vm812, %v811, %v573
        %vm821 = vcmask 244736
        %v822 = vsel %vm821, %v813, %v608
        %v823 = vsel %vm821, %v814, %v610
        %v824 = vsel %vm821, %v815, %v612
        %v825 = vsel %vm821, %v816, %v614
        %v826 = vsel %vm821, %v817, %v616
        %v827 = vsel %vm821, %v818, %v618
        %v828 = vsel %vm821, %v819, %v620
        %v829 = vsel %vm821, %v820, %v622
        %vm830 = vcmask 293888
        %v831 = vsel %vm830, %v822, %v657
        %v832 = vsel %vm830, %v823, %v659
        %v833 = vsel %vm830, %v824, %v661
        %v834 = vsel %vm830, %v825, %v663
        %v835 = vsel %vm830, %v826, %v665
        %v836 = vsel %vm830, %v827, %v667
        %v837 = vsel %vm830, %v828, %v669
        %v838 = vsel %vm830, %v829, %v671
        %vm839 = vcmask 343040
        %v840 = vsel %vm839, %v831, %v706
        %v841 = vsel %vm839, %v832, %v708
        %v842 = vsel %vm839, %v833, %v710
        %v843 = vsel %vm839, %v834, %v712
        %v844 = vsel %vm839, %v835, %v714
        %v845 = vsel %vm839, %v836, %v716
        %v846 = vsel %vm839, %v837, %v718
        %v847 = vsel %vm839, %v838, %v720
        %vm848 = vcmask 392192
        %v849 = vsel %vm848, %v840, %v730
        %v850 = vsel %vm848, %v841, %v732
        %v851 = vsel %vm848, %v842, %v734
        %v852 = vsel %vm848, %v843, %v736
        %v853 = vsel %vm848, %v844, %v738
        %v854 = vsel %vm848, %v845, %v740
        %v855 = vsel %vm848, %v846, %v742
        %v856 = vsel %vm848, %v847, %v744
        %vm857 = vcmask 441344
        %v858 = vsel %vm857, %v849, %v762
        %v859 = vsel %vm857, %v850, %v764
        %v860 = vsel %vm857, %v851, %v766
        %v861 = vsel %vm857, %v852, %v768
        %v862 = vsel %vm857, %v853, %v770
        %v863 = vsel %vm857, %v854, %v772
        %v864 = vsel %vm857, %v855, %v774
        %v865 = vsel %vm857, %v856, %v776
        %v874 = vcombine.high %v858, %v858
        %v876 = vunpack.c.l.s4 1966171168
        %v877 = vunpack.c.0.s8 %v876
        %v878 = vlaneseq
        %v879 = vshrl.u32 %v878, 7
        %v880 = vsub.s32 %v877, %v879
        %v881 = vrot.slane %v858, %v880
        %v883 = vunpack.c.l.s4 1966171168
        %v884 = vunpack.c.0.s8 %v883
        %v885 = vlaneseq
        %v886 = vshrl.u32 %v885, 7
        %v887 = vsub.s32 %v884, %v886
        %v888 = vrot.slane %v874, %v887
        %v889 = vcombine.high %v881, %v881
        %v890 = vcombine.high %v888, %v888
        %v892 = vunpack.c.l.s4 1966171168
        %v893 = vunpack.c.0.s8 %v892
        %v894 = vlaneseq
        %v895 = vshrl.u32 %v894, 7
        %v896 = vsub.s32 %v893, %v895
        %v897 = vrot.slane %v881, %v896
        %v899 = vunpack.c.l.s4 1966171168
        %v900 = vunpack.c.0.s8 %v899
        %v901 = vlaneseq
        %v902 = vshrl.u32 %v901, 7
        %v903 = vsub.s32 %v900, %v902
        %v904 = vrot.slane %v888, %v903
        %v906 = vunpack.c.l.s4 1966171168
        %v907 = vunpack.c.0.s8 %v906
        %v908 = vlaneseq
        %v909 = vshrl.u32 %v908, 7
        %v910 = vsub.s32 %v907, %v909
        %v911 = vrot.slane %v889, %v910
        %v913 = vunpack.c.l.s4 1966171168
        %v914 = vunpack.c.0.s8 %v913
        %v915 = vlaneseq
        %v916 = vshrl.u32 %v915, 7
        %v917 = vsub.s32 %v914, %v916
        %v918 = vrot.slane %v890, %v917
        %v919 = vcombine.high %v897, %v897
        %v920 = vcombine.high %v904, %v904
        %v921 = vcombine.high %v911, %v911
        %v922 = vcombine.high %v859, %v859
        %v924 = vunpack.c.l.s4 1966171168
        %v925 = vunpack.c.0.s8 %v924
        %v926 = vlaneseq
        %v927 = vshrl.u32 %v926, 7
        %v928 = vsub.s32 %v925, %v927
        %v929 = vrot.slane %v859, %v928
        %v931 = vunpack.c.l.s4 1966171168
        %v932 = vunpack.c.0.s8 %v931
        %v933 = vlaneseq
        %v934 = vshrl.u32 %v933, 7
        %v935 = vsub.s32 %v932, %v934
        %v936 = vrot.slane %v922, %v935
        %v937 = vcombine.high %v929, %v929
        %v938 = vcombine.high %v936, %v936
        %v940 = vunpack.c.l.s4 1966171168
        %v941 = vunpack.c.0.s8 %v940
        %v942 = vlaneseq
        %v943 = vshrl.u32 %v942, 7
        %v944 = vsub.s32 %v941, %v943
        %v945 = vrot.slane %v929, %v944
        %v947 = vunpack.c.l.s4 1966171168
        %v948 = vunpack.c.0.s8 %v947
        %v949 = vlaneseq
        %v950 = vshrl.u32 %v949, 7
        %v951 = vsub.s32 %v948, %v950
        %v952 = vrot.slane %v936, %v951
        %v954 = vunpack.c.l.s4 1966171168
        %v955 = vunpack.c.0.s8 %v954
        %v956 = vlaneseq
        %v957 = vshrl.u32 %v956, 7
        %v958 = vsub.s32 %v955, %v957
        %v959 = vrot.slane %v937, %v958
        %v961 = vunpack.c.l.s4 1966171168
        %v962 = vunpack.c.0.s8 %v961
        %v963 = vlaneseq
        %v964 = vshrl.u32 %v963, 7
        %v965 = vsub.s32 %v962, %v964
        %v966 = vrot.slane %v938, %v965
        %v967 = vcombine.high %v945, %v945
        %v968 = vcombine.high %v952, %v952
        %v969 = vcombine.high %v959, %v959
        %v970 = vcombine.high %v860, %v860
        %v972 = vunpack.c.l.s4 1966171168
        %v973 = vunpack.c.0.s8 %v972
        %v974 = vlaneseq
        %v975 = vshrl.u32 %v974, 7
        %v976 = vsub.s32 %v973, %v975
        %v977 = vrot.slane %v860, %v976
        %v979 = vunpack.c.l.s4 1966171168
        %v980 = vunpack.c.0.s8 %v979
        %v981 = vlaneseq
        %v982 = vshrl.u32 %v981, 7
        %v983 = vsub.s32 %v980, %v982
        %v984 = vrot.slane %v970, %v983
        %v985 = vcombine.high %v977, %v977
        %v986 = vcombine.high %v984, %v984
        %v988 = vunpack.c.l.s4 1966171168
        %v989 = vunpack.c.0.s8 %v988
        %v990 = vlaneseq
        %v991 = vshrl.u32 %v990, 7
        %v992 = vsub.s32 %v989, %v991
        %v993 = vrot.slane %v977, %v992
        %v995 = vunpack.c.l.s4 1966171168
        %v996 = vunpack.c.0.s8 %v995
        %v997 = vlaneseq
        %v998 = vshrl.u32 %v997, 7
        %v999 = vsub.s32 %v996, %v998
        %v1000 = vrot.slane %v984, %v999
        %v1002 = vunpack.c.l.s4 1966171168
        %v1003 = vunpack.c.0.s8 %v1002
        %v1004 = vlaneseq
        %v1005 = vshrl.u32 %v1004, 7
        %v1006 = vsub.s32 %v1003, %v1005
        %v1007 = vrot.slane %v985, %v1006
        %v1009 = vunpack.c.l.s4 1966171168
        %v1010 = vunpack.c.0.s8 %v1009
        %v1011 = vlaneseq
        %v1012 = vshrl.u32 %v1011, 7
        %v1013 = vsub.s32 %v1010, %v1012
        %v1014 = vrot.slane %v986, %v1013
        %v1015 = vcombine.high %v993, %v993
        %v1016 = vcombine.high %v1000, %v1000
        %v1017 = vcombine.high %v1007, %v1007
        %v1018 = vcombine.high %v861, %v861
        %v1020 = vunpack.c.l.s4 1966171168
        %v1021 = vunpack.c.0.s8 %v1020
        %v1022 = vlaneseq
        %v1023 = vshrl.u32 %v1022, 7
        %v1024 = vsub.s32 %v1021, %v1023
        %v1025 = vrot.slane %v861, %v1024
        %v1027 = vunpack.c.l.s4 1966171168
        %v1028 = vunpack.c.0.s8 %v1027
        %v1029 = vlaneseq
        %v1030 = vshrl.u32 %v1029, 7
        %v1031 = vsub.s32 %v1028, %v1030
        %v1032 = vrot.slane %v1018, %v1031
        %v1033 = vcombine.high %v1025, %v1025
        %v1034 = vcombine.high %v1032, %v1032
        %v1036 = vunpack.c.l.s4 1966171168
        %v1037 = vunpack.c.0.s8 %v1036
        %v1038 = vlaneseq
        %v1039 = vshrl.u32 %v1038, 7
        %v1040 = vsub.s32 %v1037, %v1039
        %v1041 = vrot.slane %v1025, %v1040
        %v1043 = vunpack.c.l.s4 1966171168
        %v1044 = vunpack.c.0.s8 %v1043
        %v1045 = vlaneseq
        %v1046 = vshrl.u32 %v1045, 7
        %v1047 = vsub.s32 %v1044, %v1046
        %v1048 = vrot.slane %v1032, %v1047
        %v1050 = vunpack.c.l.s4 1966171168
        %v1051 = vunpack.c.0.s8 %v1050
        %v1052 = vlaneseq
        %v1053 = vshrl.u32 %v1052, 7
        %v1054 = vsub.s32 %v1051, %v1053
        %v1055 = vrot.slane %v1033, %v1054
        %v1057 = vunpack.c.l.s4 1966171168
        %v1058 = vunpack.c.0.s8 %v1057
        %v1059 = vlaneseq
        %v1060 = vshrl.u32 %v1059, 7
        %v1061 = vsub.s32 %v1058, %v1060
        %v1062 = vrot.slane %v1034, %v1061
        %v1063 = vcombine.high %v1041, %v1041
        %v1064 = vcombine.high %v1048, %v1048
        %v1065 = vcombine.high %v1055, %v1055
        %v1066 = vcombine.high %v862, %v862
        %v1068 = vunpack.c.l.s4 1966171168
        %v1069 = vunpack.c.0.s8 %v1068
        %v1070 = vlaneseq
        %v1071 = vshrl.u32 %v1070, 7
        %v1072 = vsub.s32 %v1069, %v1071
        %v1073 = vrot.slane %v862, %v1072
        %v1075 = vunpack.c.l.s4 1966171168
        %v1076 = vunpack.c.0.s8 %v1075
        %v1077 = vlaneseq
        %v1078 = vshrl.u32 %v1077, 7
        %v1079 = vsub.s32 %v1076, %v1078
        %v1080 = vrot.slane %v1066, %v1079
        %v1081 = vcombine.high %v1073, %v1073
        %v1082 = vcombine.high %v1080, %v1080
        %v1084 = vunpack.c.l.s4 1966171168
        %v1085 = vunpack.c.0.s8 %v1084
        %v1086 = vlaneseq
        %v1087 = vshrl.u32 %v1086, 7
        %v1088 = vsub.s32 %v1085, %v1087
        %v1089 = vrot.slane %v1073, %v1088
        %v1091 = vunpack.c.l.s4 1966171168
        %v1092 = vunpack.c.0.s8 %v1091
        %v1093 = vlaneseq
        %v1094 = vshrl.u32 %v1093, 7
        %v1095 = vsub.s32 %v1092, %v1094
        %v1096 = vrot.slane %v1080, %v1095
        %v1098 = vunpack.c.l.s4 1966171168
        %v1099 = vunpack.c.0.s8 %v1098
        %v1100 = vlaneseq
        %v1101 = vshrl.u32 %v1100, 7
        %v1102 = vsub.s32 %v1099, %v1101
        %v1103 = vrot.slane %v1081, %v1102
        %v1105 = vunpack.c.l.s4 1966171168
        %v1106 = vunpack.c.0.s8 %v1105
        %v1107 = vlaneseq
        %v1108 = vshrl.u32 %v1107, 7
        %v1109 = vsub.s32 %v1106, %v1108
        %v1110 = vrot.slane %v1082, %v1109
        %v1111 = vcombine.high %v1089, %v1089
        %v1112 = vcombine.high %v1096, %v1096
        %v1113 = vcombine.high %v1103, %v1103
        %v1114 = vcombine.high %v863, %v863
        %v1116 = vunpack.c.l.s4 1966171168
        %v1117 = vunpack.c.0.s8 %v1116
        %v1118 = vlaneseq
        %v1119 = vshrl.u32 %v1118, 7
        %v1120 = vsub.s32 %v1117, %v1119
        %v1121 = vrot.slane %v863, %v1120
        %v1123 = vunpack.c.l.s4 1966171168
        %v1124 = vunpack.c.0.s8 %v1123
        %v1125 = vlaneseq
        %v1126 = vshrl.u32 %v1125, 7
        %v1127 = vsub.s32 %v1124, %v1126
        %v1128 = vrot.slane %v1114, %v1127
        %v1129 = vcombine.high %v1121, %v1121
        %v1130 = vcombine.high %v1128, %v1128
        %v1132 = vunpack.c.l.s4 1966171168
        %v1133 = vunpack.c.0.s8 %v1132
        %v1134 = vlaneseq
        %v1135 = vshrl.u32 %v1134, 7
        %v1136 = vsub.s32 %v1133, %v1135
        %v1137 = vrot.slane %v1121, %v1136
        %v1139 = vunpack.c.l.s4 1966171168
        %v1140 = vunpack.c.0.s8 %v1139
        %v1141 = vlaneseq
        %v1142 = vshrl.u32 %v1141, 7
        %v1143 = vsub.s32 %v1140, %v1142
        %v1144 = vrot.slane %v1128, %v1143
        %v1146 = vunpack.c.l.s4 1966171168
        %v1147 = vunpack.c.0.s8 %v1146
        %v1148 = vlaneseq
        %v1149 = vshrl.u32 %v1148, 7
        %v1150 = vsub.s32 %v1147, %v1149
        %v1151 = vrot.slane %v1129, %v1150
        %v1153 = vunpack.c.l.s4 1966171168
        %v1154 = vunpack.c.0.s8 %v1153
        %v1155 = vlaneseq
        %v1156 = vshrl.u32 %v1155, 7
        %v1157 = vsub.s32 %v1154, %v1156
        %v1158 = vrot.slane %v1130, %v1157
        %v1159 = vcombine.high %v1137, %v1137
        %v1160 = vcombine.high %v1144, %v1144
        %v1161 = vcombine.high %v1151, %v1151
        %v1162 = vcombine.high %v864, %v864
        %v1164 = vunpack.c.l.s4 1966171168
        %v1165 = vunpack.c.0.s8 %v1164
        %v1166 = vlaneseq
        %v1167 = vshrl.u32 %v1166, 7
        %v1168 = vsub.s32 %v1165, %v1167
        %v1169 = vrot.slane %v864, %v1168
        %v1171 = vunpack.c.l.s4 1966171168
        %v1172 = vunpack.c.0.s8 %v1171
        %v1173 = vlaneseq
        %v1174 = vshrl.u32 %v1173, 7
        %v1175 = vsub.s32 %v1172, %v1174
        %v1176 = vrot.slane %v1162, %v1175
        %v1177 = vcombine.high %v1169, %v1169
        %v1178 = vcombine.high %v1176, %v1176
        %v1180 = vunpack.c.l.s4 1966171168
        %v1181 = vunpack.c.0.s8 %v1180
        %v1182 = vlaneseq
        %v1183 = vshrl.u32 %v1182, 7
        %v1184 = vsub.s32 %v1181, %v1183
        %v1185 = vrot.slane %v1169, %v1184
        %v1187 = vunpack.c.l.s4 1966171168
        %v1188 = vunpack.c.0.s8 %v1187
        %v1189 = vlaneseq
        %v1190 = vshrl.u32 %v1189, 7
        %v1191 = vsub.s32 %v1188, %v1190
        %v1192 = vrot.slane %v1176, %v1191
        %v1194 = vunpack.c.l.s4 1966171168
        %v1195 = vunpack.c.0.s8 %v1194
        %v1196 = vlaneseq
        %v1197 = vshrl.u32 %v1196, 7
        %v1198 = vsub.s32 %v1195, %v1197
        %v1199 = vrot.slane %v1177, %v1198
        %v1201 = vunpack.c.l.s4 1966171168
        %v1202 = vunpack.c.0.s8 %v1201
        %v1203 = vlaneseq
        %v1204 = vshrl.u32 %v1203, 7
        %v1205 = vsub.s32 %v1202, %v1204
        %v1206 = vrot.slane %v1178, %v1205
        %v1207 = vcombine.high %v1185, %v1185
        %v1208 = vcombine.high %v1192, %v1192
        %v1209 = vcombine.high %v1199, %v1199
        %v1210 = vcombine.high %v865, %v865
        %v1212 = vunpack.c.l.s4 1966171168
        %v1213 = vunpack.c.0.s8 %v1212
        %v1214 = vlaneseq
        %v1215 = vshrl.u32 %v1214, 7
        %v1216 = vsub.s32 %v1213, %v1215
        %v1217 = vrot.slane %v865, %v1216
        %v1219 = vunpack.c.l.s4 1966171168
        %v1220 = vunpack.c.0.s8 %v1219
        %v1221 = vlaneseq
        %v1222 = vshrl.u32 %v1221, 7
        %v1223 = vsub.s32 %v1220, %v1222
        %v1224 = vrot.slane %v1210, %v1223
        %v1225 = vcombine.high %v1217, %v1217
        %v1226 = vcombine.high %v1224, %v1224
        %v1228 = vunpack.c.l.s4 1966171168
        %v1229 = vunpack.c.0.s8 %v1228
        %v1230 = vlaneseq
        %v1231 = vshrl.u32 %v1230, 7
        %v1232 = vsub.s32 %v1229, %v1231
        %v1233 = vrot.slane %v1217, %v1232
        %v1235 = vunpack.c.l.s4 1966171168
        %v1236 = vunpack.c.0.s8 %v1235
        %v1237 = vlaneseq
        %v1238 = vshrl.u32 %v1237, 7
        %v1239 = vsub.s32 %v1236, %v1238
        %v1240 = vrot.slane %v1224, %v1239
        %v1242 = vunpack.c.l.s4 1966171168
        %v1243 = vunpack.c.0.s8 %v1242
        %v1244 = vlaneseq
        %v1245 = vshrl.u32 %v1244, 7
        %v1246 = vsub.s32 %v1243, %v1245
        %v1247 = vrot.slane %v1225, %v1246
        %v1249 = vunpack.c.l.s4 1966171168
        %v1250 = vunpack.c.0.s8 %v1249
        %v1251 = vlaneseq
        %v1252 = vshrl.u32 %v1251, 7
        %v1253 = vsub.s32 %v1250, %v1252
        %v1254 = vrot.slane %v1226, %v1253
        %v1255 = vcombine.high %v1233, %v1233
        %v1256 = vcombine.high %v1240, %v1240
        %v1257 = vcombine.high %v1247, %v1247
        %v1258 = vld [vmem:[%s354] sm:$0xff]
        %v1259 = vld [vmem:[%s354 + $0x8] sm:$0xff]
        %v1260 = vld [vmem:[%s354 + $0x10] sm:$0xff]
        %v1261 = vld [vmem:[%s354 + $0x18] sm:$0xff]
        %v1262 = vld [vmem:[%s354 + $0x20] sm:$0xff]
        %v1263 = vld [vmem:[%s354 + $0x28] sm:$0xff]
        %v1264 = vld [vmem:[%s354 + $0x30] sm:$0xff]
        %v1265 = vld [vmem:[%s354 + $0x38] sm:$0xf]
        %v1266 = vld [vmem:[%s357] sm:$0x1]
        %v1268 = vlaneseq
        %v1269 = vshrl.u32 %v1268, 7
        %v1270 = vsub.s32 0, %v1269
        %v1271 = vrot.slane %v1266, %v1270
        %v1273 = vcombine.low %v897, %v911
        %v1274 = vcombine.low %v919, %v921
        %v1275 = vcombine.low %v904, %v918
        %v1276 = vcombine.low %v920, %v945
        %v1278 = vunpack.c.l.s4 1966171168
        %v1279 = vunpack.c.0.s8 %v1278
        %v1280 = vlaneseq
        %v1281 = vshrl.u32 %v1280, 7
        %v1282 = vsub.s32 %v1279, %v1281
        %v1283 = vrot.slane %v1273, %v1282
        %v1285 = vunpack.c.l.s4 1966171168
        %v1286 = vunpack.c.0.s8 %v1285
        %v1287 = vlaneseq
        %v1288 = vshrl.u32 %v1287, 7
        %v1289 = vsub.s32 %v1286, %v1288
        %v1290 = vrot.slane %v1274, %v1289
        %v1292 = vunpack.c.l.s4 1966171168
        %v1293 = vunpack.c.0.s8 %v1292
        %v1294 = vlaneseq
        %v1295 = vshrl.u32 %v1294, 7
        %v1296 = vsub.s32 %v1293, %v1295
        %v1297 = vrot.slane %v1275, %v1296
        %v1299 = vunpack.c.l.s4 1966171168
        %v1300 = vunpack.c.0.s8 %v1299
        %v1301 = vlaneseq
        %v1302 = vshrl.u32 %v1301, 7
        %v1303 = vsub.s32 %v1300, %v1302
        %v1304 = vrot.slane %v1276, %v1303
        %v1305 = vcombine.low %v1283, %v1290
        %v1306 = vcombine.low %v1297, %v1304
        %v1308 = vunpack.c.l.s4 1966171168
        %v1309 = vunpack.c.0.s8 %v1308
        %v1310 = vlaneseq
        %v1311 = vshrl.u32 %v1310, 7
        %v1312 = vsub.s32 %v1309, %v1311
        %v1313 = vrot.slane %v1305, %v1312
        %v1315 = vunpack.c.l.s4 1966171168
        %v1316 = vunpack.c.0.s8 %v1315
        %v1317 = vlaneseq
        %v1318 = vshrl.u32 %v1317, 7
        %v1319 = vsub.s32 %v1316, %v1318
        %v1320 = vrot.slane %v1306, %v1319
        %v1321 = vcombine.low %v1313, %v1320
        %v1322 = vcombine.low %v959, %v967
        %v1323 = vcombine.low %v969, %v952
        %v1324 = vcombine.low %v966, %v968
        %v1325 = vcombine.low %v993, %v1007
        %v1327 = vunpack.c.l.s4 1966171168
        %v1328 = vunpack.c.0.s8 %v1327
        %v1329 = vlaneseq
        %v1330 = vshrl.u32 %v1329, 7
        %v1331 = vsub.s32 %v1328, %v1330
        %v1332 = vrot.slane %v1322, %v1331
        %v1334 = vunpack.c.l.s4 1966171168
        %v1335 = vunpack.c.0.s8 %v1334
        %v1336 = vlaneseq
        %v1337 = vshrl.u32 %v1336, 7
        %v1338 = vsub.s32 %v1335, %v1337
        %v1339 = vrot.slane %v1323, %v1338
        %v1341 = vunpack.c.l.s4 1966171168
        %v1342 = vunpack.c.0.s8 %v1341
        %v1343 = vlaneseq
        %v1344 = vshrl.u32 %v1343, 7
        %v1345 = vsub.s32 %v1342, %v1344
        %v1346 = vrot.slane %v1324, %v1345
        %v1348 = vunpack.c.l.s4 1966171168
        %v1349 = vunpack.c.0.s8 %v1348
        %v1350 = vlaneseq
        %v1351 = vshrl.u32 %v1350, 7
        %v1352 = vsub.s32 %v1349, %v1351
        %v1353 = vrot.slane %v1325, %v1352
        %v1354 = vcombine.low %v1332, %v1339
        %v1355 = vcombine.low %v1346, %v1353
        %v1357 = vunpack.c.l.s4 1966171168
        %v1358 = vunpack.c.0.s8 %v1357
        %v1359 = vlaneseq
        %v1360 = vshrl.u32 %v1359, 7
        %v1361 = vsub.s32 %v1358, %v1360
        %v1362 = vrot.slane %v1354, %v1361
        %v1364 = vunpack.c.l.s4 1966171168
        %v1365 = vunpack.c.0.s8 %v1364
        %v1366 = vlaneseq
        %v1367 = vshrl.u32 %v1366, 7
        %v1368 = vsub.s32 %v1365, %v1367
        %v1369 = vrot.slane %v1355, %v1368
        %v1370 = vcombine.low %v1362, %v1369
        %v1371 = vcombine.low %v1015, %v1017
        %v1372 = vcombine.low %v1000, %v1014
        %v1373 = vcombine.low %v1016, %v1041
        %v1374 = vcombine.low %v1055, %v1063
        %v1376 = vunpack.c.l.s4 1966171168
        %v1377 = vunpack.c.0.s8 %v1376
        %v1378 = vlaneseq
        %v1379 = vshrl.u32 %v1378, 7
        %v1380 = vsub.s32 %v1377, %v1379
        %v1381 = vrot.slane %v1371, %v1380
        %v1383 = vunpack.c.l.s4 1966171168
        %v1384 = vunpack.c.0.s8 %v1383
        %v1385 = vlaneseq
        %v1386 = vshrl.u32 %v1385, 7
        %v1387 = vsub.s32 %v1384, %v1386
        %v1388 = vrot.slane %v1372, %v1387
        %v1390 = vunpack.c.l.s4 1966171168
        %v1391 = vunpack.c.0.s8 %v1390
        %v1392 = vlaneseq
        %v1393 = vshrl.u32 %v1392, 7
        %v1394 = vsub.s32 %v1391, %v1393
        %v1395 = vrot.slane %v1373, %v1394
        %v1397 = vunpack.c.l.s4 1966171168
        %v1398 = vunpack.c.0.s8 %v1397
        %v1399 = vlaneseq
        %v1400 = vshrl.u32 %v1399, 7
        %v1401 = vsub.s32 %v1398, %v1400
        %v1402 = vrot.slane %v1374, %v1401
        %v1403 = vcombine.low %v1381, %v1388
        %v1404 = vcombine.low %v1395, %v1402
        %v1406 = vunpack.c.l.s4 1966171168
        %v1407 = vunpack.c.0.s8 %v1406
        %v1408 = vlaneseq
        %v1409 = vshrl.u32 %v1408, 7
        %v1410 = vsub.s32 %v1407, %v1409
        %v1411 = vrot.slane %v1403, %v1410
        %v1413 = vunpack.c.l.s4 1966171168
        %v1414 = vunpack.c.0.s8 %v1413
        %v1415 = vlaneseq
        %v1416 = vshrl.u32 %v1415, 7
        %v1417 = vsub.s32 %v1414, %v1416
        %v1418 = vrot.slane %v1404, %v1417
        %v1419 = vcombine.low %v1411, %v1418
        %v1420 = vcombine.low %v1065, %v1048
        %v1421 = vcombine.low %v1062, %v1064
        %v1422 = vcombine.low %v1089, %v1103
        %v1423 = vcombine.low %v1111, %v1113
        %v1425 = vunpack.c.l.s4 1966171168
        %v1426 = vunpack.c.0.s8 %v1425
        %v1427 = vlaneseq
        %v1428 = vshrl.u32 %v1427, 7
        %v1429 = vsub.s32 %v1426, %v1428
        %v1430 = vrot.slane %v1420, %v1429
        %v1432 = vunpack.c.l.s4 1966171168
        %v1433 = vunpack.c.0.s8 %v1432
        %v1434 = vlaneseq
        %v1435 = vshrl.u32 %v1434, 7
        %v1436 = vsub.s32 %v1433, %v1435
        %v1437 = vrot.slane %v1421, %v1436
        %v1439 = vunpack.c.l.s4 1966171168
        %v1440 = vunpack.c.0.s8 %v1439
        %v1441 = vlaneseq
        %v1442 = vshrl.u32 %v1441, 7
        %v1443 = vsub.s32 %v1440, %v1442
        %v1444 = vrot.slane %v1422, %v1443
        %v1446 = vunpack.c.l.s4 1966171168
        %v1447 = vunpack.c.0.s8 %v1446
        %v1448 = vlaneseq
        %v1449 = vshrl.u32 %v1448, 7
        %v1450 = vsub.s32 %v1447, %v1449
        %v1451 = vrot.slane %v1423, %v1450
        %v1452 = vcombine.low %v1430, %v1437
        %v1453 = vcombine.low %v1444, %v1451
        %v1455 = vunpack.c.l.s4 1966171168
        %v1456 = vunpack.c.0.s8 %v1455
        %v1457 = vlaneseq
        %v1458 = vshrl.u32 %v1457, 7
        %v1459 = vsub.s32 %v1456, %v1458
        %v1460 = vrot.slane %v1452, %v1459
        %v1462 = vunpack.c.l.s4 1966171168
        %v1463 = vunpack.c.0.s8 %v1462
        %v1464 = vlaneseq
        %v1465 = vshrl.u32 %v1464, 7
        %v1466 = vsub.s32 %v1463, %v1465
        %v1467 = vrot.slane %v1453, %v1466
        %v1468 = vcombine.low %v1460, %v1467
        %v1469 = vcombine.low %v1096, %v1110
        %v1470 = vcombine.low %v1112, %v1137
        %v1471 = vcombine.low %v1151, %v1159
        %v1472 = vcombine.low %v1161, %v1144
        %v1474 = vunpack.c.l.s4 1966171168
        %v1475 = vunpack.c.0.s8 %v1474
        %v1476 = vlaneseq
        %v1477 = vshrl.u32 %v1476, 7
        %v1478 = vsub.s32 %v1475, %v1477
        %v1479 = vrot.slane %v1469, %v1478
        %v1481 = vunpack.c.l.s4 1966171168
        %v1482 = vunpack.c.0.s8 %v1481
        %v1483 = vlaneseq
        %v1484 = vshrl.u32 %v1483, 7
        %v1485 = vsub.s32 %v1482, %v1484
        %v1486 = vrot.slane %v1470, %v1485
        %v1488 = vunpack.c.l.s4 1966171168
        %v1489 = vunpack.c.0.s8 %v1488
        %v1490 = vlaneseq
        %v1491 = vshrl.u32 %v1490, 7
        %v1492 = vsub.s32 %v1489, %v1491
        %v1493 = vrot.slane %v1471, %v1492
        %v1495 = vunpack.c.l.s4 1966171168
        %v1496 = vunpack.c.0.s8 %v1495
        %v1497 = vlaneseq
        %v1498 = vshrl.u32 %v1497, 7
        %v1499 = vsub.s32 %v1496, %v1498
        %v1500 = vrot.slane %v1472, %v1499
        %v1501 = vcombine.low %v1479, %v1486
        %v1502 = vcombine.low %v1493, %v1500
        %v1504 = vunpack.c.l.s4 1966171168
        %v1505 = vunpack.c.0.s8 %v1504
        %v1506 = vlaneseq
        %v1507 = vshrl.u32 %v1506, 7
        %v1508 = vsub.s32 %v1505, %v1507
        %v1509 = vrot.slane %v1501, %v1508
        %v1511 = vunpack.c.l.s4 1966171168
        %v1512 = vunpack.c.0.s8 %v1511
        %v1513 = vlaneseq
        %v1514 = vshrl.u32 %v1513, 7
        %v1515 = vsub.s32 %v1512, %v1514
        %v1516 = vrot.slane %v1502, %v1515
        %v1517 = vcombine.low %v1509, %v1516
        %v1518 = vcombine.low %v1158, %v1160
        %v1519 = vcombine.low %v1185, %v1199
        %v1520 = vcombine.low %v1207, %v1209
        %v1521 = vcombine.low %v1192, %v1206
        %v1523 = vunpack.c.l.s4 1966171168
        %v1524 = vunpack.c.0.s8 %v1523
        %v1525 = vlaneseq
        %v1526 = vshrl.u32 %v1525, 7
        %v1527 = vsub.s32 %v1524, %v1526
        %v1528 = vrot.slane %v1518, %v1527
        %v1530 = vunpack.c.l.s4 1966171168
        %v1531 = vunpack.c.0.s8 %v1530
        %v1532 = vlaneseq
        %v1533 = vshrl.u32 %v1532, 7
        %v1534 = vsub.s32 %v1531, %v1533
        %v1535 = vrot.slane %v1519, %v1534
        %v1537 = vunpack.c.l.s4 1966171168
        %v1538 = vunpack.c.0.s8 %v1537
        %v1539 = vlaneseq
        %v1540 = vshrl.u32 %v1539, 7
        %v1541 = vsub.s32 %v1538, %v1540
        %v1542 = vrot.slane %v1520, %v1541
        %v1544 = vunpack.c.l.s4 1966171168
        %v1545 = vunpack.c.0.s8 %v1544
        %v1546 = vlaneseq
        %v1547 = vshrl.u32 %v1546, 7
        %v1548 = vsub.s32 %v1545, %v1547
        %v1549 = vrot.slane %v1521, %v1548
        %v1550 = vcombine.low %v1528, %v1535
        %v1551 = vcombine.low %v1542, %v1549
        %v1553 = vunpack.c.l.s4 1966171168
        %v1554 = vunpack.c.0.s8 %v1553
        %v1555 = vlaneseq
        %v1556 = vshrl.u32 %v1555, 7
        %v1557 = vsub.s32 %v1554, %v1556
        %v1558 = vrot.slane %v1550, %v1557
        %v1560 = vunpack.c.l.s4 1966171168
        %v1561 = vunpack.c.0.s8 %v1560
        %v1562 = vlaneseq
        %v1563 = vshrl.u32 %v1562, 7
        %v1564 = vsub.s32 %v1561, %v1563
        %v1565 = vrot.slane %v1551, %v1564
        %v1566 = vcombine.low %v1558, %v1565
        %v1567 = vcombine.low %v1208, %v1233
        %v1568 = vcombine.low %v1247, %v1255
        %v1569 = vcombine.low %v1257, %v1240
        %v1570 = vcombine.low %v1254, %v1256
        %v1572 = vunpack.c.l.s4 1966171168
        %v1573 = vunpack.c.0.s8 %v1572
        %v1574 = vlaneseq
        %v1575 = vshrl.u32 %v1574, 7
        %v1576 = vsub.s32 %v1573, %v1575
        %v1577 = vrot.slane %v1567, %v1576
        %v1579 = vunpack.c.l.s4 1966171168
        %v1580 = vunpack.c.0.s8 %v1579
        %v1581 = vlaneseq
        %v1582 = vshrl.u32 %v1581, 7
        %v1583 = vsub.s32 %v1580, %v1582
        %v1584 = vrot.slane %v1568, %v1583
        %v1586 = vunpack.c.l.s4 1966171168
        %v1587 = vunpack.c.0.s8 %v1586
        %v1588 = vlaneseq
        %v1589 = vshrl.u32 %v1588, 7
        %v1590 = vsub.s32 %v1587, %v1589
        %v1591 = vrot.slane %v1569, %v1590
        %v1593 = vunpack.c.l.s4 1966171168
        %v1594 = vunpack.c.0.s8 %v1593
        %v1595 = vlaneseq
        %v1596 = vshrl.u32 %v1595, 7
        %v1597 = vsub.s32 %v1594, %v1596
        %v1598 = vrot.slane %v1570, %v1597
        %v1599 = vcombine.low %v1577, %v1584
        %v1600 = vcombine.low %v1591, %v1598
        %v1602 = vunpack.c.l.s4 1966171168
        %v1603 = vunpack.c.0.s8 %v1602
        %v1604 = vlaneseq
        %v1605 = vshrl.u32 %v1604, 7
        %v1606 = vsub.s32 %v1603, %v1605
        %v1607 = vrot.slane %v1599, %v1606
        %v1609 = vunpack.c.l.s4 1966171168
        %v1610 = vunpack.c.0.s8 %v1609
        %v1611 = vlaneseq
        %v1612 = vshrl.u32 %v1611, 7
        %v1613 = vsub.s32 %v1610, %v1612
        %v1614 = vrot.slane %v1600, %v1613
        %v1615 = vcombine.low %v1607, %v1614
        %vm1616 = vcmask 490496
        %v1617 = vsel %vm1616, %v1321, 0
        %v1619 = vsel %vm1616, %v1370, 0
        %v1621 = vsel %vm1616, %v1419, 0
        %v1623 = vsel %vm1616, %v1468, 0
        %v1625 = vsel %vm1616, %v1517, 0
        %v1627 = vsel %vm1616, %v1566, 0
        %v1629 = vsel %vm1616, %v1615, 0
        %v1632 = vsel %vm533, %v1265, 0
        %1634 = vmatprep.subr.mxu0 0.0
        %1635 = vmatpush1.msra.mxu0 %v1258
        %1636 = vmatprep.subr.mxu0 0.0
        %1637 = vmatpush1.msra.mxu0 %v1259
        %1638 = vmatprep.subr.mxu0 0.0
        %1639 = vmatpush1.msra.mxu0 %v1260
        %1640 = vmatprep.subr.mxu0 0.0
        %1641 = vmatpush1.msra.mxu0 %v1261
        %1642 = vmatprep.subr.mxu0 0.0
        %1643 = vmatpush1.msra.mxu0 %v1262
        %1644 = vmatprep.subr.mxu0 0.0
        %1645 = vmatpush1.msra.mxu0 %v1263
        %1646 = vmatprep.subr.mxu0 0.0
        %1647 = vmatpush1.msra.mxu0 %v1264
        %1648 = vmatprep.subr.mxu0 0.0
        %1649 = vmatpush1.msra.mxu0 %v1632
        %1650 = vmatprep.subr.mxu0 0.0
        %1651 = vmatpush1.msra.mxu0 0.0
        %1652 = vmatprep.subr.mxu0 0.0
        %1653 = vmatpush1.msra.mxu0 0.0
        %1654 = vmatprep.subr.mxu0 0.0
        %1655 = vmatpush1.msra.mxu0 0.0
        %1656 = vmatprep.subr.mxu0 0.0
        %1657 = vmatpush1.msra.mxu0 0.0
        %1658 = vmatprep.subr.mxu0 0.0
        %1659 = vmatpush1.msra.mxu0 0.0
        %1660 = vmatprep.subr.mxu0 0.0
        %1661 = vmatpush1.msra.mxu0 0.0
        %1662 = vmatprep.subr.mxu0 0.0
        %1663 = vmatpush1.msra.mxu0 0.0
        %1664 = vmatprep.subr.mxu0 0.0
        %1665 = vmatpush1.msra.mxu0 0.0
        %1666 = vmatprep.subr.mxu0 0.0
        %1667 = vmatpush1.msra.mxu0 0.0
        %1668 = vmatprep.subr.mxu0 0.0
        %1669 = vmatpush1.msra.mxu0 0.0
        %1670 = vmatprep.subr.mxu0 0.0
        %1671 = vmatpush1.msra.mxu0 0.0
        %1672 = vmatprep.subr.mxu0 0.0
        %1673 = vmatpush1.msra.mxu0 0.0
        %1674 = vmatprep.subr.mxu0 0.0
        %1675 = vmatpush1.msra.mxu0 0.0
        %1676 = vmatprep.subr.mxu0 0.0
        %1677 = vmatpush1.msra.mxu0 0.0
        %1678 = vmatprep.subr.mxu0 0.0
        %1679 = vmatpush1.msra.mxu0 0.0
        %1680 = vmatprep.subr.mxu0 0.0
        %1681 = vmatpush1.msra.mxu0 0.0
        %1682 = vmatprep.subr.mxu0 0.0
        %1683 = vmatpush1.msra.mxu0 0.0
        %1684 = vmatprep.subr.mxu0 0.0
        %1685 = vmatpush1.msra.mxu0 0.0
        %1686 = vmatprep.subr.mxu0 0.0
        %1687 = vmatpush1.msra.mxu0 0.0
        %1688 = vmatprep.subr.mxu0 0.0
        %1689 = vmatpush1.msra.mxu0 0.0
        %1690 = vmatprep.subr.mxu0 0.0
        %1691 = vmatpush1.msra.mxu0 0.0
        %1692 = vmatprep.subr.mxu0 0.0
        %1693 = vmatpush1.msra.mxu0 0.0
        %1694 = vmatprep.subr.mxu0 0.0
        %1695 = vmatpush1.msra.mxu0 0.0
        %1696 = vmatprep.subr.mxu0 0.0
        %1697 = vmatpush1.msra.mxu0 0.0
        %1698 = vmatprep.mubr.f32.mxu0 0.0
        %1699 = vmatmul.mubr.f32.gmra.mrb[0].mxu0 %v1617
        %v1700 = vpop.f32.mrb[0].mxu0
        %v1701 = vadd.f32 %v1271, %v1700
        %v1702 = vpop.f32.mrb[0].mxu0
        %1703 = vmatprep.mubr.f32.mxu0 0.0
        %1704 = vmatmul.mubr.f32.gmra.mrb[0].mxu0 %v1619
        %v1705 = vpop.f32.mrb[0].mxu0
        %v1706 = vadd.f32 %v1271, %v1705
        %v1707 = vpop.f32.mrb[0].mxu0
        %1708 = vmatprep.mubr.f32.mxu0 0.0
        %1709 = vmatmul.mubr.f32.gmra.mrb[0].mxu0 %v1621
        %v1710 = vpop.f32.mrb[0].mxu0
        %v1711 = vadd.f32 %v1271, %v1710
        %v1712 = vpop.f32.mrb[0].mxu0
        %1713 = vmatprep.mubr.f32.mxu0 0.0
        %1714 = vmatmul.mubr.f32.gmra.mrb[0].mxu0 %v1623
        %v1715 = vpop.f32.mrb[0].mxu0
        %v1716 = vadd.f32 %v1271, %v1715
        %v1717 = vpop.f32.mrb[0].mxu0
        %1718 = vmatprep.mubr.f32.mxu0 0.0
        %1719 = vmatmul.mubr.f32.gmra.mrb[0].mxu0 %v1625
        %v1720 = vpop.f32.mrb[0].mxu0
        %v1721 = vadd.f32 %v1271, %v1720
        %v1722 = vpop.f32.mrb[0].mxu0
        %1723 = vmatprep.mubr.f32.mxu0 0.0
        %1724 = vmatmul.mubr.f32.gmra.mrb[0].mxu0 %v1627
        %v1725 = vpop.f32.mrb[0].mxu0
        %v1726 = vadd.f32 %v1271, %v1725
        %v1727 = vpop.f32.mrb[0].mxu0
        %1728 = vmatprep.mubr.f32.mxu0 0.0
        %1729 = vmatmul.mubr.f32.gmra.mrb[0].mxu0 %v1629
        %v1730 = vpop.f32.mrb[0].mxu0
        %v1731 = vadd.f32 %v1271, %v1730
        %v1732 = vpop.f32.mrb[0].mxu0
        %1733 = vdwg.mxu0
        %v1734 = vmax.f32 %v1701, 0.0
        %v1735 = vmax.f32 %v1706, 0.0
        %v1736 = vmax.f32 %v1711, 0.0
        %v1737 = vmax.f32 %v1716, 0.0
        %v1738 = vmax.f32 %v1721, 0.0
        %v1739 = vmax.f32 %v1726, 0.0
        %v1740 = vmax.f32 %v1731, 0.0
        %v1741 = vld [vmem:[%s362] sm:$0xff]
        %v1742 = vld [vmem:[%s362 + $0x8] sm:$0xf]
        %v1743 = vld [vmem:[%s370] sm:$0x1]
        %v1745 = vlaneseq
        %v1746 = vshrl.u32 %v1745, 7
        %v1747 = vsub.s32 0, %v1746
        %v1748 = vrot.slane %v1743, %v1747
        %v1751 = vsel %vm794, %v1734, 0
        %v1754 = vsel %vm794, %v1735, 0
        %v1757 = vsel %vm794, %v1736, 0
        %v1760 = vsel %vm794, %v1737, 0
        %v1763 = vsel %vm794, %v1738, 0
        %v1766 = vsel %vm794, %v1739, 0
        %v1769 = vsel %vm794, %v1740, 0
        %v1772 = vsel %vm533, %v1742, 0
        %1774 = vmatprep.subr.mxu0 0.0
        %1775 = vmatpush1.msra.mxu0 %v1741
        %1776 = vmatprep.subr.mxu0 0.0
        %1777 = vmatpush1.msra.mxu0 %v1772
        %1778 = vmatprep.subr.mxu0 0.0
        %1779 = vmatpush1.msra.mxu0 0.0
        %1780 = vmatprep.subr.mxu0 0.0
        %1781 = vmatpush1.msra.mxu0 0.0
        %1782 = vmatprep.subr.mxu0 0.0
        %1783 = vmatpush1.msra.mxu0 0.0
        %1784 = vmatprep.subr.mxu0 0.0
        %1785 = vmatpush1.msra.mxu0 0.0
        %1786 = vmatprep.subr.mxu0 0.0
        %1787 = vmatpush1.msra.mxu0 0.0
        %1788 = vmatprep.subr.mxu0 0.0
        %1789 = vmatpush1.msra.mxu0 0.0
        %1790 = vmatprep.subr.mxu0 0.0
        %1791 = vmatpush1.msra.mxu0 0.0
        %1792 = vmatprep.subr.mxu0 0.0
        %1793 = vmatpush1.msra.mxu0 0.0
        %1794 = vmatprep.subr.mxu0 0.0
        %1795 = vmatpush1.msra.mxu0 0.0
        %1796 = vmatprep.subr.mxu0 0.0
        %1797 = vmatpush1.msra.mxu0 0.0
        %1798 = vmatprep.subr.mxu0 0.0
        %1799 = vmatpush1.msra.mxu0 0.0
        %1800 = vmatprep.subr.mxu0 0.0
        %1801 = vmatpush1.msra.mxu0 0.0
        %1802 = vmatprep.subr.mxu0 0.0
        %1803 = vmatpush1.msra.mxu0 0.0
        %1804 = vmatprep.subr.mxu0 0.0
        %1805 = vmatpush1.msra.mxu0 0.0
        %1806 = vmatprep.subr.mxu0 0.0
        %1807 = vmatpush1.msra.mxu0 0.0
        %1808 = vmatprep.subr.mxu0 0.0
        %1809 = vmatpush1.msra.mxu0 0.0
        %1810 = vmatprep.subr.mxu0 0.0
        %1811 = vmatpush1.msra.mxu0 0.0
        %1812 = vmatprep.subr.mxu0 0.0
        %1813 = vmatpush1.msra.mxu0 0.0
        %1814 = vmatprep.subr.mxu0 0.0
        %1815 = vmatpush1.msra.mxu0 0.0
        %1816 = vmatprep.subr.mxu0 0.0
        %1817 = vmatpush1.msra.mxu0 0.0
        %1818 = vmatprep.subr.mxu0 0.0
        %1819 = vmatpush1.msra.mxu0 0.0
        %1820 = vmatprep.subr.mxu0 0.0
        %1821 = vmatpush1.msra.mxu0 0.0
        %1822 = vmatprep.subr.mxu0 0.0
        %1823 = vmatpush1.msra.mxu0 0.0
        %1824 = vmatprep.subr.mxu0 0.0
        %1825 = vmatpush1.msra.mxu0 0.0
        %1826 = vmatprep.subr.mxu0 0.0
        %1827 = vmatpush1.msra.mxu0 0.0
        %1828 = vmatprep.subr.mxu0 0.0
        %1829 = vmatpush1.msra.mxu0 0.0
        %1830 = vmatprep.subr.mxu0 0.0
        %1831 = vmatpush1.msra.mxu0 0.0
        %1832 = vmatprep.subr.mxu0 0.0
        %1833 = vmatpush1.msra.mxu0 0.0
        %1834 = vmatprep.subr.mxu0 0.0
        %1835 = vmatpush1.msra.mxu0 0.0
        %1836 = vmatprep.subr.mxu0 0.0
        %1837 = vmatpush1.msra.mxu0 0.0
        %1838 = vmatprep.mubr.f32.mxu0 0.0
        %1839 = vmatmul.mubr.f32.gmra.mrb[0].mxu0 %v1751
        %v1840 = vpop.f32.mrb[0].mxu0
        %v1841 = vadd.f32 %v1748, %v1840
        %v1842 = vpop.f32.mrb[0].mxu0
        %1843 = vmatprep.mubr.f32.mxu0 0.0
        %1844 = vmatmul.mubr.f32.gmra.mrb[0].mxu0 %v1754
        %v1845 = vpop.f32.mrb[0].mxu0
        %v1846 = vadd.f32 %v1748, %v1845
        %v1847 = vpop.f32.mrb[0].mxu0
        %1848 = vmatprep.mubr.f32.mxu0 0.0
        %1849 = vmatmul.mubr.f32.gmra.mrb[0].mxu0 %v1757
        %v1850 = vpop.f32.mrb[0].mxu0
        %v1851 = vadd.f32 %v1748, %v1850
        %v1852 = vpop.f32.mrb[0].mxu0
        %1853 = vmatprep.mubr.f32.mxu0 0.0
        %1854 = vmatmul.mubr.f32.gmra.mrb[0].mxu0 %v1760
        %v1855 = vpop.f32.mrb[0].mxu0
        %v1856 = vadd.f32 %v1748, %v1855
        %v1857 = vpop.f32.mrb[0].mxu0
        %1858 = vmatprep.mubr.f32.mxu0 0.0
        %1859 = vmatmul.mubr.f32.gmra.mrb[0].mxu0 %v1763
        %v1860 = vpop.f32.mrb[0].mxu0
        %v1861 = vadd.f32 %v1748, %v1860
        %v1862 = vpop.f32.mrb[0].mxu0
        %1863 = vmatprep.mubr.f32.mxu0 0.0
        %1864 = vmatmul.mubr.f32.gmra.mrb[0].mxu0 %v1766
        %v1865 = vpop.f32.mrb[0].mxu0
        %v1866 = vadd.f32 %v1748, %v1865
        %v1867 = vpop.f32.mrb[0].mxu0
        %1868 = vmatprep.mubr.f32.mxu0 0.0
        %1869 = vmatmul.mubr.f32.gmra.mrb[0].mxu0 %v1769
        %v1870 = vpop.f32.mrb[0].mxu0
        %v1871 = vadd.f32 %v1748, %v1870
        %v1872 = vpop.f32.mrb[0].mxu0
        %1873 = vdwg.mxu0
        %v1881 = vcombine.high %v1841, %v1841
        %v1883 = vunpack.c.l.s4 1966171168
        %v1884 = vunpack.c.0.s8 %v1883
        %v1885 = vlaneseq
        %v1886 = vshrl.u32 %v1885, 7
        %v1887 = vsub.s32 %v1884, %v1886
        %v1888 = vrot.slane %v1841, %v1887
        %v1890 = vunpack.c.l.s4 1966171168
        %v1891 = vunpack.c.0.s8 %v1890
        %v1892 = vlaneseq
        %v1893 = vshrl.u32 %v1892, 7
        %v1894 = vsub.s32 %v1891, %v1893
        %v1895 = vrot.slane %v1881, %v1894
        %v1896 = vcombine.high %v1888, %v1888
        %v1897 = vcombine.high %v1895, %v1895
        %v1899 = vunpack.c.l.s4 1966171168
        %v1900 = vunpack.c.0.s8 %v1899
        %v1901 = vlaneseq
        %v1902 = vshrl.u32 %v1901, 7
        %v1903 = vsub.s32 %v1900, %v1902
        %v1904 = vrot.slane %v1888, %v1903
        %v1906 = vunpack.c.l.s4 1966171168
        %v1907 = vunpack.c.0.s8 %v1906
        %v1908 = vlaneseq
        %v1909 = vshrl.u32 %v1908, 7
        %v1910 = vsub.s32 %v1907, %v1909
        %v1911 = vrot.slane %v1895, %v1910
        %v1913 = vunpack.c.l.s4 1966171168
        %v1914 = vunpack.c.0.s8 %v1913
        %v1915 = vlaneseq
        %v1916 = vshrl.u32 %v1915, 7
        %v1917 = vsub.s32 %v1914, %v1916
        %v1918 = vrot.slane %v1896, %v1917
        %v1920 = vunpack.c.l.s4 1966171168
        %v1921 = vunpack.c.0.s8 %v1920
        %v1922 = vlaneseq
        %v1923 = vshrl.u32 %v1922, 7
        %v1924 = vsub.s32 %v1921, %v1923
        %v1925 = vrot.slane %v1897, %v1924
        %v1926 = vcombine.high %v1904, %v1904
        %v1927 = vcombine.high %v1911, %v1911
        %v1928 = vcombine.high %v1918, %v1918
        %v1929 = vcombine.high %v1925, %v1925
        %v1930 = vcombine.high %v1846, %v1846
        %v1932 = vunpack.c.l.s4 1966171168
        %v1933 = vunpack.c.0.s8 %v1932
        %v1934 = vlaneseq
        %v1935 = vshrl.u32 %v1934, 7
        %v1936 = vsub.s32 %v1933, %v1935
        %v1937 = vrot.slane %v1846, %v1936
        %v1939 = vunpack.c.l.s4 1966171168
        %v1940 = vunpack.c.0.s8 %v1939
        %v1941 = vlaneseq
        %v1942 = vshrl.u32 %v1941, 7
        %v1943 = vsub.s32 %v1940, %v1942
        %v1944 = vrot.slane %v1930, %v1943
        %v1945 = vcombine.high %v1937, %v1937
        %v1946 = vcombine.high %v1944, %v1944
        %v1948 = vunpack.c.l.s4 1966171168
        %v1949 = vunpack.c.0.s8 %v1948
        %v1950 = vlaneseq
        %v1951 = vshrl.u32 %v1950, 7
        %v1952 = vsub.s32 %v1949, %v1951
        %v1953 = vrot.slane %v1937, %v1952
        %v1955 = vunpack.c.l.s4 1966171168
        %v1956 = vunpack.c.0.s8 %v1955
        %v1957 = vlaneseq
        %v1958 = vshrl.u32 %v1957, 7
        %v1959 = vsub.s32 %v1956, %v1958
        %v1960 = vrot.slane %v1944, %v1959
        %v1962 = vunpack.c.l.s4 1966171168
        %v1963 = vunpack.c.0.s8 %v1962
        %v1964 = vlaneseq
        %v1965 = vshrl.u32 %v1964, 7
        %v1966 = vsub.s32 %v1963, %v1965
        %v1967 = vrot.slane %v1945, %v1966
        %v1969 = vunpack.c.l.s4 1966171168
        %v1970 = vunpack.c.0.s8 %v1969
        %v1971 = vlaneseq
        %v1972 = vshrl.u32 %v1971, 7
        %v1973 = vsub.s32 %v1970, %v1972
        %v1974 = vrot.slane %v1946, %v1973
        %v1975 = vcombine.high %v1953, %v1953
        %v1976 = vcombine.high %v1960, %v1960
        %v1977 = vcombine.high %v1967, %v1967
        %v1978 = vcombine.high %v1974, %v1974
        %v1979 = vcombine.high %v1851, %v1851
        %v1981 = vunpack.c.l.s4 1966171168
        %v1982 = vunpack.c.0.s8 %v1981
        %v1983 = vlaneseq
        %v1984 = vshrl.u32 %v1983, 7
        %v1985 = vsub.s32 %v1982, %v1984
        %v1986 = vrot.slane %v1851, %v1985
        %v1988 = vunpack.c.l.s4 1966171168
        %v1989 = vunpack.c.0.s8 %v1988
        %v1990 = vlaneseq
        %v1991 = vshrl.u32 %v1990, 7
        %v1992 = vsub.s32 %v1989, %v1991
        %v1993 = vrot.slane %v1979, %v1992
        %v1994 = vcombine.high %v1986, %v1986
        %v1995 = vcombine.high %v1993, %v1993
        %v1997 = vunpack.c.l.s4 1966171168
        %v1998 = vunpack.c.0.s8 %v1997
        %v1999 = vlaneseq
        %v2000 = vshrl.u32 %v1999, 7
        %v2001 = vsub.s32 %v1998, %v2000
        %v2002 = vrot.slane %v1986, %v2001
        %v2004 = vunpack.c.l.s4 1966171168
        %v2005 = vunpack.c.0.s8 %v2004
        %v2006 = vlaneseq
        %v2007 = vshrl.u32 %v2006, 7
        %v2008 = vsub.s32 %v2005, %v2007
        %v2009 = vrot.slane %v1993, %v2008
        %v2011 = vunpack.c.l.s4 1966171168
        %v2012 = vunpack.c.0.s8 %v2011
        %v2013 = vlaneseq
        %v2014 = vshrl.u32 %v2013, 7
        %v2015 = vsub.s32 %v2012, %v2014
        %v2016 = vrot.slane %v1994, %v2015
        %v2018 = vunpack.c.l.s4 1966171168
        %v2019 = vunpack.c.0.s8 %v2018
        %v2020 = vlaneseq
        %v2021 = vshrl.u32 %v2020, 7
        %v2022 = vsub.s32 %v2019, %v2021
        %v2023 = vrot.slane %v1995, %v2022
        %v2024 = vcombine.high %v2002, %v2002
        %v2025 = vcombine.high %v2009, %v2009
        %v2026 = vcombine.high %v2016, %v2016
        %v2027 = vcombine.high %v2023, %v2023
        %v2028 = vcombine.high %v1856, %v1856
        %v2030 = vunpack.c.l.s4 1966171168
        %v2031 = vunpack.c.0.s8 %v2030
        %v2032 = vlaneseq
        %v2033 = vshrl.u32 %v2032, 7
        %v2034 = vsub.s32 %v2031, %v2033
        %v2035 = vrot.slane %v1856, %v2034
        %v2037 = vunpack.c.l.s4 1966171168
        %v2038 = vunpack.c.0.s8 %v2037
        %v2039 = vlaneseq
        %v2040 = vshrl.u32 %v2039, 7
        %v2041 = vsub.s32 %v2038, %v2040
        %v2042 = vrot.slane %v2028, %v2041
        %v2043 = vcombine.high %v2035, %v2035
        %v2044 = vcombine.high %v2042, %v2042
        %v2046 = vunpack.c.l.s4 1966171168
        %v2047 = vunpack.c.0.s8 %v2046
        %v2048 = vlaneseq
        %v2049 = vshrl.u32 %v2048, 7
        %v2050 = vsub.s32 %v2047, %v2049
        %v2051 = vrot.slane %v2035, %v2050
        %v2053 = vunpack.c.l.s4 1966171168
        %v2054 = vunpack.c.0.s8 %v2053
        %v2055 = vlaneseq
        %v2056 = vshrl.u32 %v2055, 7
        %v2057 = vsub.s32 %v2054, %v2056
        %v2058 = vrot.slane %v2042, %v2057
        %v2060 = vunpack.c.l.s4 1966171168
        %v2061 = vunpack.c.0.s8 %v2060
        %v2062 = vlaneseq
        %v2063 = vshrl.u32 %v2062, 7
        %v2064 = vsub.s32 %v2061, %v2063
        %v2065 = vrot.slane %v2043, %v2064
        %v2067 = vunpack.c.l.s4 1966171168
        %v2068 = vunpack.c.0.s8 %v2067
        %v2069 = vlaneseq
        %v2070 = vshrl.u32 %v2069, 7
        %v2071 = vsub.s32 %v2068, %v2070
        %v2072 = vrot.slane %v2044, %v2071
        %v2073 = vcombine.high %v2051, %v2051
        %v2074 = vcombine.high %v2058, %v2058
        %v2075 = vcombine.high %v2065, %v2065
        %v2076 = vcombine.high %v2072, %v2072
        %v2077 = vcombine.high %v1861, %v1861
        %v2079 = vunpack.c.l.s4 1966171168
        %v2080 = vunpack.c.0.s8 %v2079
        %v2081 = vlaneseq
        %v2082 = vshrl.u32 %v2081, 7
        %v2083 = vsub.s32 %v2080, %v2082
        %v2084 = vrot.slane %v1861, %v2083
        %v2086 = vunpack.c.l.s4 1966171168
        %v2087 = vunpack.c.0.s8 %v2086
        %v2088 = vlaneseq
        %v2089 = vshrl.u32 %v2088, 7
        %v2090 = vsub.s32 %v2087, %v2089
        %v2091 = vrot.slane %v2077, %v2090
        %v2092 = vcombine.high %v2084, %v2084
        %v2093 = vcombine.high %v2091, %v2091
        %v2095 = vunpack.c.l.s4 1966171168
        %v2096 = vunpack.c.0.s8 %v2095
        %v2097 = vlaneseq
        %v2098 = vshrl.u32 %v2097, 7
        %v2099 = vsub.s32 %v2096, %v2098
        %v2100 = vrot.slane %v2084, %v2099
        %v2102 = vunpack.c.l.s4 1966171168
        %v2103 = vunpack.c.0.s8 %v2102
        %v2104 = vlaneseq
        %v2105 = vshrl.u32 %v2104, 7
        %v2106 = vsub.s32 %v2103, %v2105
        %v2107 = vrot.slane %v2091, %v2106
        %v2109 = vunpack.c.l.s4 1966171168
        %v2110 = vunpack.c.0.s8 %v2109
        %v2111 = vlaneseq
        %v2112 = vshrl.u32 %v2111, 7
        %v2113 = vsub.s32 %v2110, %v2112
        %v2114 = vrot.slane %v2092, %v2113
        %v2116 = vunpack.c.l.s4 1966171168
        %v2117 = vunpack.c.0.s8 %v2116
        %v2118 = vlaneseq
        %v2119 = vshrl.u32 %v2118, 7
        %v2120 = vsub.s32 %v2117, %v2119
        %v2121 = vrot.slane %v2093, %v2120
        %v2122 = vcombine.high %v2100, %v2100
        %v2123 = vcombine.high %v2107, %v2107
        %v2124 = vcombine.high %v2114, %v2114
        %v2125 = vcombine.high %v2121, %v2121
        %v2126 = vcombine.high %v1866, %v1866
        %v2128 = vunpack.c.l.s4 1966171168
        %v2129 = vunpack.c.0.s8 %v2128
        %v2130 = vlaneseq
        %v2131 = vshrl.u32 %v2130, 7
        %v2132 = vsub.s32 %v2129, %v2131
        %v2133 = vrot.slane %v1866, %v2132
        %v2135 = vunpack.c.l.s4 1966171168
        %v2136 = vunpack.c.0.s8 %v2135
        %v2137 = vlaneseq
        %v2138 = vshrl.u32 %v2137, 7
        %v2139 = vsub.s32 %v2136, %v2138
        %v2140 = vrot.slane %v2126, %v2139
        %v2141 = vcombine.high %v2133, %v2133
        %v2142 = vcombine.high %v2140, %v2140
        %v2144 = vunpack.c.l.s4 1966171168
        %v2145 = vunpack.c.0.s8 %v2144
        %v2146 = vlaneseq
        %v2147 = vshrl.u32 %v2146, 7
        %v2148 = vsub.s32 %v2145, %v2147
        %v2149 = vrot.slane %v2133, %v2148
        %v2151 = vunpack.c.l.s4 1966171168
        %v2152 = vunpack.c.0.s8 %v2151
        %v2153 = vlaneseq
        %v2154 = vshrl.u32 %v2153, 7
        %v2155 = vsub.s32 %v2152, %v2154
        %v2156 = vrot.slane %v2140, %v2155
        %v2158 = vunpack.c.l.s4 1966171168
        %v2159 = vunpack.c.0.s8 %v2158
        %v2160 = vlaneseq
        %v2161 = vshrl.u32 %v2160, 7
        %v2162 = vsub.s32 %v2159, %v2161
        %v2163 = vrot.slane %v2141, %v2162
        %v2165 = vunpack.c.l.s4 1966171168
        %v2166 = vunpack.c.0.s8 %v2165
        %v2167 = vlaneseq
        %v2168 = vshrl.u32 %v2167, 7
        %v2169 = vsub.s32 %v2166, %v2168
        %v2170 = vrot.slane %v2142, %v2169
        %v2171 = vcombine.high %v2149, %v2149
        %v2172 = vcombine.high %v2156, %v2156
        %v2173 = vcombine.high %v2163, %v2163
        %v2174 = vcombine.high %v2170, %v2170
        %v2175 = vcombine.high %v1871, %v1871
        %v2177 = vunpack.c.l.s4 1966171168
        %v2178 = vunpack.c.0.s8 %v2177
        %v2179 = vlaneseq
        %v2180 = vshrl.u32 %v2179, 7
        %v2181 = vsub.s32 %v2178, %v2180
        %v2182 = vrot.slane %v1871, %v2181
        %v2184 = vunpack.c.l.s4 1966171168
        %v2185 = vunpack.c.0.s8 %v2184
        %v2186 = vlaneseq
        %v2187 = vshrl.u32 %v2186, 7
        %v2188 = vsub.s32 %v2185, %v2187
        %v2189 = vrot.slane %v2175, %v2188
        %v2190 = vcombine.high %v2182, %v2182
        %v2191 = vcombine.high %v2189, %v2189
        %v2193 = vunpack.c.l.s4 1966171168
        %v2194 = vunpack.c.0.s8 %v2193
        %v2195 = vlaneseq
        %v2196 = vshrl.u32 %v2195, 7
        %v2197 = vsub.s32 %v2194, %v2196
        %v2198 = vrot.slane %v2182, %v2197
        %v2200 = vunpack.c.l.s4 1966171168
        %v2201 = vunpack.c.0.s8 %v2200
        %v2202 = vlaneseq
        %v2203 = vshrl.u32 %v2202, 7
        %v2204 = vsub.s32 %v2201, %v2203
        %v2205 = vrot.slane %v2189, %v2204
        %v2207 = vunpack.c.l.s4 1966171168
        %v2208 = vunpack.c.0.s8 %v2207
        %v2209 = vlaneseq
        %v2210 = vshrl.u32 %v2209, 7
        %v2211 = vsub.s32 %v2208, %v2210
        %v2212 = vrot.slane %v2190, %v2211
        %v2214 = vunpack.c.l.s4 1966171168
        %v2215 = vunpack.c.0.s8 %v2214
        %v2216 = vlaneseq
        %v2217 = vshrl.u32 %v2216, 7
        %v2218 = vsub.s32 %v2215, %v2217
        %v2219 = vrot.slane %v2191, %v2218
        %v2220 = vcombine.high %v2198, %v2198
        %v2221 = vcombine.high %v2205, %v2205
        %v2222 = vcombine.high %v2212, %v2212
        %v2223 = vcombine.high %v2219, %v2219
        %v2280 = vld [vmem:[%s367] sm:$0xff]
        %v2281 = vld [vmem:[%s367 + $0x8] sm:$0xf]
        %v2283 = vsel %vm794, 0.0, 0
        %v2286 = vsel %vm533, %v2281, 0
        %2288 = vmatprep.subr.mxu0 0.0
        %2289 = vmatpush1.msra.mxu0 %v2280
        %2290 = vmatprep.subr.mxu0 0.0
        %2291 = vmatpush1.msra.mxu0 %v2286
        %2292 = vmatprep.subr.mxu0 0.0
        %2293 = vmatpush1.msra.mxu0 0.0
        %2294 = vmatprep.subr.mxu0 0.0
        %2295 = vmatpush1.msra.mxu0 0.0
        %2296 = vmatprep.subr.mxu0 0.0
        %2297 = vmatpush1.msra.mxu0 0.0
        %2298 = vmatprep.subr.mxu0 0.0
        %2299 = vmatpush1.msra.mxu0 0.0
        %2300 = vmatprep.subr.mxu0 0.0
        %2301 = vmatpush1.msra.mxu0 0.0
        %2302 = vmatprep.subr.mxu0 0.0
        %2303 = vmatpush1.msra.mxu0 0.0
        %2304 = vmatprep.subr.mxu0 0.0
        %2305 = vmatpush1.msra.mxu0 0.0
        %2306 = vmatprep.subr.mxu0 0.0
        %2307 = vmatpush1.msra.mxu0 0.0
        %2308 = vmatprep.subr.mxu0 0.0
        %2309 = vmatpush1.msra.mxu0 0.0
        %2310 = vmatprep.subr.mxu0 0.0
        %2311 = vmatpush1.msra.mxu0 0.0
        %2312 = vmatprep.subr.mxu0 0.0
        %2313 = vmatpush1.msra.mxu0 0.0
        %2314 = vmatprep.subr.mxu0 0.0
        %2315 = vmatpush1.msra.mxu0 0.0
        %2316 = vmatprep.subr.mxu0 0.0
        %2317 = vmatpush1.msra.mxu0 0.0
        %2318 = vmatprep.subr.mxu0 0.0
        %2319 = vmatpush1.msra.mxu0 0.0
        %2320 = vmatprep.subr.mxu0 0.0
        %2321 = vmatpush1.msra.mxu0 0.0
        %2322 = vmatprep.subr.mxu0 0.0
        %2323 = vmatpush1.msra.mxu0 0.0
        %2324 = vmatprep.subr.mxu0 0.0
        %2325 = vmatpush1.msra.mxu0 0.0
        %2326 = vmatprep.subr.mxu0 0.0
        %2327 = vmatpush1.msra.mxu0 0.0
        %2328 = vmatprep.subr.mxu0 0.0
        %2329 = vmatpush1.msra.mxu0 0.0
        %2330 = vmatprep.subr.mxu0 0.0
        %2331 = vmatpush1.msra.mxu0 0.0
        %2332 = vmatprep.subr.mxu0 0.0
        %2333 = vmatpush1.msra.mxu0 0.0
        %2334 = vmatprep.subr.mxu0 0.0
        %2335 = vmatpush1.msra.mxu0 0.0
        %2336 = vmatprep.subr.mxu0 0.0
        %2337 = vmatpush1.msra.mxu0 0.0
        %2338 = vmatprep.subr.mxu0 0.0
        %2339 = vmatpush1.msra.mxu0 0.0
        %2340 = vmatprep.subr.mxu0 0.0
        %2341 = vmatpush1.msra.mxu0 0.0
        %2342 = vmatprep.subr.mxu0 0.0
        %2343 = vmatpush1.msra.mxu0 0.0
        %2344 = vmatprep.subr.mxu0 0.0
        %2345 = vmatpush1.msra.mxu0 0.0
        %2346 = vmatprep.subr.mxu0 0.0
        %2347 = vmatpush1.msra.mxu0 0.0
        %2348 = vmatprep.subr.mxu0 0.0
        %2349 = vmatpush1.msra.mxu0 0.0
        %2350 = vmatprep.subr.mxu0 0.0
        %2351 = vmatpush1.msra.mxu0 0.0
        %2352 = vmatprep.mubr.f32.mxu0 0.0
        %2353 = vmatmul.mubr.f32.gmra.mrb[0].mxu0 %v2283
        %v2354 = vpop.f32.mrb[0].mxu0
        %v2355 = vadd.f32 0.0, %v2354
        %v2356 = vpop.f32.mrb[0].mxu0
        %2357 = vdwg.mxu0
        %v2359 = vcombine.high %v2355, %v2355
        %v2361 = vunpack.c.l.s4 1966171168
        %v2362 = vunpack.c.0.s8 %v2361
        %v2363 = vlaneseq
        %v2364 = vshrl.u32 %v2363, 7
        %v2365 = vsub.s32 %v2362, %v2364
        %v2366 = vrot.slane %v2355, %v2365
        %v2368 = vunpack.c.l.s4 1966171168
        %v2369 = vunpack.c.0.s8 %v2368
        %v2370 = vlaneseq
        %v2371 = vshrl.u32 %v2370, 7
        %v2372 = vsub.s32 %v2369, %v2371
        %v2373 = vrot.slane %v2359, %v2372
        %v2374 = vcombine.high %v2366, %v2366
        %v2375 = vcombine.high %v2373, %v2373
        %v2377 = vunpack.c.l.s4 1966171168
        %v2378 = vunpack.c.0.s8 %v2377
        %v2379 = vlaneseq
        %v2380 = vshrl.u32 %v2379, 7
        %v2381 = vsub.s32 %v2378, %v2380
        %v2382 = vrot.slane %v2366, %v2381
        %v2384 = vunpack.c.l.s4 1966171168
        %v2385 = vunpack.c.0.s8 %v2384
        %v2386 = vlaneseq
        %v2387 = vshrl.u32 %v2386, 7
        %v2388 = vsub.s32 %v2385, %v2387
        %v2389 = vrot.slane %v2373, %v2388
        %v2391 = vunpack.c.l.s4 1966171168
        %v2392 = vunpack.c.0.s8 %v2391
        %v2393 = vlaneseq
        %v2394 = vshrl.u32 %v2393, 7
        %v2395 = vsub.s32 %v2392, %v2394
        %v2396 = vrot.slane %v2374, %v2395
        %v2398 = vunpack.c.l.s4 1966171168
        %v2399 = vunpack.c.0.s8 %v2398
        %v2400 = vlaneseq
        %v2401 = vshrl.u32 %v2400, 7
        %v2402 = vsub.s32 %v2399, %v2401
        %v2403 = vrot.slane %v2375, %v2402
        %v2404 = vcombine.high %v2382, %v2382
        %v2405 = vcombine.high %v2389, %v2389
        %v2406 = vcombine.high %v2396, %v2396
        %v2407 = vcombine.high %v2403, %v2403
        %v2416 = vadd.f32 %v1904, %v2382
        %v2417 = vadd.f32 %v1929, %v2396
        %v2418 = vadd.f32 %v1976, %v2404
        %v2419 = vadd.f32 %v2023, %v2406
        %v2420 = vadd.f32 %v2058, %v2389
        %v2421 = vadd.f32 %v2124, %v2403
        %v2422 = vadd.f32 %v2171, %v2405
        %v2423 = vadd.f32 %v2212, %v2407
        %v2424 = vxor.u32 %v2416, 2147483648
        %v2425 = vxor.u32 %v2417, 2147483648
        %v2426 = vxor.u32 %v2418, 2147483648
        %v2427 = vxor.u32 %v2419, 2147483648
        %v2428 = vxor.u32 %v2420, 2147483648
        %v2429 = vxor.u32 %v2421, 2147483648
        %v2430 = vxor.u32 %v2422, 2147483648
        %v2431 = vxor.u32 %v2423, 2147483648
        %v2432 = vmul.f32 %v2424, 1.442695
        %v2433 = vpow.pop %v2432
        %v2434 = vmul.f32 %v2425, 1.442695
        %v2435 = vpow.pop %v2434
        %v2436 = vmul.f32 %v2426, 1.442695
        %v2437 = vpow.pop %v2436
        %v2438 = vmul.f32 %v2427, 1.442695
        %v2439 = vpow.pop %v2438
        %v2440 = vmul.f32 %v2428, 1.442695
        %v2441 = vpow.pop %v2440
        %v2442 = vmul.f32 %v2429, 1.442695
        %v2443 = vpow.pop %v2442
        %v2444 = vmul.f32 %v2430, 1.442695
        %v2445 = vpow.pop %v2444
        %v2446 = vmul.f32 %v2431, 1.442695
        %v2447 = vpow.pop %v2446
        %v2448 = vadd.f32 %v2433, 1.0
        %v2449 = vadd.f32 %v2435, 1.0
        %v2450 = vadd.f32 %v2437, 1.0
        %v2451 = vadd.f32 %v2439, 1.0
        %v2452 = vadd.f32 %v2441, 1.0
        %v2453 = vadd.f32 %v2443, 1.0
        %v2454 = vadd.f32 %v2445, 1.0
        %v2455 = vadd.f32 %v2447, 1.0
        %v2456 = vrcp.pop %v2448
        %v2457 = vmul.f32 1.0, %v2456
        %v2458 = vrcp.pop %v2449
        %v2459 = vmul.f32 1.0, %v2458
        %v2460 = vrcp.pop %v2450
        %v2461 = vmul.f32 1.0, %v2460
        %v2462 = vrcp.pop %v2451
        %v2463 = vmul.f32 1.0, %v2462
        %v2464 = vrcp.pop %v2452
        %v2465 = vmul.f32 1.0, %v2464
        %v2466 = vrcp.pop %v2453
        %v2467 = vmul.f32 1.0, %v2466
        %v2468 = vrcp.pop %v2454
        %v2469 = vmul.f32 1.0, %v2468
        %v2470 = vrcp.pop %v2455
        %v2471 = vmul.f32 1.0, %v2470
        %v2472 = vtanh.pop %v2416
        %v2473 = vtanh.pop %v2417
        %v2474 = vtanh.pop %v2418
        %v2475 = vtanh.pop %v2419
        %v2476 = vtanh.pop %v2420
        %v2477 = vtanh.pop %v2421
        %v2478 = vtanh.pop %v2422
        %v2479 = vtanh.pop %v2423
        %v2480 = vmul.f32 %v2457, 0.0
        %v2481 = vmul.f32 %v2459, 0.0
        %v2482 = vmul.f32 %v2461, 0.0
        %v2483 = vmul.f32 %v2463, 0.0
        %v2484 = vmul.f32 %v2465, 0.0
        %v2485 = vmul.f32 %v2467, 0.0
        %v2486 = vmul.f32 %v2469, 0.0
        %v2487 = vmul.f32 %v2471, 0.0
        %2496 = vrot.lane.b32.xlu0 %v2472, 92
        %v2497 = vpop.permute.xlu0 %2496
        %2498 = vrot.lane.b32.xlu0 %v2473, 92
        %v2499 = vpop.permute.xlu0 %2498
        %2500 = vrot.lane.b32.xlu0 %v2474, 92
        %v2501 = vpop.permute.xlu0 %2500
        %2502 = vrot.lane.b32.xlu0 %v2475, 92
        %v2503 = vpop.permute.xlu0 %2502
        %2504 = vrot.lane.b32.xlu0 %v2476, 92
        %v2505 = vpop.permute.xlu0 %2504
        %2506 = vrot.lane.b32.xlu0 %v2477, 92
        %v2507 = vpop.permute.xlu0 %2506
        %2508 = vrot.lane.b32.xlu0 %v2478, 92
        %v2509 = vpop.permute.xlu0 %2508
        %2510 = vrot.lane.b32.xlu0 %v2479, 92
        %v2511 = vpop.permute.xlu0 %2510
        %v2520 = vmul.f32 %v2457, %v2497
        %v2521 = vmul.f32 %v2459, %v2499
        %v2522 = vmul.f32 %v2461, %v2501
        %v2523 = vmul.f32 %v2463, %v2503
        %v2524 = vmul.f32 %v2465, %v2505
        %v2525 = vmul.f32 %v2467, %v2507
        %v2526 = vmul.f32 %v2469, %v2509
        %v2527 = vmul.f32 %v2471, %v2511
        %2536 = vrot.lane.b32.xlu0 %v2520, 12
        %v2537 = vpop.permute.xlu0 %2536
        %2538 = vrot.lane.b32.xlu0 %v2521, 12
        %v2539 = vpop.permute.xlu0 %2538
        %2540 = vrot.lane.b32.xlu0 %v2522, 12
        %v2541 = vpop.permute.xlu0 %2540
        %2542 = vrot.lane.b32.xlu0 %v2523, 12
        %v2543 = vpop.permute.xlu0 %2542
        %2544 = vrot.lane.b32.xlu0 %v2524, 12
        %v2545 = vpop.permute.xlu0 %2544
        %2546 = vrot.lane.b32.xlu0 %v2525, 12
        %v2547 = vpop.permute.xlu0 %2546
        %2548 = vrot.lane.b32.xlu0 %v2526, 12
        %v2549 = vpop.permute.xlu0 %2548
        %2550 = vrot.lane.b32.xlu0 %v2527, 12
        %v2551 = vpop.permute.xlu0 %2550
        %v2560 = vadd.f32 %v2480, %v2537
        %v2561 = vadd.f32 %v2481, %v2539
        %v2562 = vadd.f32 %v2482, %v2541
        %v2563 = vadd.f32 %v2483, %v2543
        %v2564 = vadd.f32 %v2484, %v2545
        %v2565 = vadd.f32 %v2485, %v2547
        %v2566 = vadd.f32 %v2486, %v2549
        %v2567 = vadd.f32 %v2487, %v2551
        %v2568 = vtanh.pop %v2560
        %v2569 = vtanh.pop %v2561
        %v2570 = vtanh.pop %v2562
        %v2571 = vtanh.pop %v2563
        %v2572 = vtanh.pop %v2564
        %v2573 = vtanh.pop %v2565
        %v2574 = vtanh.pop %v2566
        %v2575 = vtanh.pop %v2567
        %2584 = vrot.lane.b32.xlu0 %v2568, 12
        %v2585 = vpop.permute.xlu0 %2584
        %2586 = vrot.lane.b32.xlu0 %v2569, 12
        %v2587 = vpop.permute.xlu0 %2586
        %2588 = vrot.lane.b32.xlu0 %v2570, 12
        %v2589 = vpop.permute.xlu0 %2588
        %2590 = vrot.lane.b32.xlu0 %v2571, 12
        %v2591 = vpop.permute.xlu0 %2590
        %2592 = vrot.lane.b32.xlu0 %v2572, 12
        %v2593 = vpop.permute.xlu0 %2592
        %2594 = vrot.lane.b32.xlu0 %v2573, 12
        %v2595 = vpop.permute.xlu0 %2594
        %2596 = vrot.lane.b32.xlu0 %v2574, 12
        %v2597 = vpop.permute.xlu0 %2596
        %2598 = vrot.lane.b32.xlu0 %v2575, 12
        %v2599 = vpop.permute.xlu0 %2598
        %v2608 = vmul.f32 %v2457, %v2585
        %v2609 = vmul.f32 %v2459, %v2587
        %v2610 = vmul.f32 %v2461, %v2589
        %v2611 = vmul.f32 %v2463, %v2591
        %v2612 = vmul.f32 %v2465, %v2593
        %v2613 = vmul.f32 %v2467, %v2595
        %v2614 = vmul.f32 %v2469, %v2597
        %v2615 = vmul.f32 %v2471, %v2599
        %v2624 = vcombine.low %v2608, %v2609
        %v2625 = vcombine.low %v2610, %v2611
        %v2626 = vcombine.low %v2612, %v2613
        %v2627 = vcombine.low %v2614, %v2615
        %v2629 = vunpack.c.l.s4 1966171168
        %v2630 = vunpack.c.0.s8 %v2629
        %v2631 = vlaneseq
        %v2632 = vshrl.u32 %v2631, 7
        %v2633 = vsub.s32 %v2630, %v2632
        %v2634 = vrot.slane %v2624, %v2633
        %v2636 = vunpack.c.l.s4 1966171168
        %v2637 = vunpack.c.0.s8 %v2636
        %v2638 = vlaneseq
        %v2639 = vshrl.u32 %v2638, 7
        %v2640 = vsub.s32 %v2637, %v2639
        %v2641 = vrot.slane %v2625, %v2640
        %v2643 = vunpack.c.l.s4 1966171168
        %v2644 = vunpack.c.0.s8 %v2643
        %v2645 = vlaneseq
        %v2646 = vshrl.u32 %v2645, 7
        %v2647 = vsub.s32 %v2644, %v2646
        %v2648 = vrot.slane %v2626, %v2647
        %v2650 = vunpack.c.l.s4 1966171168
        %v2651 = vunpack.c.0.s8 %v2650
        %v2652 = vlaneseq
        %v2653 = vshrl.u32 %v2652, 7
        %v2654 = vsub.s32 %v2651, %v2653
        %v2655 = vrot.slane %v2627, %v2654
        %v2656 = vcombine.low %v2634, %v2641
        %v2657 = vcombine.low %v2648, %v2655
        %v2659 = vunpack.c.l.s4 1966171168
        %v2660 = vunpack.c.0.s8 %v2659
        %v2661 = vlaneseq
        %v2662 = vshrl.u32 %v2661, 7
        %v2663 = vsub.s32 %v2660, %v2662
        %v2664 = vrot.slane %v2656, %v2663
        %v2666 = vunpack.c.l.s4 1966171168
        %v2667 = vunpack.c.0.s8 %v2666
        %v2668 = vlaneseq
        %v2669 = vshrl.u32 %v2668, 7
        %v2670 = vsub.s32 %v2667, %v2669
        %v2671 = vrot.slane %v2657, %v2670
        %v2672 = vcombine.low %v2664, %v2671
        %2673 = vrot.lane.b32.xlu0 %v2672, 104
        %v2674 = vpop.permute.xlu0 %2673
        %v2675 = vsel %vm794, %v2674, 0
        %2677 = vmatprep.subr.mxu0 0.0
        %2678 = vmatpush1.msra.mxu0 %v2280
        %2679 = vmatprep.subr.mxu0 0.0
        %2680 = vmatpush1.msra.mxu0 %v2286
        %2681 = vmatprep.subr.mxu0 0.0
        %2682 = vmatpush1.msra.mxu0 0.0
        %2683 = vmatprep.subr.mxu0 0.0
        %2684 = vmatpush1.msra.mxu0 0.0
        %2685 = vmatprep.subr.mxu0 0.0
        %2686 = vmatpush1.msra.mxu0 0.0
        %2687 = vmatprep.subr.mxu0 0.0
        %2688 = vmatpush1.msra.mxu0 0.0
        %2689 = vmatprep.subr.mxu0 0.0
        %2690 = vmatpush1.msra.mxu0 0.0
        %2691 = vmatprep.subr.mxu0 0.0
        %2692 = vmatpush1.msra.mxu0 0.0
        %2693 = vmatprep.subr.mxu0 0.0
        %2694 = vmatpush1.msra.mxu0 0.0
        %2695 = vmatprep.subr.mxu0 0.0
        %2696 = vmatpush1.msra.mxu0 0.0
        %2697 = vmatprep.subr.mxu0 0.0
        %2698 = vmatpush1.msra.mxu0 0.0
        %2699 = vmatprep.subr.mxu0 0.0
        %2700 = vmatpush1.msra.mxu0 0.0
        %2701 = vmatprep.subr.mxu0 0.0
        %2702 = vmatpush1.msra.mxu0 0.0
        %2703 = vmatprep.subr.mxu0 0.0
        %2704 = vmatpush1.msra.mxu0 0.0
        %2705 = vmatprep.subr.mxu0 0.0
        %2706 = vmatpush1.msra.mxu0 0.0
        %2707 = vmatprep.subr.mxu0 0.0
        %2708 = vmatpush1.msra.mxu0 0.0
        %2709 = vmatprep.subr.mxu0 0.0
        %2710 = vmatpush1.msra.mxu0 0.0
        %2711 = vmatprep.subr.mxu0 0.0
        %2712 = vmatpush1.msra.mxu0 0.0
        %2713 = vmatprep.subr.mxu0 0.0
        %2714 = vmatpush1.msra.mxu0 0.0
        %2715 = vmatprep.subr.mxu0 0.0
        %2716 = vmatpush1.msra.mxu0 0.0
        %2717 = vmatprep.subr.mxu0 0.0
        %2718 = vmatpush1.msra.mxu0 0.0
        %2719 = vmatprep.subr.mxu0 0.0
        %2720 = vmatpush1.msra.mxu0 0.0
        %2721 = vmatprep.subr.mxu0 0.0
        %2722 = vmatpush1.msra.mxu0 0.0
        %2723 = vmatprep.subr.mxu0 0.0
        %2724 = vmatpush1.msra.mxu0 0.0
        %2725 = vmatprep.subr.mxu0 0.0
        %2726 = vmatpush1.msra.mxu0 0.0
        %2727 = vmatprep.subr.mxu0 0.0
        %2728 = vmatpush1.msra.mxu0 0.0
        %2729 = vmatprep.subr.mxu0 0.0
        %2730 = vmatpush1.msra.mxu0 0.0
        %2731 = vmatprep.subr.mxu0 0.0
        %2732 = vmatpush1.msra.mxu0 0.0
        %2733 = vmatprep.subr.mxu0 0.0
        %2734 = vmatpush1.msra.mxu0 0.0
        %2735 = vmatprep.subr.mxu0 0.0
        %2736 = vmatpush1.msra.mxu0 0.0
        %2737 = vmatprep.subr.mxu0 0.0
        %2738 = vmatpush1.msra.mxu0 0.0
        %2739 = vmatprep.subr.mxu0 0.0
        %2740 = vmatpush1.msra.mxu0 0.0
        %2741 = vmatprep.mubr.f32.mxu0 0.0
        %2742 = vmatmul.mubr.f32.gmra.mrb[0].mxu0 %v2675
        %v2743 = vpop.f32.mrb[0].mxu0
        %v2744 = vadd.f32 0.0, %v2743
        %v2745 = vpop.f32.mrb[0].mxu0
        %2746 = vdwg.mxu0
        %v2748 = vcombine.high %v2744, %v2744
        %v2750 = vunpack.c.l.s4 1966171168
        %v2751 = vunpack.c.0.s8 %v2750
        %v2752 = vlaneseq
        %v2753 = vshrl.u32 %v2752, 7
        %v2754 = vsub.s32 %v2751, %v2753
        %v2755 = vrot.slane %v2744, %v2754
        %v2757 = vunpack.c.l.s4 1966171168
        %v2758 = vunpack.c.0.s8 %v2757
        %v2759 = vlaneseq
        %v2760 = vshrl.u32 %v2759, 7
        %v2761 = vsub.s32 %v2758, %v2760
        %v2762 = vrot.slane %v2748, %v2761
        %v2763 = vcombine.high %v2755, %v2755
        %v2764 = vcombine.high %v2762, %v2762
        %v2766 = vunpack.c.l.s4 1966171168
        %v2767 = vunpack.c.0.s8 %v2766
        %v2768 = vlaneseq
        %v2769 = vshrl.u32 %v2768, 7
        %v2770 = vsub.s32 %v2767, %v2769
        %v2771 = vrot.slane %v2755, %v2770
        %v2773 = vunpack.c.l.s4 1966171168
        %v2774 = vunpack.c.0.s8 %v2773
        %v2775 = vlaneseq
        %v2776 = vshrl.u32 %v2775, 7
        %v2777 = vsub.s32 %v2774, %v2776
        %v2778 = vrot.slane %v2762, %v2777
        %v2780 = vunpack.c.l.s4 1966171168
        %v2781 = vunpack.c.0.s8 %v2780
        %v2782 = vlaneseq
        %v2783 = vshrl.u32 %v2782, 7
        %v2784 = vsub.s32 %v2781, %v2783
        %v2785 = vrot.slane %v2763, %v2784
        %v2787 = vunpack.c.l.s4 1966171168
        %v2788 = vunpack.c.0.s8 %v2787
        %v2789 = vlaneseq
        %v2790 = vshrl.u32 %v2789, 7
        %v2791 = vsub.s32 %v2788, %v2790
        %v2792 = vrot.slane %v2764, %v2791
        %v2793 = vcombine.high %v2771, %v2771
        %v2794 = vcombine.high %v2778, %v2778
        %v2795 = vcombine.high %v2785, %v2785
        %v2796 = vcombine.high %v2792, %v2792
        %v2805 = vadd.f32 %v1918, %v2771
        %v2806 = vadd.f32 %v1953, %v2785
        %v2807 = vadd.f32 %v1978, %v2793
        %v2808 = vadd.f32 %v2025, %v2795
        %v2809 = vadd.f32 %v2072, %v2778
        %v2810 = vadd.f32 %v2107, %v2792
        %v2811 = vadd.f32 %v2173, %v2794
        %v2812 = vadd.f32 %v2220, %v2796
        %v2813 = vxor.u32 %v2805, 2147483648
        %v2814 = vxor.u32 %v2806, 2147483648
        %v2815 = vxor.u32 %v2807, 2147483648
        %v2816 = vxor.u32 %v2808, 2147483648
        %v2817 = vxor.u32 %v2809, 2147483648
        %v2818 = vxor.u32 %v2810, 2147483648
        %v2819 = vxor.u32 %v2811, 2147483648
        %v2820 = vxor.u32 %v2812, 2147483648
        %v2821 = vmul.f32 %v2813, 1.442695
        %v2822 = vpow.pop %v2821
        %v2823 = vmul.f32 %v2814, 1.442695
        %v2824 = vpow.pop %v2823
        %v2825 = vmul.f32 %v2815, 1.442695
        %v2826 = vpow.pop %v2825
        %v2827 = vmul.f32 %v2816, 1.442695
        %v2828 = vpow.pop %v2827
        %v2829 = vmul.f32 %v2817, 1.442695
        %v2830 = vpow.pop %v2829
        %v2831 = vmul.f32 %v2818, 1.442695
        %v2832 = vpow.pop %v2831
        %v2833 = vmul.f32 %v2819, 1.442695
        %v2834 = vpow.pop %v2833
        %v2835 = vmul.f32 %v2820, 1.442695
        %v2836 = vpow.pop %v2835
        %v2837 = vadd.f32 %v2822, 1.0
        %v2838 = vadd.f32 %v2824, 1.0
        %v2839 = vadd.f32 %v2826, 1.0
        %v2840 = vadd.f32 %v2828, 1.0
        %v2841 = vadd.f32 %v2830, 1.0
        %v2842 = vadd.f32 %v2832, 1.0
        %v2843 = vadd.f32 %v2834, 1.0
        %v2844 = vadd.f32 %v2836, 1.0
        %v2845 = vrcp.pop %v2837
        %v2846 = vmul.f32 1.0, %v2845
        %v2847 = vrcp.pop %v2838
        %v2848 = vmul.f32 1.0, %v2847
        %v2849 = vrcp.pop %v2839
        %v2850 = vmul.f32 1.0, %v2849
        %v2851 = vrcp.pop %v2840
        %v2852 = vmul.f32 1.0, %v2851
        %v2853 = vrcp.pop %v2841
        %v2854 = vmul.f32 1.0, %v2853
        %v2855 = vrcp.pop %v2842
        %v2856 = vmul.f32 1.0, %v2855
        %v2857 = vrcp.pop %v2843
        %v2858 = vmul.f32 1.0, %v2857
        %v2859 = vrcp.pop %v2844
        %v2860 = vmul.f32 1.0, %v2859
        %v2861 = vtanh.pop %v2805
        %v2862 = vtanh.pop %v2806
        %v2863 = vtanh.pop %v2807
        %v2864 = vtanh.pop %v2808
        %v2865 = vtanh.pop %v2809
        %v2866 = vtanh.pop %v2810
        %v2867 = vtanh.pop %v2811
        %v2868 = vtanh.pop %v2812
        %v2869 = vmul.f32 %v2846, %v2560
        %v2870 = vmul.f32 %v2848, %v2561
        %v2871 = vmul.f32 %v2850, %v2562
        %v2872 = vmul.f32 %v2852, %v2563
        %v2873 = vmul.f32 %v2854, %v2564
        %v2874 = vmul.f32 %v2856, %v2565
        %v2875 = vmul.f32 %v2858, %v2566
        %v2876 = vmul.f32 %v2860, %v2567
        %2885 = vrot.lane.b32.xlu0 %v2861, 92
        %v2886 = vpop.permute.xlu0 %2885
        %2887 = vrot.lane.b32.xlu0 %v2862, 92
        %v2888 = vpop.permute.xlu0 %2887
        %2889 = vrot.lane.b32.xlu0 %v2863, 92
        %v2890 = vpop.permute.xlu0 %2889
        %2891 = vrot.lane.b32.xlu0 %v2864, 92
        %v2892 = vpop.permute.xlu0 %2891
        %2893 = vrot.lane.b32.xlu0 %v2865, 92
        %v2894 = vpop.permute.xlu0 %2893
        %2895 = vrot.lane.b32.xlu0 %v2866, 92
        %v2896 = vpop.permute.xlu0 %2895
        %2897 = vrot.lane.b32.xlu0 %v2867, 92
        %v2898 = vpop.permute.xlu0 %2897
        %2899 = vrot.lane.b32.xlu0 %v2868, 92
        %v2900 = vpop.permute.xlu0 %2899
        %v2909 = vmul.f32 %v2846, %v2886
        %v2910 = vmul.f32 %v2848, %v2888
        %v2911 = vmul.f32 %v2850, %v2890
        %v2912 = vmul.f32 %v2852, %v2892
        %v2913 = vmul.f32 %v2854, %v2894
        %v2914 = vmul.f32 %v2856, %v2896
        %v2915 = vmul.f32 %v2858, %v2898
        %v2916 = vmul.f32 %v2860, %v2900
        %2925 = vrot.lane.b32.xlu0 %v2909, 12
        %v2926 = vpop.permute.xlu0 %2925
        %2927 = vrot.lane.b32.xlu0 %v2910, 12
        %v2928 = vpop.permute.xlu0 %2927
        %2929 = vrot.lane.b32.xlu0 %v2911, 12
        %v2930 = vpop.permute.xlu0 %2929
        %2931 = vrot.lane.b32.xlu0 %v2912, 12
        %v2932 = vpop.permute.xlu0 %2931
        %2933 = vrot.lane.b32.xlu0 %v2913, 12
        %v2934 = vpop.permute.xlu0 %2933
        %2935 = vrot.lane.b32.xlu0 %v2914, 12
        %v2936 = vpop.permute.xlu0 %2935
        %2937 = vrot.lane.b32.xlu0 %v2915, 12
        %v2938 = vpop.permute.xlu0 %2937
        %2939 = vrot.lane.b32.xlu0 %v2916, 12
        %v2940 = vpop.permute.xlu0 %2939
        %v2949 = vadd.f32 %v2869, %v2926
        %v2950 = vadd.f32 %v2870, %v2928
        %v2951 = vadd.f32 %v2871, %v2930
        %v2952 = vadd.f32 %v2872, %v2932
        %v2953 = vadd.f32 %v2873, %v2934
        %v2954 = vadd.f32 %v2874, %v2936
        %v2955 = vadd.f32 %v2875, %v2938
        %v2956 = vadd.f32 %v2876, %v2940
        %v2957 = vtanh.pop %v2949
        %v2958 = vtanh.pop %v2950
        %v2959 = vtanh.pop %v2951
        %v2960 = vtanh.pop %v2952
        %v2961 = vtanh.pop %v2953
        %v2962 = vtanh.pop %v2954
        %v2963 = vtanh.pop %v2955
        %v2964 = vtanh.pop %v2956
        %2973 = vrot.lane.b32.xlu0 %v2957, 12
        %v2974 = vpop.permute.xlu0 %2973
        %2975 = vrot.lane.b32.xlu0 %v2958, 12
        %v2976 = vpop.permute.xlu0 %2975
        %2977 = vrot.lane.b32.xlu0 %v2959, 12
        %v2978 = vpop.permute.xlu0 %2977
        %2979 = vrot.lane.b32.xlu0 %v2960, 12
        %v2980 = vpop.permute.xlu0 %2979
        %2981 = vrot.lane.b32.xlu0 %v2961, 12
        %v2982 = vpop.permute.xlu0 %2981
        %2983 = vrot.lane.b32.xlu0 %v2962, 12
        %v2984 = vpop.permute.xlu0 %2983
        %2985 = vrot.lane.b32.xlu0 %v2963, 12
        %v2986 = vpop.permute.xlu0 %2985
        %2987 = vrot.lane.b32.xlu0 %v2964, 12
        %v2988 = vpop.permute.xlu0 %2987
        %v2997 = vmul.f32 %v2846, %v2974
        %v2998 = vmul.f32 %v2848, %v2976
        %v2999 = vmul.f32 %v2850, %v2978
        %v3000 = vmul.f32 %v2852, %v2980
        %v3001 = vmul.f32 %v2854, %v2982
        %v3002 = vmul.f32 %v2856, %v2984
        %v3003 = vmul.f32 %v2858, %v2986
        %v3004 = vmul.f32 %v2860, %v2988
        %v3013 = vcombine.low %v2997, %v2998
        %v3014 = vcombine.low %v2999, %v3000
        %v3015 = vcombine.low %v3001, %v3002
        %v3016 = vcombine.low %v3003, %v3004
        %v3018 = vunpack.c.l.s4 1966171168
        %v3019 = vunpack.c.0.s8 %v3018
        %v3020 = vlaneseq
        %v3021 = vshrl.u32 %v3020, 7
        %v3022 = vsub.s32 %v3019, %v3021
        %v3023 = vrot.slane %v3013, %v3022
        %v3025 = vunpack.c.l.s4 1966171168
        %v3026 = vunpack.c.0.s8 %v3025
        %v3027 = vlaneseq
        %v3028 = vshrl.u32 %v3027, 7
        %v3029 = vsub.s32 %v3026, %v3028
        %v3030 = vrot.slane %v3014, %v3029
        %v3032 = vunpack.c.l.s4 1966171168
        %v3033 = vunpack.c.0.s8 %v3032
        %v3034 = vlaneseq
        %v3035 = vshrl.u32 %v3034, 7
        %v3036 = vsub.s32 %v3033, %v3035
        %v3037 = vrot.slane %v3015, %v3036
        %v3039 = vunpack.c.l.s4 1966171168
        %v3040 = vunpack.c.0.s8 %v3039
        %v3041 = vlaneseq
        %v3042 = vshrl.u32 %v3041, 7
        %v3043 = vsub.s32 %v3040, %v3042
        %v3044 = vrot.slane %v3016, %v3043
        %v3045 = vcombine.low %v3023, %v3030
        %v3046 = vcombine.low %v3037, %v3044
        %v3048 = vunpack.c.l.s4 1966171168
        %v3049 = vunpack.c.0.s8 %v3048
        %v3050 = vlaneseq
        %v3051 = vshrl.u32 %v3050, 7
        %v3052 = vsub.s32 %v3049, %v3051
        %v3053 = vrot.slane %v3045, %v3052
        %v3055 = vunpack.c.l.s4 1966171168
        %v3056 = vunpack.c.0.s8 %v3055
        %v3057 = vlaneseq
        %v3058 = vshrl.u32 %v3057, 7
        %v3059 = vsub.s32 %v3056, %v3058
        %v3060 = vrot.slane %v3046, %v3059
        %v3061 = vcombine.low %v3053, %v3060
        %3062 = vrot.lane.b32.xlu0 %v3061, 104
        %v3063 = vpop.permute.xlu0 %3062
        %v3064 = vsel %vm794, %v3063, 0
        %3066 = vmatprep.subr.mxu0 0.0
        %3067 = vmatpush1.msra.mxu0 %v2280
        %3068 = vmatprep.subr.mxu0 0.0
        %3069 = vmatpush1.msra.mxu0 %v2286
        %3070 = vmatprep.subr.mxu0 0.0
        %3071 = vmatpush1.msra.mxu0 0.0
        %3072 = vmatprep.subr.mxu0 0.0
        %3073 = vmatpush1.msra.mxu0 0.0
        %3074 = vmatprep.subr.mxu0 0.0
        %3075 = vmatpush1.msra.mxu0 0.0
        %3076 = vmatprep.subr.mxu0 0.0
        %3077 = vmatpush1.msra.mxu0 0.0
        %3078 = vmatprep.subr.mxu0 0.0
        %3079 = vmatpush1.msra.mxu0 0.0
        %3080 = vmatprep.subr.mxu0 0.0
        %3081 = vmatpush1.msra.mxu0 0.0
        %3082 = vmatprep.subr.mxu0 0.0
        %3083 = vmatpush1.msra.mxu0 0.0
        %3084 = vmatprep.subr.mxu0 0.0
        %3085 = vmatpush1.msra.mxu0 0.0
        %3086 = vmatprep.subr.mxu0 0.0
        %3087 = vmatpush1.msra.mxu0 0.0
        %3088 = vmatprep.subr.mxu0 0.0
        %3089 = vmatpush1.msra.mxu0 0.0
        %3090 = vmatprep.subr.mxu0 0.0
        %3091 = vmatpush1.msra.mxu0 0.0
        %3092 = vmatprep.subr.mxu0 0.0
        %3093 = vmatpush1.msra.mxu0 0.0
        %3094 = vmatprep.subr.mxu0 0.0
        %3095 = vmatpush1.msra.mxu0 0.0
        %3096 = vmatprep.subr.mxu0 0.0
        %3097 = vmatpush1.msra.mxu0 0.0
        %3098 = vmatprep.subr.mxu0 0.0
        %3099 = vmatpush1.msra.mxu0 0.0
        %3100 = vmatprep.subr.mxu0 0.0
        %3101 = vmatpush1.msra.mxu0 0.0
        %3102 = vmatprep.subr.mxu0 0.0
        %3103 = vmatpush1.msra.mxu0 0.0
        %3104 = vmatprep.subr.mxu0 0.0
        %3105 = vmatpush1.msra.mxu0 0.0
        %3106 = vmatprep.subr.mxu0 0.0
        %3107 = vmatpush1.msra.mxu0 0.0
        %3108 = vmatprep.subr.mxu0 0.0
        %3109 = vmatpush1.msra.mxu0 0.0
        %3110 = vmatprep.subr.mxu0 0.0
        %3111 = vmatpush1.msra.mxu0 0.0
        %3112 = vmatprep.subr.mxu0 0.0
        %3113 = vmatpush1.msra.mxu0 0.0
        %3114 = vmatprep.subr.mxu0 0.0
        %3115 = vmatpush1.msra.mxu0 0.0
        %3116 = vmatprep.subr.mxu0 0.0
        %3117 = vmatpush1.msra.mxu0 0.0
        %3118 = vmatprep.subr.mxu0 0.0
        %3119 = vmatpush1.msra.mxu0 0.0
        %3120 = vmatprep.subr.mxu0 0.0
        %3121 = vmatpush1.msra.mxu0 0.0
        %3122 = vmatprep.subr.mxu0 0.0
        %3123 = vmatpush1.msra.mxu0 0.0
        %3124 = vmatprep.subr.mxu0 0.0
        %3125 = vmatpush1.msra.mxu0 0.0
        %3126 = vmatprep.subr.mxu0 0.0
        %3127 = vmatpush1.msra.mxu0 0.0
        %3128 = vmatprep.subr.mxu0 0.0
        %3129 = vmatpush1.msra.mxu0 0.0
        %3130 = vmatprep.mubr.f32.mxu0 0.0
        %3131 = vmatmul.mubr.f32.gmra.mrb[0].mxu0 %v3064
        %v3132 = vpop.f32.mrb[0].mxu0
        %v3133 = vadd.f32 0.0, %v3132
        %v3134 = vpop.f32.mrb[0].mxu0
        %3135 = vdwg.mxu0
        %v3137 = vcombine.high %v3133, %v3133
        %v3139 = vunpack.c.l.s4 1966171168
        %v3140 = vunpack.c.0.s8 %v3139
        %v3141 = vlaneseq
        %v3142 = vshrl.u32 %v3141, 7
        %v3143 = vsub.s32 %v3140, %v3142
        %v3144 = vrot.slane %v3133, %v3143
        %v3146 = vunpack.c.l.s4 1966171168
        %v3147 = vunpack.c.0.s8 %v3146
        %v3148 = vlaneseq
        %v3149 = vshrl.u32 %v3148, 7
        %v3150 = vsub.s32 %v3147, %v3149
        %v3151 = vrot.slane %v3137, %v3150
        %v3152 = vcombine.high %v3144, %v3144
        %v3153 = vcombine.high %v3151, %v3151
        %v3155 = vunpack.c.l.s4 1966171168
        %v3156 = vunpack.c.0.s8 %v3155
        %v3157 = vlaneseq
        %v3158 = vshrl.u32 %v3157, 7
        %v3159 = vsub.s32 %v3156, %v3158
        %v3160 = vrot.slane %v3144, %v3159
        %v3162 = vunpack.c.l.s4 1966171168
        %v3163 = vunpack.c.0.s8 %v3162
        %v3164 = vlaneseq
        %v3165 = vshrl.u32 %v3164, 7
        %v3166 = vsub.s32 %v3163, %v3165
        %v3167 = vrot.slane %v3151, %v3166
        %v3169 = vunpack.c.l.s4 1966171168
        %v3170 = vunpack.c.0.s8 %v3169
        %v3171 = vlaneseq
        %v3172 = vshrl.u32 %v3171, 7
        %v3173 = vsub.s32 %v3170, %v3172
        %v3174 = vrot.slane %v3152, %v3173
        %v3176 = vunpack.c.l.s4 1966171168
        %v3177 = vunpack.c.0.s8 %v3176
        %v3178 = vlaneseq
        %v3179 = vshrl.u32 %v3178, 7
        %v3180 = vsub.s32 %v3177, %v3179
        %v3181 = vrot.slane %v3153, %v3180
        %v3182 = vcombine.high %v3160, %v3160
        %v3183 = vcombine.high %v3167, %v3167
        %v3184 = vcombine.high %v3174, %v3174
        %v3185 = vcombine.high %v3181, %v3181
        %v3194 = vadd.f32 %v1926, %v3160
        %v3195 = vadd.f32 %v1967, %v3174
        %v3196 = vadd.f32 %v2002, %v3182
        %v3197 = vadd.f32 %v2027, %v3184
        %v3198 = vadd.f32 %v2074, %v3167
        %v3199 = vadd.f32 %v2121, %v3181
        %v3200 = vadd.f32 %v2156, %v3183
        %v3201 = vadd.f32 %v2222, %v3185
        %v3202 = vxor.u32 %v3194, 2147483648
        %v3203 = vxor.u32 %v3195, 2147483648
        %v3204 = vxor.u32 %v3196, 2147483648
        %v3205 = vxor.u32 %v3197, 2147483648
        %v3206 = vxor.u32 %v3198, 2147483648
        %v3207 = vxor.u32 %v3199, 2147483648
        %v3208 = vxor.u32 %v3200, 2147483648
        %v3209 = vxor.u32 %v3201, 2147483648
        %v3210 = vmul.f32 %v3202, 1.442695
        %v3211 = vpow.pop %v3210
        %v3212 = vmul.f32 %v3203, 1.442695
        %v3213 = vpow.pop %v3212
        %v3214 = vmul.f32 %v3204, 1.442695
        %v3215 = vpow.pop %v3214
        %v3216 = vmul.f32 %v3205, 1.442695
        %v3217 = vpow.pop %v3216
        %v3218 = vmul.f32 %v3206, 1.442695
        %v3219 = vpow.pop %v3218
        %v3220 = vmul.f32 %v3207, 1.442695
        %v3221 = vpow.pop %v3220
        %v3222 = vmul.f32 %v3208, 1.442695
        %v3223 = vpow.pop %v3222
        %v3224 = vmul.f32 %v3209, 1.442695
        %v3225 = vpow.pop %v3224
        %v3226 = vadd.f32 %v3211, 1.0
        %v3227 = vadd.f32 %v3213, 1.0
        %v3228 = vadd.f32 %v3215, 1.0
        %v3229 = vadd.f32 %v3217, 1.0
        %v3230 = vadd.f32 %v3219, 1.0
        %v3231 = vadd.f32 %v3221, 1.0
        %v3232 = vadd.f32 %v3223, 1.0
        %v3233 = vadd.f32 %v3225, 1.0
        %v3234 = vrcp.pop %v3226
        %v3235 = vmul.f32 1.0, %v3234
        %v3236 = vrcp.pop %v3227
        %v3237 = vmul.f32 1.0, %v3236
        %v3238 = vrcp.pop %v3228
        %v3239 = vmul.f32 1.0, %v3238
        %v3240 = vrcp.pop %v3229
        %v3241 = vmul.f32 1.0, %v3240
        %v3242 = vrcp.pop %v3230
        %v3243 = vmul.f32 1.0, %v3242
        %v3244 = vrcp.pop %v3231
        %v3245 = vmul.f32 1.0, %v3244
        %v3246 = vrcp.pop %v3232
        %v3247 = vmul.f32 1.0, %v3246
        %v3248 = vrcp.pop %v3233
        %v3249 = vmul.f32 1.0, %v3248
        %v3250 = vtanh.pop %v3194
        %v3251 = vtanh.pop %v3195
        %v3252 = vtanh.pop %v3196
        %v3253 = vtanh.pop %v3197
        %v3254 = vtanh.pop %v3198
        %v3255 = vtanh.pop %v3199
        %v3256 = vtanh.pop %v3200
        %v3257 = vtanh.pop %v3201
        %v3258 = vmul.f32 %v3235, %v2949
        %v3259 = vmul.f32 %v3237, %v2950
        %v3260 = vmul.f32 %v3239, %v2951
        %v3261 = vmul.f32 %v3241, %v2952
        %v3262 = vmul.f32 %v3243, %v2953
        %v3263 = vmul.f32 %v3245, %v2954
        %v3264 = vmul.f32 %v3247, %v2955
        %v3265 = vmul.f32 %v3249, %v2956
        %3274 = vrot.lane.b32.xlu0 %v3250, 92
        %v3275 = vpop.permute.xlu0 %3274
        %3276 = vrot.lane.b32.xlu0 %v3251, 92
        %v3277 = vpop.permute.xlu0 %3276
        %3278 = vrot.lane.b32.xlu0 %v3252, 92
        %v3279 = vpop.permute.xlu0 %3278
        %3280 = vrot.lane.b32.xlu0 %v3253, 92
        %v3281 = vpop.permute.xlu0 %3280
        %3282 = vrot.lane.b32.xlu0 %v3254, 92
        %v3283 = vpop.permute.xlu0 %3282
        %3284 = vrot.lane.b32.xlu0 %v3255, 92
        %v3285 = vpop.permute.xlu0 %3284
        %3286 = vrot.lane.b32.xlu0 %v3256, 92
        %v3287 = vpop.permute.xlu0 %3286
        %3288 = vrot.lane.b32.xlu0 %v3257, 92
        %v3289 = vpop.permute.xlu0 %3288
        %v3298 = vmul.f32 %v3235, %v3275
        %v3299 = vmul.f32 %v3237, %v3277
        %v3300 = vmul.f32 %v3239, %v3279
        %v3301 = vmul.f32 %v3241, %v3281
        %v3302 = vmul.f32 %v3243, %v3283
        %v3303 = vmul.f32 %v3245, %v3285
        %v3304 = vmul.f32 %v3247, %v3287
        %v3305 = vmul.f32 %v3249, %v3289
        %3314 = vrot.lane.b32.xlu0 %v3298, 12
        %v3315 = vpop.permute.xlu0 %3314
        %3316 = vrot.lane.b32.xlu0 %v3299, 12
        %v3317 = vpop.permute.xlu0 %3316
        %3318 = vrot.lane.b32.xlu0 %v3300, 12
        %v3319 = vpop.permute.xlu0 %3318
        %3320 = vrot.lane.b32.xlu0 %v3301, 12
        %v3321 = vpop.permute.xlu0 %3320
        %3322 = vrot.lane.b32.xlu0 %v3302, 12
        %v3323 = vpop.permute.xlu0 %3322
        %3324 = vrot.lane.b32.xlu0 %v3303, 12
        %v3325 = vpop.permute.xlu0 %3324
        %3326 = vrot.lane.b32.xlu0 %v3304, 12
        %v3327 = vpop.permute.xlu0 %3326
        %3328 = vrot.lane.b32.xlu0 %v3305, 12
        %v3329 = vpop.permute.xlu0 %3328
        %v3338 = vadd.f32 %v3258, %v3315
        %v3339 = vadd.f32 %v3259, %v3317
        %v3340 = vadd.f32 %v3260, %v3319
        %v3341 = vadd.f32 %v3261, %v3321
        %v3342 = vadd.f32 %v3262, %v3323
        %v3343 = vadd.f32 %v3263, %v3325
        %v3344 = vadd.f32 %v3264, %v3327
        %v3345 = vadd.f32 %v3265, %v3329
        %v3346 = vtanh.pop %v3338
        %v3347 = vtanh.pop %v3339
        %v3348 = vtanh.pop %v3340
        %v3349 = vtanh.pop %v3341
        %v3350 = vtanh.pop %v3342
        %v3351 = vtanh.pop %v3343
        %v3352 = vtanh.pop %v3344
        %v3353 = vtanh.pop %v3345
        %3362 = vrot.lane.b32.xlu0 %v3346, 12
        %v3363 = vpop.permute.xlu0 %3362
        %3364 = vrot.lane.b32.xlu0 %v3347, 12
        %v3365 = vpop.permute.xlu0 %3364
        %3366 = vrot.lane.b32.xlu0 %v3348, 12
        %v3367 = vpop.permute.xlu0 %3366
        %3368 = vrot.lane.b32.xlu0 %v3349, 12
        %v3369 = vpop.permute.xlu0 %3368
        %3370 = vrot.lane.b32.xlu0 %v3350, 12
        %v3371 = vpop.permute.xlu0 %3370
        %3372 = vrot.lane.b32.xlu0 %v3351, 12
        %v3373 = vpop.permute.xlu0 %3372
        %3374 = vrot.lane.b32.xlu0 %v3352, 12
        %v3375 = vpop.permute.xlu0 %3374
        %3376 = vrot.lane.b32.xlu0 %v3353, 12
        %v3377 = vpop.permute.xlu0 %3376
        %v3386 = vmul.f32 %v3235, %v3363
        %v3387 = vmul.f32 %v3237, %v3365
        %v3388 = vmul.f32 %v3239, %v3367
        %v3389 = vmul.f32 %v3241, %v3369
        %v3390 = vmul.f32 %v3243, %v3371
        %v3391 = vmul.f32 %v3245, %v3373
        %v3392 = vmul.f32 %v3247, %v3375
        %v3393 = vmul.f32 %v3249, %v3377
        %v3402 = vcombine.low %v3386, %v3387
        %v3403 = vcombine.low %v3388, %v3389
        %v3404 = vcombine.low %v3390, %v3391
        %v3405 = vcombine.low %v3392, %v3393
        %v3407 = vunpack.c.l.s4 1966171168
        %v3408 = vunpack.c.0.s8 %v3407
        %v3409 = vlaneseq
        %v3410 = vshrl.u32 %v3409, 7
        %v3411 = vsub.s32 %v3408, %v3410
        %v3412 = vrot.slane %v3402, %v3411
        %v3414 = vunpack.c.l.s4 1966171168
        %v3415 = vunpack.c.0.s8 %v3414
        %v3416 = vlaneseq
        %v3417 = vshrl.u32 %v3416, 7
        %v3418 = vsub.s32 %v3415, %v3417
        %v3419 = vrot.slane %v3403, %v3418
        %v3421 = vunpack.c.l.s4 1966171168
        %v3422 = vunpack.c.0.s8 %v3421
        %v3423 = vlaneseq
        %v3424 = vshrl.u32 %v3423, 7
        %v3425 = vsub.s32 %v3422, %v3424
        %v3426 = vrot.slane %v3404, %v3425
        %v3428 = vunpack.c.l.s4 1966171168
        %v3429 = vunpack.c.0.s8 %v3428
        %v3430 = vlaneseq
        %v3431 = vshrl.u32 %v3430, 7
        %v3432 = vsub.s32 %v3429, %v3431
        %v3433 = vrot.slane %v3405, %v3432
        %v3434 = vcombine.low %v3412, %v3419
        %v3435 = vcombine.low %v3426, %v3433
        %v3437 = vunpack.c.l.s4 1966171168
        %v3438 = vunpack.c.0.s8 %v3437
        %v3439 = vlaneseq
        %v3440 = vshrl.u32 %v3439, 7
        %v3441 = vsub.s32 %v3438, %v3440
        %v3442 = vrot.slane %v3434, %v3441
        %v3444 = vunpack.c.l.s4 1966171168
        %v3445 = vunpack.c.0.s8 %v3444
        %v3446 = vlaneseq
        %v3447 = vshrl.u32 %v3446, 7
        %v3448 = vsub.s32 %v3445, %v3447
        %v3449 = vrot.slane %v3435, %v3448
        %v3450 = vcombine.low %v3442, %v3449
        %3451 = vrot.lane.b32.xlu0 %v3450, 104
        %v3452 = vpop.permute.xlu0 %3451
        %v3453 = vsel %vm794, %v3452, 0
        %3455 = vmatprep.subr.mxu0 0.0
        %3456 = vmatpush1.msra.mxu0 %v2280
        %3457 = vmatprep.subr.mxu0 0.0
        %3458 = vmatpush1.msra.mxu0 %v2286
        %3459 = vmatprep.subr.mxu0 0.0
        %3460 = vmatpush1.msra.mxu0 0.0
        %3461 = vmatprep.subr.mxu0 0.0
        %3462 = vmatpush1.msra.mxu0 0.0
        %3463 = vmatprep.subr.mxu0 0.0
        %3464 = vmatpush1.msra.mxu0 0.0
        %3465 = vmatprep.subr.mxu0 0.0
        %3466 = vmatpush1.msra.mxu0 0.0
        %3467 = vmatprep.subr.mxu0 0.0
        %3468 = vmatpush1.msra.mxu0 0.0
        %3469 = vmatprep.subr.mxu0 0.0
        %3470 = vmatpush1.msra.mxu0 0.0
        %3471 = vmatprep.subr.mxu0 0.0
        %3472 = vmatpush1.msra.mxu0 0.0
        %3473 = vmatprep.subr.mxu0 0.0
        %3474 = vmatpush1.msra.mxu0 0.0
        %3475 = vmatprep.subr.mxu0 0.0
        %3476 = vmatpush1.msra.mxu0 0.0
        %3477 = vmatprep.subr.mxu0 0.0
        %3478 = vmatpush1.msra.mxu0 0.0
        %3479 = vmatprep.subr.mxu0 0.0
        %3480 = vmatpush1.msra.mxu0 0.0
        %3481 = vmatprep.subr.mxu0 0.0
        %3482 = vmatpush1.msra.mxu0 0.0
        %3483 = vmatprep.subr.mxu0 0.0
        %3484 = vmatpush1.msra.mxu0 0.0
        %3485 = vmatprep.subr.mxu0 0.0
        %3486 = vmatpush1.msra.mxu0 0.0
        %3487 = vmatprep.subr.mxu0 0.0
        %3488 = vmatpush1.msra.mxu0 0.0
        %3489 = vmatprep.subr.mxu0 0.0
        %3490 = vmatpush1.msra.mxu0 0.0
        %3491 = vmatprep.subr.mxu0 0.0
        %3492 = vmatpush1.msra.mxu0 0.0
        %3493 = vmatprep.subr.mxu0 0.0
        %3494 = vmatpush1.msra.mxu0 0.0
        %3495 = vmatprep.subr.mxu0 0.0
        %3496 = vmatpush1.msra.mxu0 0.0
        %3497 = vmatprep.subr.mxu0 0.0
        %3498 = vmatpush1.msra.mxu0 0.0
        %3499 = vmatprep.subr.mxu0 0.0
        %3500 = vmatpush1.msra.mxu0 0.0
        %3501 = vmatprep.subr.mxu0 0.0
        %3502 = vmatpush1.msra.mxu0 0.0
        %3503 = vmatprep.subr.mxu0 0.0
        %3504 = vmatpush1.msra.mxu0 0.0
        %3505 = vmatprep.subr.mxu0 0.0
        %3506 = vmatpush1.msra.mxu0 0.0
        %3507 = vmatprep.subr.mxu0 0.0
        %3508 = vmatpush1.msra.mxu0 0.0
        %3509 = vmatprep.subr.mxu0 0.0
        %3510 = vmatpush1.msra.mxu0 0.0
        %3511 = vmatprep.subr.mxu0 0.0
        %3512 = vmatpush1.msra.mxu0 0.0
        %3513 = vmatprep.subr.mxu0 0.0
        %3514 = vmatpush1.msra.mxu0 0.0
        %3515 = vmatprep.subr.mxu0 0.0
        %3516 = vmatpush1.msra.mxu0 0.0
        %3517 = vmatprep.subr.mxu0 0.0
        %3518 = vmatpush1.msra.mxu0 0.0
        %3519 = vmatprep.mubr.f32.mxu0 0.0
        %3520 = vmatmul.mubr.f32.gmra.mrb[0].mxu0 %v3453
        %v3521 = vpop.f32.mrb[0].mxu0
        %v3522 = vadd.f32 0.0, %v3521
        %v3523 = vpop.f32.mrb[0].mxu0
        %3524 = vdwg.mxu0
        %v3526 = vcombine.high %v3522, %v3522
        %v3528 = vunpack.c.l.s4 1966171168
        %v3529 = vunpack.c.0.s8 %v3528
        %v3530 = vlaneseq
        %v3531 = vshrl.u32 %v3530, 7
        %v3532 = vsub.s32 %v3529, %v3531
        %v3533 = vrot.slane %v3522, %v3532
        %v3535 = vunpack.c.l.s4 1966171168
        %v3536 = vunpack.c.0.s8 %v3535
        %v3537 = vlaneseq
        %v3538 = vshrl.u32 %v3537, 7
        %v3539 = vsub.s32 %v3536, %v3538
        %v3540 = vrot.slane %v3526, %v3539
        %v3541 = vcombine.high %v3533, %v3533
        %v3542 = vcombine.high %v3540, %v3540
        %v3544 = vunpack.c.l.s4 1966171168
        %v3545 = vunpack.c.0.s8 %v3544
        %v3546 = vlaneseq
        %v3547 = vshrl.u32 %v3546, 7
        %v3548 = vsub.s32 %v3545, %v3547
        %v3549 = vrot.slane %v3533, %v3548
        %v3551 = vunpack.c.l.s4 1966171168
        %v3552 = vunpack.c.0.s8 %v3551
        %v3553 = vlaneseq
        %v3554 = vshrl.u32 %v3553, 7
        %v3555 = vsub.s32 %v3552, %v3554
        %v3556 = vrot.slane %v3540, %v3555
        %v3558 = vunpack.c.l.s4 1966171168
        %v3559 = vunpack.c.0.s8 %v3558
        %v3560 = vlaneseq
        %v3561 = vshrl.u32 %v3560, 7
        %v3562 = vsub.s32 %v3559, %v3561
        %v3563 = vrot.slane %v3541, %v3562
        %v3565 = vunpack.c.l.s4 1966171168
        %v3566 = vunpack.c.0.s8 %v3565
        %v3567 = vlaneseq
        %v3568 = vshrl.u32 %v3567, 7
        %v3569 = vsub.s32 %v3566, %v3568
        %v3570 = vrot.slane %v3542, %v3569
        %v3571 = vcombine.high %v3549, %v3549
        %v3572 = vcombine.high %v3556, %v3556
        %v3573 = vcombine.high %v3563, %v3563
        %v3574 = vcombine.high %v3570, %v3570
        %v3583 = vadd.f32 %v1928, %v3549
        %v3584 = vadd.f32 %v1975, %v3563
        %v3585 = vadd.f32 %v2016, %v3571
        %v3586 = vadd.f32 %v2051, %v3573
        %v3587 = vadd.f32 %v2076, %v3556
        %v3588 = vadd.f32 %v2123, %v3570
        %v3589 = vadd.f32 %v2170, %v3572
        %v3590 = vadd.f32 %v2205, %v3574
        %v3591 = vxor.u32 %v3583, 2147483648
        %v3592 = vxor.u32 %v3584, 2147483648
        %v3593 = vxor.u32 %v3585, 2147483648
        %v3594 = vxor.u32 %v3586, 2147483648
        %v3595 = vxor.u32 %v3587, 2147483648
        %v3596 = vxor.u32 %v3588, 2147483648
        %v3597 = vxor.u32 %v3589, 2147483648
        %v3598 = vxor.u32 %v3590, 2147483648
        %v3599 = vmul.f32 %v3591, 1.442695
        %v3600 = vpow.pop %v3599
        %v3601 = vmul.f32 %v3592, 1.442695
        %v3602 = vpow.pop %v3601
        %v3603 = vmul.f32 %v3593, 1.442695
        %v3604 = vpow.pop %v3603
        %v3605 = vmul.f32 %v3594, 1.442695
        %v3606 = vpow.pop %v3605
        %v3607 = vmul.f32 %v3595, 1.442695
        %v3608 = vpow.pop %v3607
        %v3609 = vmul.f32 %v3596, 1.442695
        %v3610 = vpow.pop %v3609
        %v3611 = vmul.f32 %v3597, 1.442695
        %v3612 = vpow.pop %v3611
        %v3613 = vmul.f32 %v3598, 1.442695
        %v3614 = vpow.pop %v3613
        %v3615 = vadd.f32 %v3600, 1.0
        %v3616 = vadd.f32 %v3602, 1.0
        %v3617 = vadd.f32 %v3604, 1.0
        %v3618 = vadd.f32 %v3606, 1.0
        %v3619 = vadd.f32 %v3608, 1.0
        %v3620 = vadd.f32 %v3610, 1.0
        %v3621 = vadd.f32 %v3612, 1.0
        %v3622 = vadd.f32 %v3614, 1.0
        %v3623 = vrcp.pop %v3615
        %v3624 = vmul.f32 1.0, %v3623
        %v3625 = vrcp.pop %v3616
        %v3626 = vmul.f32 1.0, %v3625
        %v3627 = vrcp.pop %v3617
        %v3628 = vmul.f32 1.0, %v3627
        %v3629 = vrcp.pop %v3618
        %v3630 = vmul.f32 1.0, %v3629
        %v3631 = vrcp.pop %v3619
        %v3632 = vmul.f32 1.0, %v3631
        %v3633 = vrcp.pop %v3620
        %v3634 = vmul.f32 1.0, %v3633
        %v3635 = vrcp.pop %v3621
        %v3636 = vmul.f32 1.0, %v3635
        %v3637 = vrcp.pop %v3622
        %v3638 = vmul.f32 1.0, %v3637
        %v3639 = vtanh.pop %v3583
        %v3640 = vtanh.pop %v3584
        %v3641 = vtanh.pop %v3585
        %v3642 = vtanh.pop %v3586
        %v3643 = vtanh.pop %v3587
        %v3644 = vtanh.pop %v3588
        %v3645 = vtanh.pop %v3589
        %v3646 = vtanh.pop %v3590
        %v3647 = vmul.f32 %v3624, %v3338
        %v3648 = vmul.f32 %v3626, %v3339
        %v3649 = vmul.f32 %v3628, %v3340
        %v3650 = vmul.f32 %v3630, %v3341
        %v3651 = vmul.f32 %v3632, %v3342
        %v3652 = vmul.f32 %v3634, %v3343
        %v3653 = vmul.f32 %v3636, %v3344
        %v3654 = vmul.f32 %v3638, %v3345
        %3663 = vrot.lane.b32.xlu0 %v3639, 92
        %v3664 = vpop.permute.xlu0 %3663
        %3665 = vrot.lane.b32.xlu0 %v3640, 92
        %v3666 = vpop.permute.xlu0 %3665
        %3667 = vrot.lane.b32.xlu0 %v3641, 92
        %v3668 = vpop.permute.xlu0 %3667
        %3669 = vrot.lane.b32.xlu0 %v3642, 92
        %v3670 = vpop.permute.xlu0 %3669
        %3671 = vrot.lane.b32.xlu0 %v3643, 92
        %v3672 = vpop.permute.xlu0 %3671
        %3673 = vrot.lane.b32.xlu0 %v3644, 92
        %v3674 = vpop.permute.xlu0 %3673
        %3675 = vrot.lane.b32.xlu0 %v3645, 92
        %v3676 = vpop.permute.xlu0 %3675
        %3677 = vrot.lane.b32.xlu0 %v3646, 92
        %v3678 = vpop.permute.xlu0 %3677
        %v3687 = vmul.f32 %v3624, %v3664
        %v3688 = vmul.f32 %v3626, %v3666
        %v3689 = vmul.f32 %v3628, %v3668
        %v3690 = vmul.f32 %v3630, %v3670
        %v3691 = vmul.f32 %v3632, %v3672
        %v3692 = vmul.f32 %v3634, %v3674
        %v3693 = vmul.f32 %v3636, %v3676
        %v3694 = vmul.f32 %v3638, %v3678
        %3703 = vrot.lane.b32.xlu0 %v3687, 12
        %v3704 = vpop.permute.xlu0 %3703
        %3705 = vrot.lane.b32.xlu0 %v3688, 12
        %v3706 = vpop.permute.xlu0 %3705
        %3707 = vrot.lane.b32.xlu0 %v3689, 12
        %v3708 = vpop.permute.xlu0 %3707
        %3709 = vrot.lane.b32.xlu0 %v3690, 12
        %v3710 = vpop.permute.xlu0 %3709
        %3711 = vrot.lane.b32.xlu0 %v3691, 12
        %v3712 = vpop.permute.xlu0 %3711
        %3713 = vrot.lane.b32.xlu0 %v3692, 12
        %v3714 = vpop.permute.xlu0 %3713
        %3715 = vrot.lane.b32.xlu0 %v3693, 12
        %v3716 = vpop.permute.xlu0 %3715
        %3717 = vrot.lane.b32.xlu0 %v3694, 12
        %v3718 = vpop.permute.xlu0 %3717
        %v3727 = vadd.f32 %v3647, %v3704
        %v3728 = vadd.f32 %v3648, %v3706
        %v3729 = vadd.f32 %v3649, %v3708
        %v3730 = vadd.f32 %v3650, %v3710
        %v3731 = vadd.f32 %v3651, %v3712
        %v3732 = vadd.f32 %v3652, %v3714
        %v3733 = vadd.f32 %v3653, %v3716
        %v3734 = vadd.f32 %v3654, %v3718
        %v3735 = vtanh.pop %v3727
        %v3736 = vtanh.pop %v3728
        %v3737 = vtanh.pop %v3729
        %v3738 = vtanh.pop %v3730
        %v3739 = vtanh.pop %v3731
        %v3740 = vtanh.pop %v3732
        %v3741 = vtanh.pop %v3733
        %v3742 = vtanh.pop %v3734
        %3751 = vrot.lane.b32.xlu0 %v3735, 12
        %v3752 = vpop.permute.xlu0 %3751
        %3753 = vrot.lane.b32.xlu0 %v3736, 12
        %v3754 = vpop.permute.xlu0 %3753
        %3755 = vrot.lane.b32.xlu0 %v3737, 12
        %v3756 = vpop.permute.xlu0 %3755
        %3757 = vrot.lane.b32.xlu0 %v3738, 12
        %v3758 = vpop.permute.xlu0 %3757
        %3759 = vrot.lane.b32.xlu0 %v3739, 12
        %v3760 = vpop.permute.xlu0 %3759
        %3761 = vrot.lane.b32.xlu0 %v3740, 12
        %v3762 = vpop.permute.xlu0 %3761
        %3763 = vrot.lane.b32.xlu0 %v3741, 12
        %v3764 = vpop.permute.xlu0 %3763
        %3765 = vrot.lane.b32.xlu0 %v3742, 12
        %v3766 = vpop.permute.xlu0 %3765
        %v3775 = vmul.f32 %v3624, %v3752
        %v3776 = vmul.f32 %v3626, %v3754
        %v3777 = vmul.f32 %v3628, %v3756
        %v3778 = vmul.f32 %v3630, %v3758
        %v3779 = vmul.f32 %v3632, %v3760
        %v3780 = vmul.f32 %v3634, %v3762
        %v3781 = vmul.f32 %v3636, %v3764
        %v3782 = vmul.f32 %v3638, %v3766
        %v3791 = vcombine.low %v3775, %v3776
        %v3792 = vcombine.low %v3777, %v3778
        %v3793 = vcombine.low %v3779, %v3780
        %v3794 = vcombine.low %v3781, %v3782
        %v3796 = vunpack.c.l.s4 1966171168
        %v3797 = vunpack.c.0.s8 %v3796
        %v3798 = vlaneseq
        %v3799 = vshrl.u32 %v3798, 7
        %v3800 = vsub.s32 %v3797, %v3799
        %v3801 = vrot.slane %v3791, %v3800
        %v3803 = vunpack.c.l.s4 1966171168
        %v3804 = vunpack.c.0.s8 %v3803
        %v3805 = vlaneseq
        %v3806 = vshrl.u32 %v3805, 7
        %v3807 = vsub.s32 %v3804, %v3806
        %v3808 = vrot.slane %v3792, %v3807
        %v3810 = vunpack.c.l.s4 1966171168
        %v3811 = vunpack.c.0.s8 %v3810
        %v3812 = vlaneseq
        %v3813 = vshrl.u32 %v3812, 7
        %v3814 = vsub.s32 %v3811, %v3813
        %v3815 = vrot.slane %v3793, %v3814
        %v3817 = vunpack.c.l.s4 1966171168
        %v3818 = vunpack.c.0.s8 %v3817
        %v3819 = vlaneseq
        %v3820 = vshrl.u32 %v3819, 7
        %v3821 = vsub.s32 %v3818, %v3820
        %v3822 = vrot.slane %v3794, %v3821
        %v3823 = vcombine.low %v3801, %v3808
        %v3824 = vcombine.low %v3815, %v3822
        %v3826 = vunpack.c.l.s4 1966171168
        %v3827 = vunpack.c.0.s8 %v3826
        %v3828 = vlaneseq
        %v3829 = vshrl.u32 %v3828, 7
        %v3830 = vsub.s32 %v3827, %v3829
        %v3831 = vrot.slane %v3823, %v3830
        %v3833 = vunpack.c.l.s4 1966171168
        %v3834 = vunpack.c.0.s8 %v3833
        %v3835 = vlaneseq
        %v3836 = vshrl.u32 %v3835, 7
        %v3837 = vsub.s32 %v3834, %v3836
        %v3838 = vrot.slane %v3824, %v3837
        %v3839 = vcombine.low %v3831, %v3838
        %3840 = vrot.lane.b32.xlu0 %v3839, 104
        %v3841 = vpop.permute.xlu0 %3840
        %v3842 = vsel %vm794, %v3841, 0
        %3844 = vmatprep.subr.mxu0 0.0
        %3845 = vmatpush1.msra.mxu0 %v2280
        %3846 = vmatprep.subr.mxu0 0.0
        %3847 = vmatpush1.msra.mxu0 %v2286
        %3848 = vmatprep.subr.mxu0 0.0
        %3849 = vmatpush1.msra.mxu0 0.0
        %3850 = vmatprep.subr.mxu0 0.0
        %3851 = vmatpush1.msra.mxu0 0.0
        %3852 = vmatprep.subr.mxu0 0.0
        %3853 = vmatpush1.msra.mxu0 0.0
        %3854 = vmatprep.subr.mxu0 0.0
        %3855 = vmatpush1.msra.mxu0 0.0
        %3856 = vmatprep.subr.mxu0 0.0
        %3857 = vmatpush1.msra.mxu0 0.0
        %3858 = vmatprep.subr.mxu0 0.0
        %3859 = vmatpush1.msra.mxu0 0.0
        %3860 = vmatprep.subr.mxu0 0.0
        %3861 = vmatpush1.msra.mxu0 0.0
        %3862 = vmatprep.subr.mxu0 0.0
        %3863 = vmatpush1.msra.mxu0 0.0
        %3864 = vmatprep.subr.mxu0 0.0
        %3865 = vmatpush1.msra.mxu0 0.0
        %3866 = vmatprep.subr.mxu0 0.0
        %3867 = vmatpush1.msra.mxu0 0.0
        %3868 = vmatprep.subr.mxu0 0.0
        %3869 = vmatpush1.msra.mxu0 0.0
        %3870 = vmatprep.subr.mxu0 0.0
        %3871 = vmatpush1.msra.mxu0 0.0
        %3872 = vmatprep.subr.mxu0 0.0
        %3873 = vmatpush1.msra.mxu0 0.0
        %3874 = vmatprep.subr.mxu0 0.0
        %3875 = vmatpush1.msra.mxu0 0.0
        %3876 = vmatprep.subr.mxu0 0.0
        %3877 = vmatpush1.msra.mxu0 0.0
        %3878 = vmatprep.subr.mxu0 0.0
        %3879 = vmatpush1.msra.mxu0 0.0
        %3880 = vmatprep.subr.mxu0 0.0
        %3881 = vmatpush1.msra.mxu0 0.0
        %3882 = vmatprep.subr.mxu0 0.0
        %3883 = vmatpush1.msra.mxu0 0.0
        %3884 = vmatprep.subr.mxu0 0.0
        %3885 = vmatpush1.msra.mxu0 0.0
        %3886 = vmatprep.subr.mxu0 0.0
        %3887 = vmatpush1.msra.mxu0 0.0
        %3888 = vmatprep.subr.mxu0 0.0
        %3889 = vmatpush1.msra.mxu0 0.0
        %3890 = vmatprep.subr.mxu0 0.0
        %3891 = vmatpush1.msra.mxu0 0.0
        %3892 = vmatprep.subr.mxu0 0.0
        %3893 = vmatpush1.msra.mxu0 0.0
        %3894 = vmatprep.subr.mxu0 0.0
        %3895 = vmatpush1.msra.mxu0 0.0
        %3896 = vmatprep.subr.mxu0 0.0
        %3897 = vmatpush1.msra.mxu0 0.0
        %3898 = vmatprep.subr.mxu0 0.0
        %3899 = vmatpush1.msra.mxu0 0.0
        %3900 = vmatprep.subr.mxu0 0.0
        %3901 = vmatpush1.msra.mxu0 0.0
        %3902 = vmatprep.subr.mxu0 0.0
        %3903 = vmatpush1.msra.mxu0 0.0
        %3904 = vmatprep.subr.mxu0 0.0
        %3905 = vmatpush1.msra.mxu0 0.0
        %3906 = vmatprep.subr.mxu0 0.0
        %3907 = vmatpush1.msra.mxu0 0.0
        %3908 = vmatprep.mubr.f32.mxu0 0.0
        %3909 = vmatmul.mubr.f32.gmra.mrb[0].mxu0 %v3842
        %v3910 = vpop.f32.mrb[0].mxu0
        %v3911 = vadd.f32 0.0, %v3910
        %v3912 = vpop.f32.mrb[0].mxu0
        %3913 = vdwg.mxu0
        %v3915 = vcombine.high %v3911, %v3911
        %v3917 = vunpack.c.l.s4 1966171168
        %v3918 = vunpack.c.0.s8 %v3917
        %v3919 = vlaneseq
        %v3920 = vshrl.u32 %v3919, 7
        %v3921 = vsub.s32 %v3918, %v3920
        %v3922 = vrot.slane %v3911, %v3921
        %v3924 = vunpack.c.l.s4 1966171168
        %v3925 = vunpack.c.0.s8 %v3924
        %v3926 = vlaneseq
        %v3927 = vshrl.u32 %v3926, 7
        %v3928 = vsub.s32 %v3925, %v3927
        %v3929 = vrot.slane %v3915, %v3928
        %v3930 = vcombine.high %v3922, %v3922
        %v3931 = vcombine.high %v3929, %v3929
        %v3933 = vunpack.c.l.s4 1966171168
        %v3934 = vunpack.c.0.s8 %v3933
        %v3935 = vlaneseq
        %v3936 = vshrl.u32 %v3935, 7
        %v3937 = vsub.s32 %v3934, %v3936
        %v3938 = vrot.slane %v3922, %v3937
        %v3940 = vunpack.c.l.s4 1966171168
        %v3941 = vunpack.c.0.s8 %v3940
        %v3942 = vlaneseq
        %v3943 = vshrl.u32 %v3942, 7
        %v3944 = vsub.s32 %v3941, %v3943
        %v3945 = vrot.slane %v3929, %v3944
        %v3947 = vunpack.c.l.s4 1966171168
        %v3948 = vunpack.c.0.s8 %v3947
        %v3949 = vlaneseq
        %v3950 = vshrl.u32 %v3949, 7
        %v3951 = vsub.s32 %v3948, %v3950
        %v3952 = vrot.slane %v3930, %v3951
        %v3954 = vunpack.c.l.s4 1966171168
        %v3955 = vunpack.c.0.s8 %v3954
        %v3956 = vlaneseq
        %v3957 = vshrl.u32 %v3956, 7
        %v3958 = vsub.s32 %v3955, %v3957
        %v3959 = vrot.slane %v3931, %v3958
        %v3960 = vcombine.high %v3938, %v3938
        %v3961 = vcombine.high %v3945, %v3945
        %v3962 = vcombine.high %v3952, %v3952
        %v3963 = vcombine.high %v3959, %v3959
        %v3972 = vadd.f32 %v1911, %v3938
        %v3973 = vadd.f32 %v1977, %v3952
        %v3974 = vadd.f32 %v2024, %v3960
        %v3975 = vadd.f32 %v2065, %v3962
        %v3976 = vadd.f32 %v2100, %v3945
        %v3977 = vadd.f32 %v2125, %v3959
        %v3978 = vadd.f32 %v2172, %v3961
        %v3979 = vadd.f32 %v2219, %v3963
        %v3980 = vxor.u32 %v3972, 2147483648
        %v3981 = vxor.u32 %v3973, 2147483648
        %v3982 = vxor.u32 %v3974, 2147483648
        %v3983 = vxor.u32 %v3975, 2147483648
        %v3984 = vxor.u32 %v3976, 2147483648
        %v3985 = vxor.u32 %v3977, 2147483648
        %v3986 = vxor.u32 %v3978, 2147483648
        %v3987 = vxor.u32 %v3979, 2147483648
        %v3988 = vmul.f32 %v3980, 1.442695
        %v3989 = vpow.pop %v3988
        %v3990 = vmul.f32 %v3981, 1.442695
        %v3991 = vpow.pop %v3990
        %v3992 = vmul.f32 %v3982, 1.442695
        %v3993 = vpow.pop %v3992
        %v3994 = vmul.f32 %v3983, 1.442695
        %v3995 = vpow.pop %v3994
        %v3996 = vmul.f32 %v3984, 1.442695
        %v3997 = vpow.pop %v3996
        %v3998 = vmul.f32 %v3985, 1.442695
        %v3999 = vpow.pop %v3998
        %v4000 = vmul.f32 %v3986, 1.442695
        %v4001 = vpow.pop %v4000
        %v4002 = vmul.f32 %v3987, 1.442695
        %v4003 = vpow.pop %v4002
        %v4004 = vadd.f32 %v3989, 1.0
        %v4005 = vadd.f32 %v3991, 1.0
        %v4006 = vadd.f32 %v3993, 1.0
        %v4007 = vadd.f32 %v3995, 1.0
        %v4008 = vadd.f32 %v3997, 1.0
        %v4009 = vadd.f32 %v3999, 1.0
        %v4010 = vadd.f32 %v4001, 1.0
        %v4011 = vadd.f32 %v4003, 1.0
        %v4012 = vrcp.pop %v4004
        %v4013 = vmul.f32 1.0, %v4012
        %v4014 = vrcp.pop %v4005
        %v4015 = vmul.f32 1.0, %v4014
        %v4016 = vrcp.pop %v4006
        %v4017 = vmul.f32 1.0, %v4016
        %v4018 = vrcp.pop %v4007
        %v4019 = vmul.f32 1.0, %v4018
        %v4020 = vrcp.pop %v4008
        %v4021 = vmul.f32 1.0, %v4020
        %v4022 = vrcp.pop %v4009
        %v4023 = vmul.f32 1.0, %v4022
        %v4024 = vrcp.pop %v4010
        %v4025 = vmul.f32 1.0, %v4024
        %v4026 = vrcp.pop %v4011
        %v4027 = vmul.f32 1.0, %v4026
        %v4028 = vtanh.pop %v3972
        %v4029 = vtanh.pop %v3973
        %v4030 = vtanh.pop %v3974
        %v4031 = vtanh.pop %v3975
        %v4032 = vtanh.pop %v3976
        %v4033 = vtanh.pop %v3977
        %v4034 = vtanh.pop %v3978
        %v4035 = vtanh.pop %v3979
        %v4036 = vmul.f32 %v4013, %v3727
        %v4037 = vmul.f32 %v4015, %v3728
        %v4038 = vmul.f32 %v4017, %v3729
        %v4039 = vmul.f32 %v4019, %v3730
        %v4040 = vmul.f32 %v4021, %v3731
        %v4041 = vmul.f32 %v4023, %v3732
        %v4042 = vmul.f32 %v4025, %v3733
        %v4043 = vmul.f32 %v4027, %v3734
        %4052 = vrot.lane.b32.xlu0 %v4028, 92
        %v4053 = vpop.permute.xlu0 %4052
        %4054 = vrot.lane.b32.xlu0 %v4029, 92
        %v4055 = vpop.permute.xlu0 %4054
        %4056 = vrot.lane.b32.xlu0 %v4030, 92
        %v4057 = vpop.permute.xlu0 %4056
        %4058 = vrot.lane.b32.xlu0 %v4031, 92
        %v4059 = vpop.permute.xlu0 %4058
        %4060 = vrot.lane.b32.xlu0 %v4032, 92
        %v4061 = vpop.permute.xlu0 %4060
        %4062 = vrot.lane.b32.xlu0 %v4033, 92
        %v4063 = vpop.permute.xlu0 %4062
        %4064 = vrot.lane.b32.xlu0 %v4034, 92
        %v4065 = vpop.permute.xlu0 %4064
        %4066 = vrot.lane.b32.xlu0 %v4035, 92
        %v4067 = vpop.permute.xlu0 %4066
        %v4076 = vmul.f32 %v4013, %v4053
        %v4077 = vmul.f32 %v4015, %v4055
        %v4078 = vmul.f32 %v4017, %v4057
        %v4079 = vmul.f32 %v4019, %v4059
        %v4080 = vmul.f32 %v4021, %v4061
        %v4081 = vmul.f32 %v4023, %v4063
        %v4082 = vmul.f32 %v4025, %v4065
        %v4083 = vmul.f32 %v4027, %v4067
        %4092 = vrot.lane.b32.xlu0 %v4076, 12
        %v4093 = vpop.permute.xlu0 %4092
        %4094 = vrot.lane.b32.xlu0 %v4077, 12
        %v4095 = vpop.permute.xlu0 %4094
        %4096 = vrot.lane.b32.xlu0 %v4078, 12
        %v4097 = vpop.permute.xlu0 %4096
        %4098 = vrot.lane.b32.xlu0 %v4079, 12
        %v4099 = vpop.permute.xlu0 %4098
        %4100 = vrot.lane.b32.xlu0 %v4080, 12
        %v4101 = vpop.permute.xlu0 %4100
        %4102 = vrot.lane.b32.xlu0 %v4081, 12
        %v4103 = vpop.permute.xlu0 %4102
        %4104 = vrot.lane.b32.xlu0 %v4082, 12
        %v4105 = vpop.permute.xlu0 %4104
        %4106 = vrot.lane.b32.xlu0 %v4083, 12
        %v4107 = vpop.permute.xlu0 %4106
        %v4116 = vadd.f32 %v4036, %v4093
        %v4117 = vadd.f32 %v4037, %v4095
        %v4118 = vadd.f32 %v4038, %v4097
        %v4119 = vadd.f32 %v4039, %v4099
        %v4120 = vadd.f32 %v4040, %v4101
        %v4121 = vadd.f32 %v4041, %v4103
        %v4122 = vadd.f32 %v4042, %v4105
        %v4123 = vadd.f32 %v4043, %v4107
        %v4124 = vtanh.pop %v4116
        %v4125 = vtanh.pop %v4117
        %v4126 = vtanh.pop %v4118
        %v4127 = vtanh.pop %v4119
        %v4128 = vtanh.pop %v4120
        %v4129 = vtanh.pop %v4121
        %v4130 = vtanh.pop %v4122
        %v4131 = vtanh.pop %v4123
        %4140 = vrot.lane.b32.xlu0 %v4124, 12
        %v4141 = vpop.permute.xlu0 %4140
        %4142 = vrot.lane.b32.xlu0 %v4125, 12
        %v4143 = vpop.permute.xlu0 %4142
        %4144 = vrot.lane.b32.xlu0 %v4126, 12
        %v4145 = vpop.permute.xlu0 %4144
        %4146 = vrot.lane.b32.xlu0 %v4127, 12
        %v4147 = vpop.permute.xlu0 %4146
        %4148 = vrot.lane.b32.xlu0 %v4128, 12
        %v4149 = vpop.permute.xlu0 %4148
        %4150 = vrot.lane.b32.xlu0 %v4129, 12
        %v4151 = vpop.permute.xlu0 %4150
        %4152 = vrot.lane.b32.xlu0 %v4130, 12
        %v4153 = vpop.permute.xlu0 %4152
        %4154 = vrot.lane.b32.xlu0 %v4131, 12
        %v4155 = vpop.permute.xlu0 %4154
        %v4164 = vmul.f32 %v4013, %v4141
        %v4165 = vmul.f32 %v4015, %v4143
        %v4166 = vmul.f32 %v4017, %v4145
        %v4167 = vmul.f32 %v4019, %v4147
        %v4168 = vmul.f32 %v4021, %v4149
        %v4169 = vmul.f32 %v4023, %v4151
        %v4170 = vmul.f32 %v4025, %v4153
        %v4171 = vmul.f32 %v4027, %v4155
        %v4180 = vcombine.low %v4164, %v4165
        %v4181 = vcombine.low %v4166, %v4167
        %v4182 = vcombine.low %v4168, %v4169
        %v4183 = vcombine.low %v4170, %v4171
        %v4185 = vunpack.c.l.s4 1966171168
        %v4186 = vunpack.c.0.s8 %v4185
        %v4187 = vlaneseq
        %v4188 = vshrl.u32 %v4187, 7
        %v4189 = vsub.s32 %v4186, %v4188
        %v4190 = vrot.slane %v4180, %v4189
        %v4192 = vunpack.c.l.s4 1966171168
        %v4193 = vunpack.c.0.s8 %v4192
        %v4194 = vlaneseq
        %v4195 = vshrl.u32 %v4194, 7
        %v4196 = vsub.s32 %v4193, %v4195
        %v4197 = vrot.slane %v4181, %v4196
        %v4199 = vunpack.c.l.s4 1966171168
        %v4200 = vunpack.c.0.s8 %v4199
        %v4201 = vlaneseq
        %v4202 = vshrl.u32 %v4201, 7
        %v4203 = vsub.s32 %v4200, %v4202
        %v4204 = vrot.slane %v4182, %v4203
        %v4206 = vunpack.c.l.s4 1966171168
        %v4207 = vunpack.c.0.s8 %v4206
        %v4208 = vlaneseq
        %v4209 = vshrl.u32 %v4208, 7
        %v4210 = vsub.s32 %v4207, %v4209
        %v4211 = vrot.slane %v4183, %v4210
        %v4212 = vcombine.low %v4190, %v4197
        %v4213 = vcombine.low %v4204, %v4211
        %v4215 = vunpack.c.l.s4 1966171168
        %v4216 = vunpack.c.0.s8 %v4215
        %v4217 = vlaneseq
        %v4218 = vshrl.u32 %v4217, 7
        %v4219 = vsub.s32 %v4216, %v4218
        %v4220 = vrot.slane %v4212, %v4219
        %v4222 = vunpack.c.l.s4 1966171168
        %v4223 = vunpack.c.0.s8 %v4222
        %v4224 = vlaneseq
        %v4225 = vshrl.u32 %v4224, 7
        %v4226 = vsub.s32 %v4223, %v4225
        %v4227 = vrot.slane %v4213, %v4226
        %v4228 = vcombine.low %v4220, %v4227
        %4229 = vrot.lane.b32.xlu0 %v4228, 104
        %v4230 = vpop.permute.xlu0 %4229
        %v4231 = vsel %vm794, %v4230, 0
        %4233 = vmatprep.subr.mxu0 0.0
        %4234 = vmatpush1.msra.mxu0 %v2280
        %4235 = vmatprep.subr.mxu0 0.0
        %4236 = vmatpush1.msra.mxu0 %v2286
        %4237 = vmatprep.subr.mxu0 0.0
        %4238 = vmatpush1.msra.mxu0 0.0
        %4239 = vmatprep.subr.mxu0 0.0
        %4240 = vmatpush1.msra.mxu0 0.0
        %4241 = vmatprep.subr.mxu0 0.0
        %4242 = vmatpush1.msra.mxu0 0.0
        %4243 = vmatprep.subr.mxu0 0.0
        %4244 = vmatpush1.msra.mxu0 0.0
        %4245 = vmatprep.subr.mxu0 0.0
        %4246 = vmatpush1.msra.mxu0 0.0
        %4247 = vmatprep.subr.mxu0 0.0
        %4248 = vmatpush1.msra.mxu0 0.0
        %4249 = vmatprep.subr.mxu0 0.0
        %4250 = vmatpush1.msra.mxu0 0.0
        %4251 = vmatprep.subr.mxu0 0.0
        %4252 = vmatpush1.msra.mxu0 0.0
        %4253 = vmatprep.subr.mxu0 0.0
        %4254 = vmatpush1.msra.mxu0 0.0
        %4255 = vmatprep.subr.mxu0 0.0
        %4256 = vmatpush1.msra.mxu0 0.0
        %4257 = vmatprep.subr.mxu0 0.0
        %4258 = vmatpush1.msra.mxu0 0.0
        %4259 = vmatprep.subr.mxu0 0.0
        %4260 = vmatpush1.msra.mxu0 0.0
        %4261 = vmatprep.subr.mxu0 0.0
        %4262 = vmatpush1.msra.mxu0 0.0
        %4263 = vmatprep.subr.mxu0 0.0
        %4264 = vmatpush1.msra.mxu0 0.0
        %4265 = vmatprep.subr.mxu0 0.0
        %4266 = vmatpush1.msra.mxu0 0.0
        %4267 = vmatprep.subr.mxu0 0.0
        %4268 = vmatpush1.msra.mxu0 0.0
        %4269 = vmatprep.subr.mxu0 0.0
        %4270 = vmatpush1.msra.mxu0 0.0
        %4271 = vmatprep.subr.mxu0 0.0
        %4272 = vmatpush1.msra.mxu0 0.0
        %4273 = vmatprep.subr.mxu0 0.0
        %4274 = vmatpush1.msra.mxu0 0.0
        %4275 = vmatprep.subr.mxu0 0.0
        %4276 = vmatpush1.msra.mxu0 0.0
        %4277 = vmatprep.subr.mxu0 0.0
        %4278 = vmatpush1.msra.mxu0 0.0
        %4279 = vmatprep.subr.mxu0 0.0
        %4280 = vmatpush1.msra.mxu0 0.0
        %4281 = vmatprep.subr.mxu0 0.0
        %4282 = vmatpush1.msra.mxu0 0.0
        %4283 = vmatprep.subr.mxu0 0.0
        %4284 = vmatpush1.msra.mxu0 0.0
        %4285 = vmatprep.subr.mxu0 0.0
        %4286 = vmatpush1.msra.mxu0 0.0
        %4287 = vmatprep.subr.mxu0 0.0
        %4288 = vmatpush1.msra.mxu0 0.0
        %4289 = vmatprep.subr.mxu0 0.0
        %4290 = vmatpush1.msra.mxu0 0.0
        %4291 = vmatprep.subr.mxu0 0.0
        %4292 = vmatpush1.msra.mxu0 0.0
        %4293 = vmatprep.subr.mxu0 0.0
        %4294 = vmatpush1.msra.mxu0 0.0
        %4295 = vmatprep.subr.mxu0 0.0
        %4296 = vmatpush1.msra.mxu0 0.0
        %4297 = vmatprep.mubr.f32.mxu0 0.0
        %4298 = vmatmul.mubr.f32.gmra.mrb[0].mxu0 %v4231
        %v4299 = vpop.f32.mrb[0].mxu0
        %v4300 = vadd.f32 0.0, %v4299
        %v4301 = vpop.f32.mrb[0].mxu0
        %4302 = vdwg.mxu0
        %v4304 = vcombine.high %v4300, %v4300
        %v4306 = vunpack.c.l.s4 1966171168
        %v4307 = vunpack.c.0.s8 %v4306
        %v4308 = vlaneseq
        %v4309 = vshrl.u32 %v4308, 7
        %v4310 = vsub.s32 %v4307, %v4309
        %v4311 = vrot.slane %v4300, %v4310
        %v4313 = vunpack.c.l.s4 1966171168
        %v4314 = vunpack.c.0.s8 %v4313
        %v4315 = vlaneseq
        %v4316 = vshrl.u32 %v4315, 7
        %v4317 = vsub.s32 %v4314, %v4316
        %v4318 = vrot.slane %v4304, %v4317
        %v4319 = vcombine.high %v4311, %v4311
        %v4320 = vcombine.high %v4318, %v4318
        %v4322 = vunpack.c.l.s4 1966171168
        %v4323 = vunpack.c.0.s8 %v4322
        %v4324 = vlaneseq
        %v4325 = vshrl.u32 %v4324, 7
        %v4326 = vsub.s32 %v4323, %v4325
        %v4327 = vrot.slane %v4311, %v4326
        %v4329 = vunpack.c.l.s4 1966171168
        %v4330 = vunpack.c.0.s8 %v4329
        %v4331 = vlaneseq
        %v4332 = vshrl.u32 %v4331, 7
        %v4333 = vsub.s32 %v4330, %v4332
        %v4334 = vrot.slane %v4318, %v4333
        %v4336 = vunpack.c.l.s4 1966171168
        %v4337 = vunpack.c.0.s8 %v4336
        %v4338 = vlaneseq
        %v4339 = vshrl.u32 %v4338, 7
        %v4340 = vsub.s32 %v4337, %v4339
        %v4341 = vrot.slane %v4319, %v4340
        %v4343 = vunpack.c.l.s4 1966171168
        %v4344 = vunpack.c.0.s8 %v4343
        %v4345 = vlaneseq
        %v4346 = vshrl.u32 %v4345, 7
        %v4347 = vsub.s32 %v4344, %v4346
        %v4348 = vrot.slane %v4320, %v4347
        %v4349 = vcombine.high %v4327, %v4327
        %v4350 = vcombine.high %v4334, %v4334
        %v4351 = vcombine.high %v4341, %v4341
        %v4352 = vcombine.high %v4348, %v4348
        %v4361 = vadd.f32 %v1925, %v4327
        %v4362 = vadd.f32 %v1960, %v4341
        %v4363 = vadd.f32 %v2026, %v4349
        %v4364 = vadd.f32 %v2073, %v4351
        %v4365 = vadd.f32 %v2114, %v4334
        %v4366 = vadd.f32 %v2149, %v4348
        %v4367 = vadd.f32 %v2174, %v4350
        %v4368 = vadd.f32 %v2221, %v4352
        %v4369 = vxor.u32 %v4361, 2147483648
        %v4370 = vxor.u32 %v4362, 2147483648
        %v4371 = vxor.u32 %v4363, 2147483648
        %v4372 = vxor.u32 %v4364, 2147483648
        %v4373 = vxor.u32 %v4365, 2147483648
        %v4374 = vxor.u32 %v4366, 2147483648
        %v4375 = vxor.u32 %v4367, 2147483648
        %v4376 = vxor.u32 %v4368, 2147483648
        %v4377 = vmul.f32 %v4369, 1.442695
        %v4378 = vpow.pop %v4377
        %v4379 = vmul.f32 %v4370, 1.442695
        %v4380 = vpow.pop %v4379
        %v4381 = vmul.f32 %v4371, 1.442695
        %v4382 = vpow.pop %v4381
        %v4383 = vmul.f32 %v4372, 1.442695
        %v4384 = vpow.pop %v4383
        %v4385 = vmul.f32 %v4373, 1.442695
        %v4386 = vpow.pop %v4385
        %v4387 = vmul.f32 %v4374, 1.442695
        %v4388 = vpow.pop %v4387
        %v4389 = vmul.f32 %v4375, 1.442695
        %v4390 = vpow.pop %v4389
        %v4391 = vmul.f32 %v4376, 1.442695
        %v4392 = vpow.pop %v4391
        %v4393 = vadd.f32 %v4378, 1.0
        %v4394 = vadd.f32 %v4380, 1.0
        %v4395 = vadd.f32 %v4382, 1.0
        %v4396 = vadd.f32 %v4384, 1.0
        %v4397 = vadd.f32 %v4386, 1.0
        %v4398 = vadd.f32 %v4388, 1.0
        %v4399 = vadd.f32 %v4390, 1.0
        %v4400 = vadd.f32 %v4392, 1.0
        %v4401 = vrcp.pop %v4393
        %v4402 = vmul.f32 1.0, %v4401
        %v4403 = vrcp.pop %v4394
        %v4404 = vmul.f32 1.0, %v4403
        %v4405 = vrcp.pop %v4395
        %v4406 = vmul.f32 1.0, %v4405
        %v4407 = vrcp.pop %v4396
        %v4408 = vmul.f32 1.0, %v4407
        %v4409 = vrcp.pop %v4397
        %v4410 = vmul.f32 1.0, %v4409
        %v4411 = vrcp.pop %v4398
        %v4412 = vmul.f32 1.0, %v4411
        %v4413 = vrcp.pop %v4399
        %v4414 = vmul.f32 1.0, %v4413
        %v4415 = vrcp.pop %v4400
        %v4416 = vmul.f32 1.0, %v4415
        %v4417 = vtanh.pop %v4361
        %v4418 = vtanh.pop %v4362
        %v4419 = vtanh.pop %v4363
        %v4420 = vtanh.pop %v4364
        %v4421 = vtanh.pop %v4365
        %v4422 = vtanh.pop %v4366
        %v4423 = vtanh.pop %v4367
        %v4424 = vtanh.pop %v4368
        %v4425 = vmul.f32 %v4402, %v4116
        %v4426 = vmul.f32 %v4404, %v4117
        %v4427 = vmul.f32 %v4406, %v4118
        %v4428 = vmul.f32 %v4408, %v4119
        %v4429 = vmul.f32 %v4410, %v4120
        %v4430 = vmul.f32 %v4412, %v4121
        %v4431 = vmul.f32 %v4414, %v4122
        %v4432 = vmul.f32 %v4416, %v4123
        %4441 = vrot.lane.b32.xlu0 %v4417, 92
        %v4442 = vpop.permute.xlu0 %4441
        %4443 = vrot.lane.b32.xlu0 %v4418, 92
        %v4444 = vpop.permute.xlu0 %4443
        %4445 = vrot.lane.b32.xlu0 %v4419, 92
        %v4446 = vpop.permute.xlu0 %4445
        %4447 = vrot.lane.b32.xlu0 %v4420, 92
        %v4448 = vpop.permute.xlu0 %4447
        %4449 = vrot.lane.b32.xlu0 %v4421, 92
        %v4450 = vpop.permute.xlu0 %4449
        %4451 = vrot.lane.b32.xlu0 %v4422, 92
        %v4452 = vpop.permute.xlu0 %4451
        %4453 = vrot.lane.b32.xlu0 %v4423, 92
        %v4454 = vpop.permute.xlu0 %4453
        %4455 = vrot.lane.b32.xlu0 %v4424, 92
        %v4456 = vpop.permute.xlu0 %4455
        %v4465 = vmul.f32 %v4402, %v4442
        %v4466 = vmul.f32 %v4404, %v4444
        %v4467 = vmul.f32 %v4406, %v4446
        %v4468 = vmul.f32 %v4408, %v4448
        %v4469 = vmul.f32 %v4410, %v4450
        %v4470 = vmul.f32 %v4412, %v4452
        %v4471 = vmul.f32 %v4414, %v4454
        %v4472 = vmul.f32 %v4416, %v4456
        %4481 = vrot.lane.b32.xlu0 %v4465, 12
        %v4482 = vpop.permute.xlu0 %4481
        %4483 = vrot.lane.b32.xlu0 %v4466, 12
        %v4484 = vpop.permute.xlu0 %4483
        %4485 = vrot.lane.b32.xlu0 %v4467, 12
        %v4486 = vpop.permute.xlu0 %4485
        %4487 = vrot.lane.b32.xlu0 %v4468, 12
        %v4488 = vpop.permute.xlu0 %4487
        %4489 = vrot.lane.b32.xlu0 %v4469, 12
        %v4490 = vpop.permute.xlu0 %4489
        %4491 = vrot.lane.b32.xlu0 %v4470, 12
        %v4492 = vpop.permute.xlu0 %4491
        %4493 = vrot.lane.b32.xlu0 %v4471, 12
        %v4494 = vpop.permute.xlu0 %4493
        %4495 = vrot.lane.b32.xlu0 %v4472, 12
        %v4496 = vpop.permute.xlu0 %4495
        %v4505 = vadd.f32 %v4425, %v4482
        %v4506 = vadd.f32 %v4426, %v4484
        %v4507 = vadd.f32 %v4427, %v4486
        %v4508 = vadd.f32 %v4428, %v4488
        %v4509 = vadd.f32 %v4429, %v4490
        %v4510 = vadd.f32 %v4430, %v4492
        %v4511 = vadd.f32 %v4431, %v4494
        %v4512 = vadd.f32 %v4432, %v4496
        %v4513 = vtanh.pop %v4505
        %v4514 = vtanh.pop %v4506
        %v4515 = vtanh.pop %v4507
        %v4516 = vtanh.pop %v4508
        %v4517 = vtanh.pop %v4509
        %v4518 = vtanh.pop %v4510
        %v4519 = vtanh.pop %v4511
        %v4520 = vtanh.pop %v4512
        %4529 = vrot.lane.b32.xlu0 %v4513, 12
        %v4530 = vpop.permute.xlu0 %4529
        %4531 = vrot.lane.b32.xlu0 %v4514, 12
        %v4532 = vpop.permute.xlu0 %4531
        %4533 = vrot.lane.b32.xlu0 %v4515, 12
        %v4534 = vpop.permute.xlu0 %4533
        %4535 = vrot.lane.b32.xlu0 %v4516, 12
        %v4536 = vpop.permute.xlu0 %4535
        %4537 = vrot.lane.b32.xlu0 %v4517, 12
        %v4538 = vpop.permute.xlu0 %4537
        %4539 = vrot.lane.b32.xlu0 %v4518, 12
        %v4540 = vpop.permute.xlu0 %4539
        %4541 = vrot.lane.b32.xlu0 %v4519, 12
        %v4542 = vpop.permute.xlu0 %4541
        %4543 = vrot.lane.b32.xlu0 %v4520, 12
        %v4544 = vpop.permute.xlu0 %4543
        %v4553 = vmul.f32 %v4402, %v4530
        %v4554 = vmul.f32 %v4404, %v4532
        %v4555 = vmul.f32 %v4406, %v4534
        %v4556 = vmul.f32 %v4408, %v4536
        %v4557 = vmul.f32 %v4410, %v4538
        %v4558 = vmul.f32 %v4412, %v4540
        %v4559 = vmul.f32 %v4414, %v4542
        %v4560 = vmul.f32 %v4416, %v4544
        %v4569 = vcombine.low %v4553, %v4554
        %v4570 = vcombine.low %v4555, %v4556
        %v4571 = vcombine.low %v4557, %v4558
        %v4572 = vcombine.low %v4559, %v4560
        %v4574 = vunpack.c.l.s4 1966171168
        %v4575 = vunpack.c.0.s8 %v4574
        %v4576 = vlaneseq
        %v4577 = vshrl.u32 %v4576, 7
        %v4578 = vsub.s32 %v4575, %v4577
        %v4579 = vrot.slane %v4569, %v4578
        %v4581 = vunpack.c.l.s4 1966171168
        %v4582 = vunpack.c.0.s8 %v4581
        %v4583 = vlaneseq
        %v4584 = vshrl.u32 %v4583, 7
        %v4585 = vsub.s32 %v4582, %v4584
        %v4586 = vrot.slane %v4570, %v4585
        %v4588 = vunpack.c.l.s4 1966171168
        %v4589 = vunpack.c.0.s8 %v4588
        %v4590 = vlaneseq
        %v4591 = vshrl.u32 %v4590, 7
        %v4592 = vsub.s32 %v4589, %v4591
        %v4593 = vrot.slane %v4571, %v4592
        %v4595 = vunpack.c.l.s4 1966171168
        %v4596 = vunpack.c.0.s8 %v4595
        %v4597 = vlaneseq
        %v4598 = vshrl.u32 %v4597, 7
        %v4599 = vsub.s32 %v4596, %v4598
        %v4600 = vrot.slane %v4572, %v4599
        %v4601 = vcombine.low %v4579, %v4586
        %v4602 = vcombine.low %v4593, %v4600
        %v4604 = vunpack.c.l.s4 1966171168
        %v4605 = vunpack.c.0.s8 %v4604
        %v4606 = vlaneseq
        %v4607 = vshrl.u32 %v4606, 7
        %v4608 = vsub.s32 %v4605, %v4607
        %v4609 = vrot.slane %v4601, %v4608
        %v4611 = vunpack.c.l.s4 1966171168
        %v4612 = vunpack.c.0.s8 %v4611
        %v4613 = vlaneseq
        %v4614 = vshrl.u32 %v4613, 7
        %v4615 = vsub.s32 %v4612, %v4614
        %v4616 = vrot.slane %v4602, %v4615
        %v4617 = vcombine.low %v4609, %v4616
        %4618 = vrot.lane.b32.xlu0 %v4617, 104
        %v4619 = vpop.permute.xlu0 %4618
        %v4620 = vsel %vm794, %v4619, 0
        %4622 = vmatprep.subr.mxu0 0.0
        %4623 = vmatpush1.msra.mxu0 %v2280
        %4624 = vmatprep.subr.mxu0 0.0
        %4625 = vmatpush1.msra.mxu0 %v2286
        %4626 = vmatprep.subr.mxu0 0.0
        %4627 = vmatpush1.msra.mxu0 0.0
        %4628 = vmatprep.subr.mxu0 0.0
        %4629 = vmatpush1.msra.mxu0 0.0
        %4630 = vmatprep.subr.mxu0 0.0
        %4631 = vmatpush1.msra.mxu0 0.0
        %4632 = vmatprep.subr.mxu0 0.0
        %4633 = vmatpush1.msra.mxu0 0.0
        %4634 = vmatprep.subr.mxu0 0.0
        %4635 = vmatpush1.msra.mxu0 0.0
        %4636 = vmatprep.subr.mxu0 0.0
        %4637 = vmatpush1.msra.mxu0 0.0
        %4638 = vmatprep.subr.mxu0 0.0
        %4639 = vmatpush1.msra.mxu0 0.0
        %4640 = vmatprep.subr.mxu0 0.0
        %4641 = vmatpush1.msra.mxu0 0.0
        %4642 = vmatprep.subr.mxu0 0.0
        %4643 = vmatpush1.msra.mxu0 0.0
        %4644 = vmatprep.subr.mxu0 0.0
        %4645 = vmatpush1.msra.mxu0 0.0
        %4646 = vmatprep.subr.mxu0 0.0
        %4647 = vmatpush1.msra.mxu0 0.0
        %4648 = vmatprep.subr.mxu0 0.0
        %4649 = vmatpush1.msra.mxu0 0.0
        %4650 = vmatprep.subr.mxu0 0.0
        %4651 = vmatpush1.msra.mxu0 0.0
        %4652 = vmatprep.subr.mxu0 0.0
        %4653 = vmatpush1.msra.mxu0 0.0
        %4654 = vmatprep.subr.mxu0 0.0
        %4655 = vmatpush1.msra.mxu0 0.0
        %4656 = vmatprep.subr.mxu0 0.0
        %4657 = vmatpush1.msra.mxu0 0.0
        %4658 = vmatprep.subr.mxu0 0.0
        %4659 = vmatpush1.msra.mxu0 0.0
        %4660 = vmatprep.subr.mxu0 0.0
        %4661 = vmatpush1.msra.mxu0 0.0
        %4662 = vmatprep.subr.mxu0 0.0
        %4663 = vmatpush1.msra.mxu0 0.0
        %4664 = vmatprep.subr.mxu0 0.0
        %4665 = vmatpush1.msra.mxu0 0.0
        %4666 = vmatprep.subr.mxu0 0.0
        %4667 = vmatpush1.msra.mxu0 0.0
        %4668 = vmatprep.subr.mxu0 0.0
        %4669 = vmatpush1.msra.mxu0 0.0
        %4670 = vmatprep.subr.mxu0 0.0
        %4671 = vmatpush1.msra.mxu0 0.0
        %4672 = vmatprep.subr.mxu0 0.0
        %4673 = vmatpush1.msra.mxu0 0.0
        %4674 = vmatprep.subr.mxu0 0.0
        %4675 = vmatpush1.msra.mxu0 0.0
        %4676 = vmatprep.subr.mxu0 0.0
        %4677 = vmatpush1.msra.mxu0 0.0
        %4678 = vmatprep.subr.mxu0 0.0
        %4679 = vmatpush1.msra.mxu0 0.0
        %4680 = vmatprep.subr.mxu0 0.0
        %4681 = vmatpush1.msra.mxu0 0.0
        %4682 = vmatprep.subr.mxu0 0.0
        %4683 = vmatpush1.msra.mxu0 0.0
        %4684 = vmatprep.subr.mxu0 0.0
        %4685 = vmatpush1.msra.mxu0 0.0
        %4686 = vmatprep.mubr.f32.mxu0 0.0
        %4687 = vmatmul.mubr.f32.gmra.mrb[0].mxu0 %v4620
        %v4688 = vpop.f32.mrb[0].mxu0
        %v4689 = vadd.f32 0.0, %v4688
        %v4690 = vpop.f32.mrb[0].mxu0
        %4691 = vdwg.mxu0
        %v4693 = vcombine.high %v4689, %v4689
        %v4695 = vunpack.c.l.s4 1966171168
        %v4696 = vunpack.c.0.s8 %v4695
        %v4697 = vlaneseq
        %v4698 = vshrl.u32 %v4697, 7
        %v4699 = vsub.s32 %v4696, %v4698
        %v4700 = vrot.slane %v4689, %v4699
        %v4702 = vunpack.c.l.s4 1966171168
        %v4703 = vunpack.c.0.s8 %v4702
        %v4704 = vlaneseq
        %v4705 = vshrl.u32 %v4704, 7
        %v4706 = vsub.s32 %v4703, %v4705
        %v4707 = vrot.slane %v4693, %v4706
        %v4708 = vcombine.high %v4700, %v4700
        %v4709 = vcombine.high %v4707, %v4707
        %v4711 = vunpack.c.l.s4 1966171168
        %v4712 = vunpack.c.0.s8 %v4711
        %v4713 = vlaneseq
        %v4714 = vshrl.u32 %v4713, 7
        %v4715 = vsub.s32 %v4712, %v4714
        %v4716 = vrot.slane %v4700, %v4715
        %v4718 = vunpack.c.l.s4 1966171168
        %v4719 = vunpack.c.0.s8 %v4718
        %v4720 = vlaneseq
        %v4721 = vshrl.u32 %v4720, 7
        %v4722 = vsub.s32 %v4719, %v4721
        %v4723 = vrot.slane %v4707, %v4722
        %v4725 = vunpack.c.l.s4 1966171168
        %v4726 = vunpack.c.0.s8 %v4725
        %v4727 = vlaneseq
        %v4728 = vshrl.u32 %v4727, 7
        %v4729 = vsub.s32 %v4726, %v4728
        %v4730 = vrot.slane %v4708, %v4729
        %v4732 = vunpack.c.l.s4 1966171168
        %v4733 = vunpack.c.0.s8 %v4732
        %v4734 = vlaneseq
        %v4735 = vshrl.u32 %v4734, 7
        %v4736 = vsub.s32 %v4733, %v4735
        %v4737 = vrot.slane %v4709, %v4736
        %v4738 = vcombine.high %v4716, %v4716
        %v4739 = vcombine.high %v4723, %v4723
        %v4740 = vcombine.high %v4730, %v4730
        %v4741 = vcombine.high %v4737, %v4737
        %v4750 = vadd.f32 %v1927, %v4716
        %v4751 = vadd.f32 %v1974, %v4730
        %v4752 = vadd.f32 %v2009, %v4738
        %v4753 = vadd.f32 %v2075, %v4740
        %v4754 = vadd.f32 %v2122, %v4723
        %v4755 = vadd.f32 %v2163, %v4737
        %v4756 = vadd.f32 %v2198, %v4739
        %v4757 = vadd.f32 %v2223, %v4741
        %v4758 = vxor.u32 %v4750, 2147483648
        %v4759 = vxor.u32 %v4751, 2147483648
        %v4760 = vxor.u32 %v4752, 2147483648
        %v4761 = vxor.u32 %v4753, 2147483648
        %v4762 = vxor.u32 %v4754, 2147483648
        %v4763 = vxor.u32 %v4755, 2147483648
        %v4764 = vxor.u32 %v4756, 2147483648
        %v4765 = vxor.u32 %v4757, 2147483648
        %v4766 = vmul.f32 %v4758, 1.442695
        %v4767 = vpow.pop %v4766
        %v4768 = vmul.f32 %v4759, 1.442695
        %v4769 = vpow.pop %v4768
        %v4770 = vmul.f32 %v4760, 1.442695
        %v4771 = vpow.pop %v4770
        %v4772 = vmul.f32 %v4761, 1.442695
        %v4773 = vpow.pop %v4772
        %v4774 = vmul.f32 %v4762, 1.442695
        %v4775 = vpow.pop %v4774
        %v4776 = vmul.f32 %v4763, 1.442695
        %v4777 = vpow.pop %v4776
        %v4778 = vmul.f32 %v4764, 1.442695
        %v4779 = vpow.pop %v4778
        %v4780 = vmul.f32 %v4765, 1.442695
        %v4781 = vpow.pop %v4780
        %v4782 = vadd.f32 %v4767, 1.0
        %v4783 = vadd.f32 %v4769, 1.0
        %v4784 = vadd.f32 %v4771, 1.0
        %v4785 = vadd.f32 %v4773, 1.0
        %v4786 = vadd.f32 %v4775, 1.0
        %v4787 = vadd.f32 %v4777, 1.0
        %v4788 = vadd.f32 %v4779, 1.0
        %v4789 = vadd.f32 %v4781, 1.0
        %v4790 = vrcp.pop %v4782
        %v4791 = vmul.f32 1.0, %v4790
        %v4792 = vrcp.pop %v4783
        %v4793 = vmul.f32 1.0, %v4792
        %v4794 = vrcp.pop %v4784
        %v4795 = vmul.f32 1.0, %v4794
        %v4796 = vrcp.pop %v4785
        %v4797 = vmul.f32 1.0, %v4796
        %v4798 = vrcp.pop %v4786
        %v4799 = vmul.f32 1.0, %v4798
        %v4800 = vrcp.pop %v4787
        %v4801 = vmul.f32 1.0, %v4800
        %v4802 = vrcp.pop %v4788
        %v4803 = vmul.f32 1.0, %v4802
        %v4804 = vrcp.pop %v4789
        %v4805 = vmul.f32 1.0, %v4804
        %v4806 = vtanh.pop %v4750
        %v4807 = vtanh.pop %v4751
        %v4808 = vtanh.pop %v4752
        %v4809 = vtanh.pop %v4753
        %v4810 = vtanh.pop %v4754
        %v4811 = vtanh.pop %v4755
        %v4812 = vtanh.pop %v4756
        %v4813 = vtanh.pop %v4757
        %v4814 = vmul.f32 %v4791, %v4505
        %v4815 = vmul.f32 %v4793, %v4506
        %v4816 = vmul.f32 %v4795, %v4507
        %v4817 = vmul.f32 %v4797, %v4508
        %v4818 = vmul.f32 %v4799, %v4509
        %v4819 = vmul.f32 %v4801, %v4510
        %v4820 = vmul.f32 %v4803, %v4511
        %v4821 = vmul.f32 %v4805, %v4512
        %4830 = vrot.lane.b32.xlu0 %v4806, 92
        %v4831 = vpop.permute.xlu0 %4830
        %4832 = vrot.lane.b32.xlu0 %v4807, 92
        %v4833 = vpop.permute.xlu0 %4832
        %4834 = vrot.lane.b32.xlu0 %v4808, 92
        %v4835 = vpop.permute.xlu0 %4834
        %4836 = vrot.lane.b32.xlu0 %v4809, 92
        %v4837 = vpop.permute.xlu0 %4836
        %4838 = vrot.lane.b32.xlu0 %v4810, 92
        %v4839 = vpop.permute.xlu0 %4838
        %4840 = vrot.lane.b32.xlu0 %v4811, 92
        %v4841 = vpop.permute.xlu0 %4840
        %4842 = vrot.lane.b32.xlu0 %v4812, 92
        %v4843 = vpop.permute.xlu0 %4842
        %4844 = vrot.lane.b32.xlu0 %v4813, 92
        %v4845 = vpop.permute.xlu0 %4844
        %v4854 = vmul.f32 %v4791, %v4831
        %v4855 = vmul.f32 %v4793, %v4833
        %v4856 = vmul.f32 %v4795, %v4835
        %v4857 = vmul.f32 %v4797, %v4837
        %v4858 = vmul.f32 %v4799, %v4839
        %v4859 = vmul.f32 %v4801, %v4841
        %v4860 = vmul.f32 %v4803, %v4843
        %v4861 = vmul.f32 %v4805, %v4845
        %4870 = vrot.lane.b32.xlu0 %v4854, 12
        %v4871 = vpop.permute.xlu0 %4870
        %4872 = vrot.lane.b32.xlu0 %v4855, 12
        %v4873 = vpop.permute.xlu0 %4872
        %4874 = vrot.lane.b32.xlu0 %v4856, 12
        %v4875 = vpop.permute.xlu0 %4874
        %4876 = vrot.lane.b32.xlu0 %v4857, 12
        %v4877 = vpop.permute.xlu0 %4876
        %4878 = vrot.lane.b32.xlu0 %v4858, 12
        %v4879 = vpop.permute.xlu0 %4878
        %4880 = vrot.lane.b32.xlu0 %v4859, 12
        %v4881 = vpop.permute.xlu0 %4880
        %4882 = vrot.lane.b32.xlu0 %v4860, 12
        %v4883 = vpop.permute.xlu0 %4882
        %4884 = vrot.lane.b32.xlu0 %v4861, 12
        %v4885 = vpop.permute.xlu0 %4884
        %v4894 = vadd.f32 %v4814, %v4871
        %v4895 = vadd.f32 %v4815, %v4873
        %v4896 = vadd.f32 %v4816, %v4875
        %v4897 = vadd.f32 %v4817, %v4877
        %v4898 = vadd.f32 %v4818, %v4879
        %v4899 = vadd.f32 %v4819, %v4881
        %v4900 = vadd.f32 %v4820, %v4883
        %v4901 = vadd.f32 %v4821, %v4885
        %v4902 = vtanh.pop %v4894
        %v4903 = vtanh.pop %v4895
        %v4904 = vtanh.pop %v4896
        %v4905 = vtanh.pop %v4897
        %v4906 = vtanh.pop %v4898
        %v4907 = vtanh.pop %v4899
        %v4908 = vtanh.pop %v4900
        %v4909 = vtanh.pop %v4901
        %4918 = vrot.lane.b32.xlu0 %v4902, 12
        %v4919 = vpop.permute.xlu0 %4918
        %4920 = vrot.lane.b32.xlu0 %v4903, 12
        %v4921 = vpop.permute.xlu0 %4920
        %4922 = vrot.lane.b32.xlu0 %v4904, 12
        %v4923 = vpop.permute.xlu0 %4922
        %4924 = vrot.lane.b32.xlu0 %v4905, 12
        %v4925 = vpop.permute.xlu0 %4924
        %4926 = vrot.lane.b32.xlu0 %v4906, 12
        %v4927 = vpop.permute.xlu0 %4926
        %4928 = vrot.lane.b32.xlu0 %v4907, 12
        %v4929 = vpop.permute.xlu0 %4928
        %4930 = vrot.lane.b32.xlu0 %v4908, 12
        %v4931 = vpop.permute.xlu0 %4930
        %4932 = vrot.lane.b32.xlu0 %v4909, 12
        %v4933 = vpop.permute.xlu0 %4932
        %v4942 = vmul.f32 %v4791, %v4919
        %v4943 = vmul.f32 %v4793, %v4921
        %v4944 = vmul.f32 %v4795, %v4923
        %v4945 = vmul.f32 %v4797, %v4925
        %v4946 = vmul.f32 %v4799, %v4927
        %v4947 = vmul.f32 %v4801, %v4929
        %v4948 = vmul.f32 %v4803, %v4931
        %v4949 = vmul.f32 %v4805, %v4933
        %v4958 = vcombine.low %v4942, %v4943
        %v4959 = vcombine.low %v4944, %v4945
        %v4960 = vcombine.low %v4946, %v4947
        %v4961 = vcombine.low %v4948, %v4949
        %v4963 = vunpack.c.l.s4 1966171168
        %v4964 = vunpack.c.0.s8 %v4963
        %v4965 = vlaneseq
        %v4966 = vshrl.u32 %v4965, 7
        %v4967 = vsub.s32 %v4964, %v4966
        %v4968 = vrot.slane %v4958, %v4967
        %v4970 = vunpack.c.l.s4 1966171168
        %v4971 = vunpack.c.0.s8 %v4970
        %v4972 = vlaneseq
        %v4973 = vshrl.u32 %v4972, 7
        %v4974 = vsub.s32 %v4971, %v4973
        %v4975 = vrot.slane %v4959, %v4974
        %v4977 = vunpack.c.l.s4 1966171168
        %v4978 = vunpack.c.0.s8 %v4977
        %v4979 = vlaneseq
        %v4980 = vshrl.u32 %v4979, 7
        %v4981 = vsub.s32 %v4978, %v4980
        %v4982 = vrot.slane %v4960, %v4981
        %v4984 = vunpack.c.l.s4 1966171168
        %v4985 = vunpack.c.0.s8 %v4984
        %v4986 = vlaneseq
        %v4987 = vshrl.u32 %v4986, 7
        %v4988 = vsub.s32 %v4985, %v4987
        %v4989 = vrot.slane %v4961, %v4988
        %v4990 = vcombine.low %v4968, %v4975
        %v4991 = vcombine.low %v4982, %v4989
        %v4993 = vunpack.c.l.s4 1966171168
        %v4994 = vunpack.c.0.s8 %v4993
        %v4995 = vlaneseq
        %v4996 = vshrl.u32 %v4995, 7
        %v4997 = vsub.s32 %v4994, %v4996
        %v4998 = vrot.slane %v4990, %v4997
        %v5000 = vunpack.c.l.s4 1966171168
        %v5001 = vunpack.c.0.s8 %v5000
        %v5002 = vlaneseq
        %v5003 = vshrl.u32 %v5002, 7
        %v5004 = vsub.s32 %v5001, %v5003
        %v5005 = vrot.slane %v4991, %v5004
        %v5006 = vcombine.low %v4998, %v5005
        %5007 = vrot.lane.b32.xlu0 %v5006, 104
        %v5008 = vpop.permute.xlu0 %5007
        %5010 = vst.msk [vmem:[%s338] sm:$0xff] %vm794, %v5008
        %s5011 = sand.u32 %s200, 1
        %s5012 = scalar_lea.sflag [#allocation3], %s5011
        %s5013 = sand.u32 %s200, 1
        %s5014 = smul.addr %s5013, 8
        %s5015 = scalar_lea.vmem [#allocation2], %s5014
        // Predicated region
        $region45: #{tpu_custom_call.1} parent=43 // pred_check
          %p5016 = pneg %p210
        $region46: #{tpu_custom_call.1} parent=43 // pred_check_branch
          %5018 = sbr.rel (%p5016) target = $region48
        $region47: #{tpu_custom_call.1} parent=43 // pred_region
          %s5020 = ssub.s32 128, 128
          %5021 = vsyncadd %s5012, %s5020
          %s5022 = sadd.s32 %s25, %s24
          %s5023 = smul.addr %s5022, 128
          %s5024 = scalar_lea.hbm %s6, %s5023
          %s5026 = sshll.u32 %s5015, 4
          %s5027 = int_to_ptr.vmem [resolvable:$true] %s5026
          %5029 = dma.vmem_to_hbm [thread:$0]  %s5027, 128, %s5024, %s5012
        $region48: #{tpu_custom_call.1} parent=43 // pred_fallthru
          _
      $region44: #{tpu_custom_call.1} parent=5 // pred_fallthru
        _
      %p5030 = scmp.le.s32.totalorder 2, %s15
      // Predicated region
      $region49: #{tpu_custom_call.1} parent=5 // pred_check
        %p5031 = pneg %p5030
      $region50: #{tpu_custom_call.1} parent=5 // pred_check_branch
        %5033 = sbr.rel (%p5031) target = $region52
      $region51: #{tpu_custom_call.1} parent=5 // pred_region
        %s5034 = ssub.s32 %s15, 2
        // Predicated region
        $region53: #{tpu_custom_call.1} parent=51 // pred_check
          %p5035 = pneg %p216
        $region54: #{tpu_custom_call.1} parent=51 // pred_check_branch
          %5037 = sbr.rel (%p5035) target = $region56
        $region55: #{tpu_custom_call.1} parent=51 // pred_region
          %s5038 = sand.u32 %s201, 1
          %s5039 = scalar_lea.sflag [#allocation3], %s5038
          %s5040 = sand.u32 %s201, 1
          %s5041 = smul.addr %s5040, 8
          %s5042 = scalar_lea.vmem [#allocation2], %s5041
          %5043 = dma.done %s5039, 128
        $region56: #{tpu_custom_call.1} parent=51 // pred_fallthru
          _
      $region52: #{tpu_custom_call.1} parent=5 // pred_fallthru
        _
    $region6: #{tpu_custom_call.1} parent=1 // loop_footer
      %s19 = sadd.s32 1, %s15
    $region7: #{tpu_custom_call.1} parent=1 // loop_footer_branch
      %14 = sbr.rel target = $region3
    $region8: #{tpu_custom_call.1} parent=1 // loop_exit
      _
    %5044 = vsyncpa [#allocation3], 1
    %s5045 = scalar_lea.sflag [#allocation3], 1
    %5046 = vsyncpa %s5045, 1

</llo_original>
